<compile_context>
chip_gen: v7x
topology: tpu7x:2x2x1
jax: 0.10.0
libtpu: 0.0.40
codegen_flags: <defaults>
</compile_context>

<pallas_src>
import jax
import jax.numpy as jnp
from jax.experimental import pallas as pl
from jax.experimental.pallas import tpu as pltpu


# ---------------------------------------------------------------------------
# Fused Pallas kernel (one grid step == one batch element)
# ---------------------------------------------------------------------------

def _make_fused_kernel(Lo1, T1, Lc2, Lc3, Lc4, T2, H):
    """Build the fused CNN+LSTM+GAP+FC kernel for static shapes."""
    f32, bf16 = jnp.float32, jnp.bfloat16

    def kernel(xb_ref, w1a_ref, w1b_ref, w2_ref, w3_ref, w4_ref, bnb_ref,
               wih_ref, whh_ref, bg_ref, wfc_ref, bfc_ref, out_ref):
        # ---- conv1 (k=64, s=32) as two 32-sample block matmuls (bf16 -> f32) ----
        xv = xb_ref[...]                                      # (NB, K1p) bf16
        acc = jnp.dot(xv[0:Lo1, :], w1a_ref[...], preferred_element_type=f32)
        acc = acc + jnp.dot(xv[1:Lo1 + 1, :], w1b_ref[...], preferred_element_type=f32)
        c1 = jnp.maximum(acc + bnb_ref[0:1, :], 0.0)          # BN shift + ReLU, f32

        # ---- maxpool1 (kernel=8, stride=8): tile-aligned reshape + sublane max ----
        p1 = jnp.max(c1[:T1 * 8, :].reshape(T1, 8, 128), axis=1)   # (T1, 128) f32

        # ---- conv2..4 (k=8, s=1): 8 shifted-slice partial matmuls each ----
        def conv8(src_f32, w_ref, lo):
            src = src_f32.astype(bf16)
            a = jnp.dot(src[0:lo, :], w_ref[0], preferred_element_type=f32)
            for j in range(1, 8):
                a = a + jnp.dot(src[j:j + lo, :], w_ref[j], preferred_element_type=f32)
            return a

        c2 = jnp.maximum(conv8(p1, w2_ref, Lc2) + bnb_ref[1:2, :], 0.0)
        c3 = jnp.maximum(conv8(c2, w3_ref, Lc3) + bnb_ref[2:3, :], 0.0)
        c4 = jnp.maximum(conv8(c3, w4_ref, Lc4) + bnb_ref[3:4, :], 0.0)

        # ---- maxpool2 (kernel=4, stride=4): per-step sublane max (T2 is tiny) ----
        rows = [jnp.max(c4[4 * t:4 * t + 4, :], axis=0, keepdims=True)
                for t in range(T2)]
        seq = rows[0] if T2 == 1 else jnp.concatenate(rows, axis=0)    # (T2, 128)

        # ---- LSTM: input projection hoisted out of the recurrence ----
        gx = jnp.dot(seq.astype(bf16), wih_ref[...],
                     preferred_element_type=f32) + bg_ref[...]          # (T2, 4H)
        h = jnp.zeros((1, H), f32)
        c = jnp.zeros((1, H), f32)
        hsum = jnp.zeros((1, H), f32)
        for t in range(T2):                                    # static, fully unrolled
            gates = gx[t:t + 1, :] + jnp.dot(h.astype(bf16), whh_ref[...],
                                             preferred_element_type=f32)
            i_g = jax.nn.sigmoid(gates[:, 0:H])                # PyTorch order i,f,g,o
            f_g = jax.nn.sigmoid(gates[:, H:2 * H])
            g_g = jnp.tanh(gates[:, 2 * H:3 * H])
            o_g = jax.nn.sigmoid(gates[:, 3 * H:4 * H])
            c = f_g * c + i_g * g_g
            h = o_g * jnp.tanh(c)
            hsum = hsum + h

        # ---- GAP over time + FC(128 -> 1) as VPU multiply + lane reduction ----
        gap = hsum * (1.0 / T2)                                          # (1, H)
        res = jnp.sum(gap * wfc_ref[...], axis=1, keepdims=True) + bfc_ref[...]
        out_ref[...] = res.reshape(1, 1, 1)

    return kernel


# ---------------------------------------------------------------------------
# Parameter prep (BN scale folded into conv weights, matmul weights in bf16)
# ---------------------------------------------------------------------------

def _bn_fold(gamma, beta, mean, var, eps=1e-5):
    scale = gamma / jnp.sqrt(var + eps)
    shift = beta - mean * scale
    return scale, shift


def init_params(key, in_chans=3, fs=128, hidden=128):
    ks = list(jax.random.split(key, 17))
    H = hidden

    def nrm(k, shape, s=0.05):
        return (s * jax.random.normal(k, shape)).astype(jnp.float32)

    # BatchNorm (eval mode): running_mean = 0, running_var = 1.
    scales, shifts = [], []
    for i in range(4):
        g = 1.0 + 0.1 * jax.random.normal(ks[4 + i], (128,)).astype(jnp.float32)
        bta = 0.1 * jax.random.normal(ks[8 + i], (128,)).astype(jnp.float32)
        s, sh = _bn_fold(g, bta, jnp.zeros(128), jnp.ones(128))
        scales.append(s)
        shifts.append(sh)

    p = {}
    # conv1: PyTorch weight (Cout=128, Cin, k=64), stride 32.  Split into two
    # half-window (32-sample) matmul weights, fold BN1 scale, pad K to 128, bf16.
    half = fs // 4                                   # 32
    K1 = in_chans * half
    K1p = ((K1 + 127) // 128) * 128
    w1 = nrm(ks[0], (128, in_chans, fs // 2)) * scales[0][:, None, None]
    w1a = jnp.transpose(w1[:, :, :half], (1, 2, 0)).reshape(K1, 128)
    w1b = jnp.transpose(w1[:, :, half:], (1, 2, 0)).reshape(K1, 128)
    p['w1a'] = jnp.pad(w1a, ((0, K1p - K1), (0, 0))).astype(jnp.bfloat16)
    p['w1b'] = jnp.pad(w1b, ((0, K1p - K1), (0, 0))).astype(jnp.bfloat16)
    # conv2..4: PyTorch weight (128, 128, 8) -> (k=8, Cin, Cout), BN scale folded.
    for li, (name, kk) in enumerate(zip(('w2', 'w3', 'w4'), ks[1:4])):
        w = nrm(kk, (128, 128, 8)) * scales[li + 1][:, None, None]
        p[name] = jnp.transpose(w, (2, 1, 0)).astype(jnp.bfloat16)
    p['bn_shift'] = jnp.stack(shifts, axis=0)                       # (4, 128) f32
    # LSTM: PyTorch (4H, H) weights, gate order [i|f|g|o]; pre-transposed to (H, 4H).
    w_ih = nrm(ks[12], (4 * H, H))
    w_hh = nrm(ks[13], (4 * H, H))
    b_ih = nrm(ks[14], (4 * H,))
    b_hh = nrm(ks[15], (4 * H,))
    p['w_ih'] = w_ih.T.astype(jnp.bfloat16)
    p['w_hh'] = w_hh.T.astype(jnp.bfloat16)
    p['b_g'] = (b_ih + b_hh)[None, :]                               # (1, 4H) f32
    # fc: Linear(128 -> 1), bias initialized to 50.0 as in the module.
    p['w_fc'] = nrm(ks[16], (1, H))                                 # (1, H) f32
    p['b_fc'] = jnp.full((1, 1), 50.0, dtype=jnp.float32)
    return p


# ---------------------------------------------------------------------------
# Forward pass
# ---------------------------------------------------------------------------

def tinysleepnet_forward(x, params, *, fs=128, hidden=128):
    """x: (B, C, L) NCL float32.  Returns ((B, 1), None) matching the PyTorch module."""
    B, C, L = x.shape
    H = hidden
    k1, s1 = fs // 2, fs // 4                      # 64, 32
    Lo1 = (L - k1) // s1 + 1                       # conv1 output length
    NB = Lo1 + 1                                   # number of 32-sample blocks used
    T1 = Lo1 // 8                                  # after maxpool1
    Lc2, Lc3, Lc4 = T1 - 7, T1 - 14, T1 - 21       # conv2..4 output lengths
    T2 = Lc4 // 4                                  # after maxpool2 (= LSTM steps)
    K1 = C * s1
    K1p = ((K1 + 127) // 128) * 128

    # Regroup the raw signal into 32-sample, channels-last blocks: (B, NB, C*32),
    # zero-padded on the feature axis to 128 lanes, cast to bf16 (MXU operand).
    xb = x[:, :, :NB * s1].reshape(B, C, NB, s1)
    xb = jnp.transpose(xb, (0, 2, 1, 3)).reshape(B, NB, K1)
    xb = jnp.pad(xb, ((0, 0), (0, 0), (0, K1p - K1))).astype(jnp.bfloat16)

    kernel = _make_fused_kernel(Lo1, T1, Lc2, Lc3, Lc4, T2, H)
    full2 = lambda b: (0, 0)
    full3 = lambda b: (0, 0, 0)

    out3 = pl.pallas_call(
        kernel,
        out_shape=jax.ShapeDtypeStruct((B, 1, 1), jnp.float32),
        grid=(B,),
        in_specs=[
            pl.BlockSpec((None, NB, K1p), lambda b: (b, 0, 0)),   # this batch's blocks
            pl.BlockSpec((K1p, 128), full2),         # w1a
            pl.BlockSpec((K1p, 128), full2),         # w1b
            pl.BlockSpec((8, 128, 128), full3),      # w2
            pl.BlockSpec((8, 128, 128), full3),      # w3
            pl.BlockSpec((8, 128, 128), full3),      # w4
            pl.BlockSpec((4, 128), full2),           # folded BN shifts
            pl.BlockSpec((H, 4 * H), full2),         # LSTM W_ih^T
            pl.BlockSpec((H, 4 * H), full2),         # LSTM W_hh^T
            pl.BlockSpec((1, 4 * H), full2),         # LSTM bias (b_ih + b_hh)
            pl.BlockSpec((1, H), full2),             # fc weight
            pl.BlockSpec((1, 1), full2),             # fc bias (=50)
        ],
        out_specs=pl.BlockSpec((1, 1, 1), lambda b: (b, 0, 0)),
        compiler_params=pltpu.CompilerParams(
            dimension_semantics=("parallel",),       # one example per core on v7x
        ),
    )(xb, params['w1a'], params['w1b'], params['w2'], params['w3'], params['w4'],
      params['bn_shift'], params['w_ih'], params['w_hh'], params['b_g'],
      params['w_fc'], params['b_fc'])
    return out3.reshape(B, 1), None


# ---------------------------------------------------------------------------

if __name__ == "__main__":
    key = jax.random.PRNGKey(0)
    kx, kp = jax.random.split(key)

    # L=9248 -> conv1:288 -> pool/8:36 -> conv2..4:29/22/15 -> pool/4: T=3 LSTM steps.
    B, C, L = 2, 3, 9248
    x = jax.random.normal(kx, (B, C, L), dtype=jnp.float32)
    params = init_params(kp)

    fwd = jax.jit(tinysleepnet_forward)
    out, aux = fwd(x, params)
    out = jax.block_until_ready(out)
    assert out.shape == (B, 1) and aux is None
    assert bool(jnp.all(jnp.isfinite(out)))
    print("KERNEL_OK")
</pallas_src>

<mosaic_0001>
module attributes {stable_mosaic.version = 11 : i64} {
  func.func @kernel(%arg0: i32, %arg1: memref<1x289x128xbf16, #tpu.memory_space<vmem>>, %arg2: memref<128x128xbf16, #tpu.memory_space<vmem>>, %arg3: memref<128x128xbf16, #tpu.memory_space<vmem>>, %arg4: memref<8x128x128xbf16, #tpu.memory_space<vmem>>, %arg5: memref<8x128x128xbf16, #tpu.memory_space<vmem>>, %arg6: memref<8x128x128xbf16, #tpu.memory_space<vmem>>, %arg7: memref<4x128xf32, #tpu.memory_space<vmem>>, %arg8: memref<128x512xbf16, #tpu.memory_space<vmem>>, %arg9: memref<128x512xbf16, #tpu.memory_space<vmem>>, %arg10: memref<1x512xf32, #tpu.memory_space<vmem>>, %arg11: memref<1x128xf32, #tpu.memory_space<vmem>>, %arg12: memref<1x1xf32, #tpu.memory_space<vmem>>, %arg13: memref<1x1x1xf32, #tpu.memory_space<vmem>>) attributes {dimension_semantics = [#tpu.dimension_semantics<parallel>], iteration_bounds = array<i64: 2>, scalar_prefetch = 0 : i64, scratch_operands = 0 : i64, tpu.core_type = #tpu.core_type<tc>, window_params = [{transform_indices = @transform_0, window_bounds = array<i64: 1, 289, 128>}, {pipeline_mode = #tpu.pipeline_mode<synchronous>, transform_indices = @transform_1, window_bounds = array<i64: 128, 128>}, {pipeline_mode = #tpu.pipeline_mode<synchronous>, transform_indices = @transform_2, window_bounds = array<i64: 128, 128>}, {pipeline_mode = #tpu.pipeline_mode<synchronous>, transform_indices = @transform_3, window_bounds = array<i64: 8, 128, 128>}, {pipeline_mode = #tpu.pipeline_mode<synchronous>, transform_indices = @transform_4, window_bounds = array<i64: 8, 128, 128>}, {pipeline_mode = #tpu.pipeline_mode<synchronous>, transform_indices = @transform_5, window_bounds = array<i64: 8, 128, 128>}, {pipeline_mode = #tpu.pipeline_mode<synchronous>, transform_indices = @transform_6, window_bounds = array<i64: 4, 128>}, {pipeline_mode = #tpu.pipeline_mode<synchronous>, transform_indices = @transform_7, window_bounds = array<i64: 128, 512>}, {pipeline_mode = #tpu.pipeline_mode<synchronous>, transform_indices = @transform_8, window_bounds = array<i64: 128, 512>}, {pipeline_mode = #tpu.pipeline_mode<synchronous>, transform_indices = @transform_9, window_bounds = array<i64: 1, 512>}, {pipeline_mode = #tpu.pipeline_mode<synchronous>, transform_indices = @transform_10, window_bounds = array<i64: 1, 128>}, {pipeline_mode = #tpu.pipeline_mode<synchronous>, transform_indices = @transform_11, window_bounds = array<i64: 1, 1>}, {transform_indices = @transform_12, window_bounds = array<i64: 1, 1, 1>}]} {
    %c0 = arith.constant 0 : index
    %c0_0 = arith.constant 0 : index
    %c0_1 = arith.constant 0 : index
    %0 = vector.load %arg1[%c0, %c0_0, %c0_1] : memref<1x289x128xbf16, #tpu.memory_space<vmem>>, vector<1x289x128xbf16>
    %1 = vector.shape_cast %0 : vector<1x289x128xbf16> to vector<289x128xbf16>
    %2 = vector.extract_strided_slice %1 {offsets = [0, 0], sizes = [288, 128], strides = [1, 1]} : vector<289x128xbf16> to vector<288x128xbf16>
    %c0_2 = arith.constant 0 : index
    %c0_3 = arith.constant 0 : index
    %3 = vector.load %arg2[%c0_2, %c0_3] : memref<128x128xbf16, #tpu.memory_space<vmem>>, vector<128x128xbf16>
    %cst = arith.constant dense<0.000000e+00> : vector<288x128xf32>
    %4 = tpu.matmul %2, %3, %cst {dimension_numbers = #tpu.dot_dimension_numbers<[1], [0], [0], [1], [0, 0, 1, 1], [], []>} : vector<288x128xbf16>, vector<128x128xbf16>, vector<288x128xf32> -> vector<288x128xf32>
    %5 = vector.extract_strided_slice %1 {offsets = [1, 0], sizes = [288, 128], strides = [1, 1]} : vector<289x128xbf16> to vector<288x128xbf16>
    %c0_4 = arith.constant 0 : index
    %c0_5 = arith.constant 0 : index
    %6 = vector.load %arg3[%c0_4, %c0_5] : memref<128x128xbf16, #tpu.memory_space<vmem>>, vector<128x128xbf16>
    %cst_6 = arith.constant dense<0.000000e+00> : vector<288x128xf32>
    %7 = tpu.matmul %5, %6, %cst_6 {dimension_numbers = #tpu.dot_dimension_numbers<[1], [0], [0], [1], [0, 0, 1, 1], [], []>} : vector<288x128xbf16>, vector<128x128xbf16>, vector<288x128xf32> -> vector<288x128xf32>
    %8 = arith.addf %4, %7 : vector<288x128xf32>
    %c0_7 = arith.constant 0 : index
    %c0_8 = arith.constant 0 : index
    %9 = vector.load %arg7[%c0_7, %c0_8] : memref<4x128xf32, #tpu.memory_space<vmem>>, vector<1x128xf32>
    %10 = vector.broadcast %9 : vector<1x128xf32> to vector<288x128xf32>
    %11 = arith.addf %8, %10 : vector<288x128xf32>
    %cst_9 = arith.constant 0.000000e+00 : f32
    %12 = vector.broadcast %cst_9 : f32 to vector<288x128xf32>
    %13 = arith.maximumf %11, %12 : vector<288x128xf32>
    %14 = vector.shape_cast %13 : vector<288x128xf32> to vector<36x8x128xf32>
    %cst_10 = arith.constant dense<0xFF800000> : vector<36x128xf32>
    %15 = vector.multi_reduction <maximumf>, %14, %cst_10 [1] : vector<36x8x128xf32> to vector<36x128xf32>
    %16 = arith.truncf %15 : vector<36x128xf32> to vector<36x128xbf16>
    %17 = vector.extract_strided_slice %16 {offsets = [0, 0], sizes = [29, 128], strides = [1, 1]} : vector<36x128xbf16> to vector<29x128xbf16>
    %c0_11 = arith.constant 0 : index
    %c0_12 = arith.constant 0 : index
    %c0_13 = arith.constant 0 : index
    %18 = vector.load %arg4[%c0_11, %c0_12, %c0_13] : memref<8x128x128xbf16, #tpu.memory_space<vmem>>, vector<1x128x128xbf16>
    %19 = vector.shape_cast %18 : vector<1x128x128xbf16> to vector<128x128xbf16>
    %cst_14 = arith.constant dense<0.000000e+00> : vector<29x128xf32>
    %20 = tpu.matmul %17, %19, %cst_14 {dimension_numbers = #tpu.dot_dimension_numbers<[1], [0], [0], [1], [0, 0, 1, 1], [], []>} : vector<29x128xbf16>, vector<128x128xbf16>, vector<29x128xf32> -> vector<29x128xf32>
    %21 = vector.extract_strided_slice %16 {offsets = [1, 0], sizes = [29, 128], strides = [1, 1]} : vector<36x128xbf16> to vector<29x128xbf16>
    %c1 = arith.constant 1 : index
    %c0_15 = arith.constant 0 : index
    %c0_16 = arith.constant 0 : index
    %22 = vector.load %arg4[%c1, %c0_15, %c0_16] : memref<8x128x128xbf16, #tpu.memory_space<vmem>>, vector<1x128x128xbf16>
    %23 = vector.shape_cast %22 : vector<1x128x128xbf16> to vector<128x128xbf16>
    %cst_17 = arith.constant dense<0.000000e+00> : vector<29x128xf32>
    %24 = tpu.matmul %21, %23, %cst_17 {dimension_numbers = #tpu.dot_dimension_numbers<[1], [0], [0], [1], [0, 0, 1, 1], [], []>} : vector<29x128xbf16>, vector<128x128xbf16>, vector<29x128xf32> -> vector<29x128xf32>
    %25 = arith.addf %20, %24 : vector<29x128xf32>
    %26 = vector.extract_strided_slice %16 {offsets = [2, 0], sizes = [29, 128], strides = [1, 1]} : vector<36x128xbf16> to vector<29x128xbf16>
    %c2 = arith.constant 2 : index
    %c0_18 = arith.constant 0 : index
    %c0_19 = arith.constant 0 : index
    %27 = vector.load %arg4[%c2, %c0_18, %c0_19] : memref<8x128x128xbf16, #tpu.memory_space<vmem>>, vector<1x128x128xbf16>
    %28 = vector.shape_cast %27 : vector<1x128x128xbf16> to vector<128x128xbf16>
    %cst_20 = arith.constant dense<0.000000e+00> : vector<29x128xf32>
    %29 = tpu.matmul %26, %28, %cst_20 {dimension_numbers = #tpu.dot_dimension_numbers<[1], [0], [0], [1], [0, 0, 1, 1], [], []>} : vector<29x128xbf16>, vector<128x128xbf16>, vector<29x128xf32> -> vector<29x128xf32>
    %30 = arith.addf %25, %29 : vector<29x128xf32>
    %31 = vector.extract_strided_slice %16 {offsets = [3, 0], sizes = [29, 128], strides = [1, 1]} : vector<36x128xbf16> to vector<29x128xbf16>
    %c3 = arith.constant 3 : index
    %c0_21 = arith.constant 0 : index
    %c0_22 = arith.constant 0 : index
    %32 = vector.load %arg4[%c3, %c0_21, %c0_22] : memref<8x128x128xbf16, #tpu.memory_space<vmem>>, vector<1x128x128xbf16>
    %33 = vector.shape_cast %32 : vector<1x128x128xbf16> to vector<128x128xbf16>
    %cst_23 = arith.constant dense<0.000000e+00> : vector<29x128xf32>
    %34 = tpu.matmul %31, %33, %cst_23 {dimension_numbers = #tpu.dot_dimension_numbers<[1], [0], [0], [1], [0, 0, 1, 1], [], []>} : vector<29x128xbf16>, vector<128x128xbf16>, vector<29x128xf32> -> vector<29x128xf32>
    %35 = arith.addf %30, %34 : vector<29x128xf32>
    %36 = vector.extract_strided_slice %16 {offsets = [4, 0], sizes = [29, 128], strides = [1, 1]} : vector<36x128xbf16> to vector<29x128xbf16>
    %c4 = arith.constant 4 : index
    %c0_24 = arith.constant 0 : index
    %c0_25 = arith.constant 0 : index
    %37 = vector.load %arg4[%c4, %c0_24, %c0_25] : memref<8x128x128xbf16, #tpu.memory_space<vmem>>, vector<1x128x128xbf16>
    %38 = vector.shape_cast %37 : vector<1x128x128xbf16> to vector<128x128xbf16>
    %cst_26 = arith.constant dense<0.000000e+00> : vector<29x128xf32>
    %39 = tpu.matmul %36, %38, %cst_26 {dimension_numbers = #tpu.dot_dimension_numbers<[1], [0], [0], [1], [0, 0, 1, 1], [], []>} : vector<29x128xbf16>, vector<128x128xbf16>, vector<29x128xf32> -> vector<29x128xf32>
    %40 = arith.addf %35, %39 : vector<29x128xf32>
    %41 = vector.extract_strided_slice %16 {offsets = [5, 0], sizes = [29, 128], strides = [1, 1]} : vector<36x128xbf16> to vector<29x128xbf16>
    %c5 = arith.constant 5 : index
    %c0_27 = arith.constant 0 : index
    %c0_28 = arith.constant 0 : index
    %42 = vector.load %arg4[%c5, %c0_27, %c0_28] : memref<8x128x128xbf16, #tpu.memory_space<vmem>>, vector<1x128x128xbf16>
    %43 = vector.shape_cast %42 : vector<1x128x128xbf16> to vector<128x128xbf16>
    %cst_29 = arith.constant dense<0.000000e+00> : vector<29x128xf32>
    %44 = tpu.matmul %41, %43, %cst_29 {dimension_numbers = #tpu.dot_dimension_numbers<[1], [0], [0], [1], [0, 0, 1, 1], [], []>} : vector<29x128xbf16>, vector<128x128xbf16>, vector<29x128xf32> -> vector<29x128xf32>
    %45 = arith.addf %40, %44 : vector<29x128xf32>
    %46 = vector.extract_strided_slice %16 {offsets = [6, 0], sizes = [29, 128], strides = [1, 1]} : vector<36x128xbf16> to vector<29x128xbf16>
    %c6 = arith.constant 6 : index
    %c0_30 = arith.constant 0 : index
    %c0_31 = arith.constant 0 : index
    %47 = vector.load %arg4[%c6, %c0_30, %c0_31] : memref<8x128x128xbf16, #tpu.memory_space<vmem>>, vector<1x128x128xbf16>
    %48 = vector.shape_cast %47 : vector<1x128x128xbf16> to vector<128x128xbf16>
    %cst_32 = arith.constant dense<0.000000e+00> : vector<29x128xf32>
    %49 = tpu.matmul %46, %48, %cst_32 {dimension_numbers = #tpu.dot_dimension_numbers<[1], [0], [0], [1], [0, 0, 1, 1], [], []>} : vector<29x128xbf16>, vector<128x128xbf16>, vector<29x128xf32> -> vector<29x128xf32>
    %50 = arith.addf %45, %49 : vector<29x128xf32>
    %51 = vector.extract_strided_slice %16 {offsets = [7, 0], sizes = [29, 128], strides = [1, 1]} : vector<36x128xbf16> to vector<29x128xbf16>
    %c7 = arith.constant 7 : index
    %c0_33 = arith.constant 0 : index
    %c0_34 = arith.constant 0 : index
    %52 = vector.load %arg4[%c7, %c0_33, %c0_34] : memref<8x128x128xbf16, #tpu.memory_space<vmem>>, vector<1x128x128xbf16>
    %53 = vector.shape_cast %52 : vector<1x128x128xbf16> to vector<128x128xbf16>
    %cst_35 = arith.constant dense<0.000000e+00> : vector<29x128xf32>
    %54 = tpu.matmul %51, %53, %cst_35 {dimension_numbers = #tpu.dot_dimension_numbers<[1], [0], [0], [1], [0, 0, 1, 1], [], []>} : vector<29x128xbf16>, vector<128x128xbf16>, vector<29x128xf32> -> vector<29x128xf32>
    %55 = arith.addf %50, %54 : vector<29x128xf32>
    %c1_36 = arith.constant 1 : index
    %c0_37 = arith.constant 0 : index
    %56 = vector.load %arg7[%c1_36, %c0_37] : memref<4x128xf32, #tpu.memory_space<vmem>>, vector<1x128xf32>
    %57 = vector.broadcast %56 : vector<1x128xf32> to vector<29x128xf32>
    %58 = arith.addf %55, %57 : vector<29x128xf32>
    %cst_38 = arith.constant 0.000000e+00 : f32
    %59 = vector.broadcast %cst_38 : f32 to vector<29x128xf32>
    %60 = arith.maximumf %58, %59 : vector<29x128xf32>
    %61 = arith.truncf %60 : vector<29x128xf32> to vector<29x128xbf16>
    %62 = vector.extract_strided_slice %61 {offsets = [0, 0], sizes = [22, 128], strides = [1, 1]} : vector<29x128xbf16> to vector<22x128xbf16>
    %c0_39 = arith.constant 0 : index
    %c0_40 = arith.constant 0 : index
    %c0_41 = arith.constant 0 : index
    %63 = vector.load %arg5[%c0_39, %c0_40, %c0_41] : memref<8x128x128xbf16, #tpu.memory_space<vmem>>, vector<1x128x128xbf16>
    %64 = vector.shape_cast %63 : vector<1x128x128xbf16> to vector<128x128xbf16>
    %cst_42 = arith.constant dense<0.000000e+00> : vector<22x128xf32>
    %65 = tpu.matmul %62, %64, %cst_42 {dimension_numbers = #tpu.dot_dimension_numbers<[1], [0], [0], [1], [0, 0, 1, 1], [], []>} : vector<22x128xbf16>, vector<128x128xbf16>, vector<22x128xf32> -> vector<22x128xf32>
    %66 = vector.extract_strided_slice %61 {offsets = [1, 0], sizes = [22, 128], strides = [1, 1]} : vector<29x128xbf16> to vector<22x128xbf16>
    %c1_43 = arith.constant 1 : index
    %c0_44 = arith.constant 0 : index
    %c0_45 = arith.constant 0 : index
    %67 = vector.load %arg5[%c1_43, %c0_44, %c0_45] : memref<8x128x128xbf16, #tpu.memory_space<vmem>>, vector<1x128x128xbf16>
    %68 = vector.shape_cast %67 : vector<1x128x128xbf16> to vector<128x128xbf16>
    %cst_46 = arith.constant dense<0.000000e+00> : vector<22x128xf32>
    %69 = tpu.matmul %66, %68, %cst_46 {dimension_numbers = #tpu.dot_dimension_numbers<[1], [0], [0], [1], [0, 0, 1, 1], [], []>} : vector<22x128xbf16>, vector<128x128xbf16>, vector<22x128xf32> -> vector<22x128xf32>
    %70 = arith.addf %65, %69 : vector<22x128xf32>
    %71 = vector.extract_strided_slice %61 {offsets = [2, 0], sizes = [22, 128], strides = [1, 1]} : vector<29x128xbf16> to vector<22x128xbf16>
    %c2_47 = arith.constant 2 : index
    %c0_48 = arith.constant 0 : index
    %c0_49 = arith.constant 0 : index
    %72 = vector.load %arg5[%c2_47, %c0_48, %c0_49] : memref<8x128x128xbf16, #tpu.memory_space<vmem>>, vector<1x128x128xbf16>
    %73 = vector.shape_cast %72 : vector<1x128x128xbf16> to vector<128x128xbf16>
    %cst_50 = arith.constant dense<0.000000e+00> : vector<22x128xf32>
    %74 = tpu.matmul %71, %73, %cst_50 {dimension_numbers = #tpu.dot_dimension_numbers<[1], [0], [0], [1], [0, 0, 1, 1], [], []>} : vector<22x128xbf16>, vector<128x128xbf16>, vector<22x128xf32> -> vector<22x128xf32>
    %75 = arith.addf %70, %74 : vector<22x128xf32>
    %76 = vector.extract_strided_slice %61 {offsets = [3, 0], sizes = [22, 128], strides = [1, 1]} : vector<29x128xbf16> to vector<22x128xbf16>
    %c3_51 = arith.constant 3 : index
    %c0_52 = arith.constant 0 : index
    %c0_53 = arith.constant 0 : index
    %77 = vector.load %arg5[%c3_51, %c0_52, %c0_53] : memref<8x128x128xbf16, #tpu.memory_space<vmem>>, vector<1x128x128xbf16>
    %78 = vector.shape_cast %77 : vector<1x128x128xbf16> to vector<128x128xbf16>
    %cst_54 = arith.constant dense<0.000000e+00> : vector<22x128xf32>
    %79 = tpu.matmul %76, %78, %cst_54 {dimension_numbers = #tpu.dot_dimension_numbers<[1], [0], [0], [1], [0, 0, 1, 1], [], []>} : vector<22x128xbf16>, vector<128x128xbf16>, vector<22x128xf32> -> vector<22x128xf32>
    %80 = arith.addf %75, %79 : vector<22x128xf32>
    %81 = vector.extract_strided_slice %61 {offsets = [4, 0], sizes = [22, 128], strides = [1, 1]} : vector<29x128xbf16> to vector<22x128xbf16>
    %c4_55 = arith.constant 4 : index
    %c0_56 = arith.constant 0 : index
    %c0_57 = arith.constant 0 : index
    %82 = vector.load %arg5[%c4_55, %c0_56, %c0_57] : memref<8x128x128xbf16, #tpu.memory_space<vmem>>, vector<1x128x128xbf16>
    %83 = vector.shape_cast %82 : vector<1x128x128xbf16> to vector<128x128xbf16>
    %cst_58 = arith.constant dense<0.000000e+00> : vector<22x128xf32>
    %84 = tpu.matmul %81, %83, %cst_58 {dimension_numbers = #tpu.dot_dimension_numbers<[1], [0], [0], [1], [0, 0, 1, 1], [], []>} : vector<22x128xbf16>, vector<128x128xbf16>, vector<22x128xf32> -> vector<22x128xf32>
    %85 = arith.addf %80, %84 : vector<22x128xf32>
    %86 = vector.extract_strided_slice %61 {offsets = [5, 0], sizes = [22, 128], strides = [1, 1]} : vector<29x128xbf16> to vector<22x128xbf16>
    %c5_59 = arith.constant 5 : index
    %c0_60 = arith.constant 0 : index
    %c0_61 = arith.constant 0 : index
    %87 = vector.load %arg5[%c5_59, %c0_60, %c0_61] : memref<8x128x128xbf16, #tpu.memory_space<vmem>>, vector<1x128x128xbf16>
    %88 = vector.shape_cast %87 : vector<1x128x128xbf16> to vector<128x128xbf16>
    %cst_62 = arith.constant dense<0.000000e+00> : vector<22x128xf32>
    %89 = tpu.matmul %86, %88, %cst_62 {dimension_numbers = #tpu.dot_dimension_numbers<[1], [0], [0], [1], [0, 0, 1, 1], [], []>} : vector<22x128xbf16>, vector<128x128xbf16>, vector<22x128xf32> -> vector<22x128xf32>
    %90 = arith.addf %85, %89 : vector<22x128xf32>
    %91 = vector.extract_strided_slice %61 {offsets = [6, 0], sizes = [22, 128], strides = [1, 1]} : vector<29x128xbf16> to vector<22x128xbf16>
    %c6_63 = arith.constant 6 : index
    %c0_64 = arith.constant 0 : index
    %c0_65 = arith.constant 0 : index
    %92 = vector.load %arg5[%c6_63, %c0_64, %c0_65] : memref<8x128x128xbf16, #tpu.memory_space<vmem>>, vector<1x128x128xbf16>
    %93 = vector.shape_cast %92 : vector<1x128x128xbf16> to vector<128x128xbf16>
    %cst_66 = arith.constant dense<0.000000e+00> : vector<22x128xf32>
    %94 = tpu.matmul %91, %93, %cst_66 {dimension_numbers = #tpu.dot_dimension_numbers<[1], [0], [0], [1], [0, 0, 1, 1], [], []>} : vector<22x128xbf16>, vector<128x128xbf16>, vector<22x128xf32> -> vector<22x128xf32>
    %95 = arith.addf %90, %94 : vector<22x128xf32>
    %96 = vector.extract_strided_slice %61 {offsets = [7, 0], sizes = [22, 128], strides = [1, 1]} : vector<29x128xbf16> to vector<22x128xbf16>
    %c7_67 = arith.constant 7 : index
    %c0_68 = arith.constant 0 : index
    %c0_69 = arith.constant 0 : index
    %97 = vector.load %arg5[%c7_67, %c0_68, %c0_69] : memref<8x128x128xbf16, #tpu.memory_space<vmem>>, vector<1x128x128xbf16>
    %98 = vector.shape_cast %97 : vector<1x128x128xbf16> to vector<128x128xbf16>
    %cst_70 = arith.constant dense<0.000000e+00> : vector<22x128xf32>
    %99 = tpu.matmul %96, %98, %cst_70 {dimension_numbers = #tpu.dot_dimension_numbers<[1], [0], [0], [1], [0, 0, 1, 1], [], []>} : vector<22x128xbf16>, vector<128x128xbf16>, vector<22x128xf32> -> vector<22x128xf32>
    %100 = arith.addf %95, %99 : vector<22x128xf32>
    %c2_71 = arith.constant 2 : index
    %c0_72 = arith.constant 0 : index
    %101 = vector.load %arg7[%c2_71, %c0_72] : memref<4x128xf32, #tpu.memory_space<vmem>>, vector<1x128xf32>
    %102 = vector.broadcast %101 : vector<1x128xf32> to vector<22x128xf32>
    %103 = arith.addf %100, %102 : vector<22x128xf32>
    %cst_73 = arith.constant 0.000000e+00 : f32
    %104 = vector.broadcast %cst_73 : f32 to vector<22x128xf32>
    %105 = arith.maximumf %103, %104 : vector<22x128xf32>
    %106 = arith.truncf %105 : vector<22x128xf32> to vector<22x128xbf16>
    %107 = vector.extract_strided_slice %106 {offsets = [0, 0], sizes = [15, 128], strides = [1, 1]} : vector<22x128xbf16> to vector<15x128xbf16>
    %c0_74 = arith.constant 0 : index
    %c0_75 = arith.constant 0 : index
    %c0_76 = arith.constant 0 : index
    %108 = vector.load %arg6[%c0_74, %c0_75, %c0_76] : memref<8x128x128xbf16, #tpu.memory_space<vmem>>, vector<1x128x128xbf16>
    %109 = vector.shape_cast %108 : vector<1x128x128xbf16> to vector<128x128xbf16>
    %cst_77 = arith.constant dense<0.000000e+00> : vector<15x128xf32>
    %110 = tpu.matmul %107, %109, %cst_77 {dimension_numbers = #tpu.dot_dimension_numbers<[1], [0], [0], [1], [0, 0, 1, 1], [], []>} : vector<15x128xbf16>, vector<128x128xbf16>, vector<15x128xf32> -> vector<15x128xf32>
    %111 = vector.extract_strided_slice %106 {offsets = [1, 0], sizes = [15, 128], strides = [1, 1]} : vector<22x128xbf16> to vector<15x128xbf16>
    %c1_78 = arith.constant 1 : index
    %c0_79 = arith.constant 0 : index
    %c0_80 = arith.constant 0 : index
    %112 = vector.load %arg6[%c1_78, %c0_79, %c0_80] : memref<8x128x128xbf16, #tpu.memory_space<vmem>>, vector<1x128x128xbf16>
    %113 = vector.shape_cast %112 : vector<1x128x128xbf16> to vector<128x128xbf16>
    %cst_81 = arith.constant dense<0.000000e+00> : vector<15x128xf32>
    %114 = tpu.matmul %111, %113, %cst_81 {dimension_numbers = #tpu.dot_dimension_numbers<[1], [0], [0], [1], [0, 0, 1, 1], [], []>} : vector<15x128xbf16>, vector<128x128xbf16>, vector<15x128xf32> -> vector<15x128xf32>
    %115 = arith.addf %110, %114 : vector<15x128xf32>
    %116 = vector.extract_strided_slice %106 {offsets = [2, 0], sizes = [15, 128], strides = [1, 1]} : vector<22x128xbf16> to vector<15x128xbf16>
    %c2_82 = arith.constant 2 : index
    %c0_83 = arith.constant 0 : index
    %c0_84 = arith.constant 0 : index
    %117 = vector.load %arg6[%c2_82, %c0_83, %c0_84] : memref<8x128x128xbf16, #tpu.memory_space<vmem>>, vector<1x128x128xbf16>
    %118 = vector.shape_cast %117 : vector<1x128x128xbf16> to vector<128x128xbf16>
    %cst_85 = arith.constant dense<0.000000e+00> : vector<15x128xf32>
    %119 = tpu.matmul %116, %118, %cst_85 {dimension_numbers = #tpu.dot_dimension_numbers<[1], [0], [0], [1], [0, 0, 1, 1], [], []>} : vector<15x128xbf16>, vector<128x128xbf16>, vector<15x128xf32> -> vector<15x128xf32>
    %120 = arith.addf %115, %119 : vector<15x128xf32>
    %121 = vector.extract_strided_slice %106 {offsets = [3, 0], sizes = [15, 128], strides = [1, 1]} : vector<22x128xbf16> to vector<15x128xbf16>
    %c3_86 = arith.constant 3 : index
    %c0_87 = arith.constant 0 : index
    %c0_88 = arith.constant 0 : index
    %122 = vector.load %arg6[%c3_86, %c0_87, %c0_88] : memref<8x128x128xbf16, #tpu.memory_space<vmem>>, vector<1x128x128xbf16>
    %123 = vector.shape_cast %122 : vector<1x128x128xbf16> to vector<128x128xbf16>
    %cst_89 = arith.constant dense<0.000000e+00> : vector<15x128xf32>
    %124 = tpu.matmul %121, %123, %cst_89 {dimension_numbers = #tpu.dot_dimension_numbers<[1], [0], [0], [1], [0, 0, 1, 1], [], []>} : vector<15x128xbf16>, vector<128x128xbf16>, vector<15x128xf32> -> vector<15x128xf32>
    %125 = arith.addf %120, %124 : vector<15x128xf32>
    %126 = vector.extract_strided_slice %106 {offsets = [4, 0], sizes = [15, 128], strides = [1, 1]} : vector<22x128xbf16> to vector<15x128xbf16>
    %c4_90 = arith.constant 4 : index
    %c0_91 = arith.constant 0 : index
    %c0_92 = arith.constant 0 : index
    %127 = vector.load %arg6[%c4_90, %c0_91, %c0_92] : memref<8x128x128xbf16, #tpu.memory_space<vmem>>, vector<1x128x128xbf16>
    %128 = vector.shape_cast %127 : vector<1x128x128xbf16> to vector<128x128xbf16>
    %cst_93 = arith.constant dense<0.000000e+00> : vector<15x128xf32>
    %129 = tpu.matmul %126, %128, %cst_93 {dimension_numbers = #tpu.dot_dimension_numbers<[1], [0], [0], [1], [0, 0, 1, 1], [], []>} : vector<15x128xbf16>, vector<128x128xbf16>, vector<15x128xf32> -> vector<15x128xf32>
    %130 = arith.addf %125, %129 : vector<15x128xf32>
    %131 = vector.extract_strided_slice %106 {offsets = [5, 0], sizes = [15, 128], strides = [1, 1]} : vector<22x128xbf16> to vector<15x128xbf16>
    %c5_94 = arith.constant 5 : index
    %c0_95 = arith.constant 0 : index
    %c0_96 = arith.constant 0 : index
    %132 = vector.load %arg6[%c5_94, %c0_95, %c0_96] : memref<8x128x128xbf16, #tpu.memory_space<vmem>>, vector<1x128x128xbf16>
    %133 = vector.shape_cast %132 : vector<1x128x128xbf16> to vector<128x128xbf16>
    %cst_97 = arith.constant dense<0.000000e+00> : vector<15x128xf32>
    %134 = tpu.matmul %131, %133, %cst_97 {dimension_numbers = #tpu.dot_dimension_numbers<[1], [0], [0], [1], [0, 0, 1, 1], [], []>} : vector<15x128xbf16>, vector<128x128xbf16>, vector<15x128xf32> -> vector<15x128xf32>
    %135 = arith.addf %130, %134 : vector<15x128xf32>
    %136 = vector.extract_strided_slice %106 {offsets = [6, 0], sizes = [15, 128], strides = [1, 1]} : vector<22x128xbf16> to vector<15x128xbf16>
    %c6_98 = arith.constant 6 : index
    %c0_99 = arith.constant 0 : index
    %c0_100 = arith.constant 0 : index
    %137 = vector.load %arg6[%c6_98, %c0_99, %c0_100] : memref<8x128x128xbf16, #tpu.memory_space<vmem>>, vector<1x128x128xbf16>
    %138 = vector.shape_cast %137 : vector<1x128x128xbf16> to vector<128x128xbf16>
    %cst_101 = arith.constant dense<0.000000e+00> : vector<15x128xf32>
    %139 = tpu.matmul %136, %138, %cst_101 {dimension_numbers = #tpu.dot_dimension_numbers<[1], [0], [0], [1], [0, 0, 1, 1], [], []>} : vector<15x128xbf16>, vector<128x128xbf16>, vector<15x128xf32> -> vector<15x128xf32>
    %140 = arith.addf %135, %139 : vector<15x128xf32>
    %141 = vector.extract_strided_slice %106 {offsets = [7, 0], sizes = [15, 128], strides = [1, 1]} : vector<22x128xbf16> to vector<15x128xbf16>
    %c7_102 = arith.constant 7 : index
    %c0_103 = arith.constant 0 : index
    %c0_104 = arith.constant 0 : index
    %142 = vector.load %arg6[%c7_102, %c0_103, %c0_104] : memref<8x128x128xbf16, #tpu.memory_space<vmem>>, vector<1x128x128xbf16>
    %143 = vector.shape_cast %142 : vector<1x128x128xbf16> to vector<128x128xbf16>
    %cst_105 = arith.constant dense<0.000000e+00> : vector<15x128xf32>
    %144 = tpu.matmul %141, %143, %cst_105 {dimension_numbers = #tpu.dot_dimension_numbers<[1], [0], [0], [1], [0, 0, 1, 1], [], []>} : vector<15x128xbf16>, vector<128x128xbf16>, vector<15x128xf32> -> vector<15x128xf32>
    %145 = arith.addf %140, %144 : vector<15x128xf32>
    %c3_106 = arith.constant 3 : index
    %c0_107 = arith.constant 0 : index
    %146 = vector.load %arg7[%c3_106, %c0_107] : memref<4x128xf32, #tpu.memory_space<vmem>>, vector<1x128xf32>
    %147 = vector.broadcast %146 : vector<1x128xf32> to vector<15x128xf32>
    %148 = arith.addf %145, %147 : vector<15x128xf32>
    %cst_108 = arith.constant 0.000000e+00 : f32
    %149 = vector.broadcast %cst_108 : f32 to vector<15x128xf32>
    %150 = arith.maximumf %148, %149 : vector<15x128xf32>
    %151 = vector.extract_strided_slice %150 {offsets = [0, 0], sizes = [4, 128], strides = [1, 1]} : vector<15x128xf32> to vector<4x128xf32>
    %cst_109 = arith.constant dense<0xFF800000> : vector<128xf32>
    %152 = vector.multi_reduction <maximumf>, %151, %cst_109 [0] : vector<4x128xf32> to vector<128xf32>
    %153 = vector.shape_cast %152 : vector<128xf32> to vector<1x128xf32>
    %154 = vector.extract_strided_slice %150 {offsets = [4, 0], sizes = [4, 128], strides = [1, 1]} : vector<15x128xf32> to vector<4x128xf32>
    %cst_110 = arith.constant dense<0xFF800000> : vector<128xf32>
    %155 = vector.multi_reduction <maximumf>, %154, %cst_110 [0] : vector<4x128xf32> to vector<128xf32>
    %156 = vector.shape_cast %155 : vector<128xf32> to vector<1x128xf32>
    %157 = vector.extract_strided_slice %150 {offsets = [8, 0], sizes = [4, 128], strides = [1, 1]} : vector<15x128xf32> to vector<4x128xf32>
    %cst_111 = arith.constant dense<0xFF800000> : vector<128xf32>
    %158 = vector.multi_reduction <maximumf>, %157, %cst_111 [0] : vector<4x128xf32> to vector<128xf32>
    %159 = vector.shape_cast %158 : vector<128xf32> to vector<1x128xf32>
    %160 = tpu.concatenate %153, %156, %159 in 0 : vector<1x128xf32>, vector<1x128xf32>, vector<1x128xf32> -> vector<3x128xf32>
    %161 = arith.truncf %160 : vector<3x128xf32> to vector<3x128xbf16>
    %c0_112 = arith.constant 0 : index
    %c0_113 = arith.constant 0 : index
    %162 = vector.load %arg8[%c0_112, %c0_113] : memref<128x512xbf16, #tpu.memory_space<vmem>>, vector<128x512xbf16>
    %cst_114 = arith.constant dense<0.000000e+00> : vector<3x512xf32>
    %163 = tpu.matmul %161, %162, %cst_114 {dimension_numbers = #tpu.dot_dimension_numbers<[1], [0], [0], [1], [0, 0, 1, 1], [], []>} : vector<3x128xbf16>, vector<128x512xbf16>, vector<3x512xf32> -> vector<3x512xf32>
    %c0_115 = arith.constant 0 : index
    %c0_116 = arith.constant 0 : index
    %164 = vector.load %arg10[%c0_115, %c0_116] : memref<1x512xf32, #tpu.memory_space<vmem>>, vector<1x512xf32>
    %165 = vector.broadcast %164 : vector<1x512xf32> to vector<3x512xf32>
    %166 = arith.addf %163, %165 : vector<3x512xf32>
    %cst_117 = arith.constant 0.000000e+00 : f32
    %167 = vector.broadcast %cst_117 : f32 to vector<1x128xf32>
    %cst_118 = arith.constant 0.000000e+00 : f32
    %168 = vector.broadcast %cst_118 : f32 to vector<1x128xf32>
    %cst_119 = arith.constant 0.000000e+00 : f32
    %169 = vector.broadcast %cst_119 : f32 to vector<1x128xf32>
    %170 = vector.extract_strided_slice %166 {offsets = [0, 0], sizes = [1, 512], strides = [1, 1]} : vector<3x512xf32> to vector<1x512xf32>
    %171 = arith.truncf %167 : vector<1x128xf32> to vector<1x128xbf16>
    %c0_120 = arith.constant 0 : index
    %c0_121 = arith.constant 0 : index
    %172 = vector.load %arg9[%c0_120, %c0_121] : memref<128x512xbf16, #tpu.memory_space<vmem>>, vector<128x512xbf16>
    %cst_122 = arith.constant dense<0.000000e+00> : vector<1x512xf32>
    %173 = tpu.matmul %171, %172, %cst_122 {dimension_numbers = #tpu.dot_dimension_numbers<[1], [0], [0], [1], [0, 0, 1, 1], [], []>} : vector<1x128xbf16>, vector<128x512xbf16>, vector<1x512xf32> -> vector<1x512xf32>
    %174 = arith.addf %170, %173 : vector<1x512xf32>
    %175 = vector.extract_strided_slice %174 {offsets = [0, 0], sizes = [1, 128], strides = [1, 1]} : vector<1x512xf32> to vector<1x128xf32>
    %176 = arith.negf %175 : vector<1x128xf32>
    %177 = math.exp %176 : vector<1x128xf32>
    %cst_123 = arith.constant 1.000000e+00 : f32
    %178 = vector.broadcast %cst_123 : f32 to vector<1x128xf32>
    %179 = arith.addf %178, %177 : vector<1x128xf32>
    %180 = arith.divf %178, %179 : vector<1x128xf32>
    %181 = vector.extract_strided_slice %174 {offsets = [0, 128], sizes = [1, 128], strides = [1, 1]} : vector<1x512xf32> to vector<1x128xf32>
    %182 = arith.negf %181 : vector<1x128xf32>
    %183 = math.exp %182 : vector<1x128xf32>
    %cst_124 = arith.constant 1.000000e+00 : f32
    %184 = vector.broadcast %cst_124 : f32 to vector<1x128xf32>
    %185 = arith.addf %184, %183 : vector<1x128xf32>
    %186 = arith.divf %184, %185 : vector<1x128xf32>
    %187 = vector.extract_strided_slice %174 {offsets = [0, 256], sizes = [1, 128], strides = [1, 1]} : vector<1x512xf32> to vector<1x128xf32>
    %188 = math.tanh %187 : vector<1x128xf32>
    %189 = vector.extract_strided_slice %174 {offsets = [0, 384], sizes = [1, 128], strides = [1, 1]} : vector<1x512xf32> to vector<1x128xf32>
    %190 = arith.negf %189 : vector<1x128xf32>
    %191 = math.exp %190 : vector<1x128xf32>
    %cst_125 = arith.constant 1.000000e+00 : f32
    %192 = vector.broadcast %cst_125 : f32 to vector<1x128xf32>
    %193 = arith.addf %192, %191 : vector<1x128xf32>
    %194 = arith.divf %192, %193 : vector<1x128xf32>
    %195 = arith.mulf %186, %168 : vector<1x128xf32>
    %196 = arith.mulf %180, %188 : vector<1x128xf32>
    %197 = arith.addf %195, %196 : vector<1x128xf32>
    %198 = math.tanh %197 : vector<1x128xf32>
    %199 = arith.mulf %194, %198 : vector<1x128xf32>
    %200 = arith.addf %169, %199 : vector<1x128xf32>
    %201 = vector.extract_strided_slice %166 {offsets = [1, 0], sizes = [1, 512], strides = [1, 1]} : vector<3x512xf32> to vector<1x512xf32>
    %202 = arith.truncf %199 : vector<1x128xf32> to vector<1x128xbf16>
    %c0_126 = arith.constant 0 : index
    %c0_127 = arith.constant 0 : index
    %203 = vector.load %arg9[%c0_126, %c0_127] : memref<128x512xbf16, #tpu.memory_space<vmem>>, vector<128x512xbf16>
    %cst_128 = arith.constant dense<0.000000e+00> : vector<1x512xf32>
    %204 = tpu.matmul %202, %203, %cst_128 {dimension_numbers = #tpu.dot_dimension_numbers<[1], [0], [0], [1], [0, 0, 1, 1], [], []>} : vector<1x128xbf16>, vector<128x512xbf16>, vector<1x512xf32> -> vector<1x512xf32>
    %205 = arith.addf %201, %204 : vector<1x512xf32>
    %206 = vector.extract_strided_slice %205 {offsets = [0, 0], sizes = [1, 128], strides = [1, 1]} : vector<1x512xf32> to vector<1x128xf32>
    %207 = arith.negf %206 : vector<1x128xf32>
    %208 = math.exp %207 : vector<1x128xf32>
    %cst_129 = arith.constant 1.000000e+00 : f32
    %209 = vector.broadcast %cst_129 : f32 to vector<1x128xf32>
    %210 = arith.addf %209, %208 : vector<1x128xf32>
    %211 = arith.divf %209, %210 : vector<1x128xf32>
    %212 = vector.extract_strided_slice %205 {offsets = [0, 128], sizes = [1, 128], strides = [1, 1]} : vector<1x512xf32> to vector<1x128xf32>
    %213 = arith.negf %212 : vector<1x128xf32>
    %214 = math.exp %213 : vector<1x128xf32>
    %cst_130 = arith.constant 1.000000e+00 : f32
    %215 = vector.broadcast %cst_130 : f32 to vector<1x128xf32>
    %216 = arith.addf %215, %214 : vector<1x128xf32>
    %217 = arith.divf %215, %216 : vector<1x128xf32>
    %218 = vector.extract_strided_slice %205 {offsets = [0, 256], sizes = [1, 128], strides = [1, 1]} : vector<1x512xf32> to vector<1x128xf32>
    %219 = math.tanh %218 : vector<1x128xf32>
    %220 = vector.extract_strided_slice %205 {offsets = [0, 384], sizes = [1, 128], strides = [1, 1]} : vector<1x512xf32> to vector<1x128xf32>
    %221 = arith.negf %220 : vector<1x128xf32>
    %222 = math.exp %221 : vector<1x128xf32>
    %cst_131 = arith.constant 1.000000e+00 : f32
    %223 = vector.broadcast %cst_131 : f32 to vector<1x128xf32>
    %224 = arith.addf %223, %222 : vector<1x128xf32>
    %225 = arith.divf %223, %224 : vector<1x128xf32>
    %226 = arith.mulf %217, %197 : vector<1x128xf32>
    %227 = arith.mulf %211, %219 : vector<1x128xf32>
    %228 = arith.addf %226, %227 : vector<1x128xf32>
    %229 = math.tanh %228 : vector<1x128xf32>
    %230 = arith.mulf %225, %229 : vector<1x128xf32>
    %231 = arith.addf %200, %230 : vector<1x128xf32>
    %232 = vector.extract_strided_slice %166 {offsets = [2, 0], sizes = [1, 512], strides = [1, 1]} : vector<3x512xf32> to vector<1x512xf32>
    %233 = arith.truncf %230 : vector<1x128xf32> to vector<1x128xbf16>
    %c0_132 = arith.constant 0 : index
    %c0_133 = arith.constant 0 : index
    %234 = vector.load %arg9[%c0_132, %c0_133] : memref<128x512xbf16, #tpu.memory_space<vmem>>, vector<128x512xbf16>
    %cst_134 = arith.constant dense<0.000000e+00> : vector<1x512xf32>
    %235 = tpu.matmul %233, %234, %cst_134 {dimension_numbers = #tpu.dot_dimension_numbers<[1], [0], [0], [1], [0, 0, 1, 1], [], []>} : vector<1x128xbf16>, vector<128x512xbf16>, vector<1x512xf32> -> vector<1x512xf32>
    %236 = arith.addf %232, %235 : vector<1x512xf32>
    %237 = vector.extract_strided_slice %236 {offsets = [0, 0], sizes = [1, 128], strides = [1, 1]} : vector<1x512xf32> to vector<1x128xf32>
    %238 = arith.negf %237 : vector<1x128xf32>
    %239 = math.exp %238 : vector<1x128xf32>
    %cst_135 = arith.constant 1.000000e+00 : f32
    %240 = vector.broadcast %cst_135 : f32 to vector<1x128xf32>
    %241 = arith.addf %240, %239 : vector<1x128xf32>
    %242 = arith.divf %240, %241 : vector<1x128xf32>
    %243 = vector.extract_strided_slice %236 {offsets = [0, 128], sizes = [1, 128], strides = [1, 1]} : vector<1x512xf32> to vector<1x128xf32>
    %244 = arith.negf %243 : vector<1x128xf32>
    %245 = math.exp %244 : vector<1x128xf32>
    %cst_136 = arith.constant 1.000000e+00 : f32
    %246 = vector.broadcast %cst_136 : f32 to vector<1x128xf32>
    %247 = arith.addf %246, %245 : vector<1x128xf32>
    %248 = arith.divf %246, %247 : vector<1x128xf32>
    %249 = vector.extract_strided_slice %236 {offsets = [0, 256], sizes = [1, 128], strides = [1, 1]} : vector<1x512xf32> to vector<1x128xf32>
    %250 = math.tanh %249 : vector<1x128xf32>
    %251 = vector.extract_strided_slice %236 {offsets = [0, 384], sizes = [1, 128], strides = [1, 1]} : vector<1x512xf32> to vector<1x128xf32>
    %252 = arith.negf %251 : vector<1x128xf32>
    %253 = math.exp %252 : vector<1x128xf32>
    %cst_137 = arith.constant 1.000000e+00 : f32
    %254 = vector.broadcast %cst_137 : f32 to vector<1x128xf32>
    %255 = arith.addf %254, %253 : vector<1x128xf32>
    %256 = arith.divf %254, %255 : vector<1x128xf32>
    %257 = arith.mulf %248, %228 : vector<1x128xf32>
    %258 = arith.mulf %242, %250 : vector<1x128xf32>
    %259 = arith.addf %257, %258 : vector<1x128xf32>
    %260 = math.tanh %259 : vector<1x128xf32>
    %261 = arith.mulf %256, %260 : vector<1x128xf32>
    %262 = arith.addf %231, %261 : vector<1x128xf32>
    %cst_138 = arith.constant 0.333333343 : f32
    %263 = vector.broadcast %cst_138 : f32 to vector<1x128xf32>
    %264 = arith.mulf %262, %263 : vector<1x128xf32>
    %c0_139 = arith.constant 0 : index
    %c0_140 = arith.constant 0 : index
    %265 = vector.load %arg11[%c0_139, %c0_140] : memref<1x128xf32, #tpu.memory_space<vmem>>, vector<1x128xf32>
    %266 = arith.mulf %264, %265 : vector<1x128xf32>
    %cst_141 = arith.constant dense<0.000000e+00> : vector<1xf32>
    %267 = vector.multi_reduction <add>, %266, %cst_141 [1] : vector<1x128xf32> to vector<1xf32>
    %268 = vector.shape_cast %267 : vector<1xf32> to vector<1x1xf32>
    %c0_142 = arith.constant 0 : index
    %c0_143 = arith.constant 0 : index
    %269 = vector.load %arg12[%c0_142, %c0_143] : memref<1x1xf32, #tpu.memory_space<vmem>>, vector<1x1xf32>
    %270 = arith.addf %268, %269 : vector<1x1xf32>
    %271 = vector.shape_cast %270 : vector<1x1xf32> to vector<1x1x1xf32>
    %c0_144 = arith.constant 0 : index
    %c0_145 = arith.constant 0 : index
    %c0_146 = arith.constant 0 : index
    %272 = vector.load %arg13[%c0_144, %c0_145, %c0_146] : memref<1x1x1xf32, #tpu.memory_space<vmem>>, vector<1x1x1xf32>
    tpu.vector_store %arg13[%c0_144, %c0_145, %c0_146], %271 {strides = array<i32>} : memref<1x1x1xf32, #tpu.memory_space<vmem>>, vector<1x1x1xf32>,
    return
  }
  func.func @transform_0(%arg0: i32) -> (i32, i32, i32) {
    %c0_i32 = arith.constant 0 : i32
    %c0_i32_0 = arith.constant 0 : i32
    %c0_i32_1 = arith.constant 0 : i32
    return %arg0, %c0_i32, %c0_i32_0 : i32, i32, i32
  }
  func.func @transform_1(%arg0: i32) -> (i32, i32) {
    %c0_i32 = arith.constant 0 : i32
    %c0_i32_0 = arith.constant 0 : i32
    %c0_i32_1 = arith.constant 0 : i32
    return %c0_i32, %c0_i32_0 : i32, i32
  }
  func.func @transform_2(%arg0: i32) -> (i32, i32) {
    %c0_i32 = arith.constant 0 : i32
    %c0_i32_0 = arith.constant 0 : i32
    %c0_i32_1 = arith.constant 0 : i32
    return %c0_i32, %c0_i32_0 : i32, i32
  }
  func.func @transform_3(%arg0: i32) -> (i32, i32, i32) {
    %c0_i32 = arith.constant 0 : i32
    %c0_i32_0 = arith.constant 0 : i32
    %c0_i32_1 = arith.constant 0 : i32
    %c0_i32_2 = arith.constant 0 : i32
    return %c0_i32, %c0_i32_0, %c0_i32_1 : i32, i32, i32
  }
  func.func @transform_4(%arg0: i32) -> (i32, i32, i32) {
    %c0_i32 = arith.constant 0 : i32
    %c0_i32_0 = arith.constant 0 : i32
    %c0_i32_1 = arith.constant 0 : i32
    %c0_i32_2 = arith.constant 0 : i32
    return %c0_i32, %c0_i32_0, %c0_i32_1 : i32, i32, i32
  }
  func.func @transform_5(%arg0: i32) -> (i32, i32, i32) {
    %c0_i32 = arith.constant 0 : i32
    %c0_i32_0 = arith.constant 0 : i32
    %c0_i32_1 = arith.constant 0 : i32
    %c0_i32_2 = arith.constant 0 : i32
    return %c0_i32, %c0_i32_0, %c0_i32_1 : i32, i32, i32
  }
  func.func @transform_6(%arg0: i32) -> (i32, i32) {
    %c0_i32 = arith.constant 0 : i32
    %c0_i32_0 = arith.constant 0 : i32
    %c0_i32_1 = arith.constant 0 : i32
    return %c0_i32, %c0_i32_0 : i32, i32
  }
  func.func @transform_7(%arg0: i32) -> (i32, i32) {
    %c0_i32 = arith.constant 0 : i32
    %c0_i32_0 = arith.constant 0 : i32
    %c0_i32_1 = arith.constant 0 : i32
    return %c0_i32, %c0_i32_0 : i32, i32
  }
  func.func @transform_8(%arg0: i32) -> (i32, i32) {
    %c0_i32 = arith.constant 0 : i32
    %c0_i32_0 = arith.constant 0 : i32
    %c0_i32_1 = arith.constant 0 : i32
    return %c0_i32, %c0_i32_0 : i32, i32
  }
  func.func @transform_9(%arg0: i32) -> (i32, i32) {
    %c0_i32 = arith.constant 0 : i32
    %c0_i32_0 = arith.constant 0 : i32
    %c0_i32_1 = arith.constant 0 : i32
    return %c0_i32, %c0_i32_0 : i32, i32
  }
  func.func @transform_10(%arg0: i32) -> (i32, i32) {
    %c0_i32 = arith.constant 0 : i32
    %c0_i32_0 = arith.constant 0 : i32
    %c0_i32_1 = arith.constant 0 : i32
    return %c0_i32, %c0_i32_0 : i32, i32
  }
  func.func @transform_11(%arg0: i32) -> (i32, i32) {
    %c0_i32 = arith.constant 0 : i32
    %c0_i32_0 = arith.constant 0 : i32
    %c0_i32_1 = arith.constant 0 : i32
    return %c0_i32, %c0_i32_0 : i32, i32
  }
  func.func @transform_12(%arg0: i32) -> (i32, i32, i32) {
    %c0_i32 = arith.constant 0 : i32
    %c0_i32_0 = arith.constant 0 : i32
    %c0_i32_1 = arith.constant 0 : i32
    return %arg0, %c0_i32, %c0_i32_0 : i32, i32, i32
  }
}

</mosaic_0001>

<llo_original>
// kernel: tinysleepnet_forward.1
$region0: #{tinysleepnet_forward.1}
  #allocation0 [shape = 'u32[]', space=smem, size = 0x4, offset = 0x4, fixed_abs, tag = 'smem constant byte address 0x4 - core index']
  #allocation1 [shape = 'u32[144,128]{1,0:T(1,128)}', space=vmem, size = 0x12000, scoped, tag = 'internal scratch']
  #allocation2 [shape = 'f32[1,1]{1,0:T(1,128)S(1)}', space=vmem, size = 0x200, scoped, tag = 'scoped memory for tinysleepnet_forward.1']
  %s0 = inlined_call_operand.vmem [shape: bf16[2,289,128], index: 0, kind: input, shape index: {}]
  %s1 = inlined_call_operand.vmem [shape: bf16[128,128], index: 1, kind: input, shape index: {}]
  %s2 = inlined_call_operand.vmem [shape: bf16[128,128], index: 2, kind: input, shape index: {}]
  %s3 = inlined_call_operand.vmem [shape: bf16[8,128,128], index: 3, kind: input, shape index: {}]
  %s4 = inlined_call_operand.vmem [shape: bf16[8,128,128], index: 4, kind: input, shape index: {}]
  %s5 = inlined_call_operand.vmem [shape: bf16[8,128,128], index: 5, kind: input, shape index: {}]
  %s6 = inlined_call_operand.vmem [shape: f32[4,128], index: 6, kind: input, shape index: {}]
  %s7 = inlined_call_operand.vmem [shape: bf16[128,512], index: 7, kind: input, shape index: {}]
  %s8 = inlined_call_operand.vmem [shape: bf16[128,512], index: 8, kind: input, shape index: {}]
  %s9 = inlined_call_operand.vmem [shape: f32[1,512], index: 9, kind: input, shape index: {}]
  %s10 = inlined_call_operand.vmem [shape: f32[1,128], index: 10, kind: input, shape index: {}]
  %s11 = inlined_call_operand.<no memory space> [shape: f32[1,1], index: 11, kind: input, shape index: {}]
  %s12 = inlined_call_operand.vmem [shape: f32[2,1,1], index: 12, kind: output, shape index: {}]
  %s13 = sld [smem:[#allocation0]]
  $region81: #{tinysleepnet_forward.1} parent=0
    _
  %s15 = ssub.s32 1, %s13
  %s16 = scalar_select 0, %s15, %s13
  %v17 = vstv %s11
  %18 = vst [vmem:[#allocation2] sm:$0x1] %v17
  loop: start=0, step=1, limit=4
  $region2: #{tinysleepnet_forward.1} parent=0 // loop_pre_header
    _
  $region3: #{tinysleepnet_forward.1} parent=0 // loop_header
    %s20 = sphi 0, %s24
    %p21 = scmp.ge.s32.totalorder %s20, 4
    %s30 = sphi 0, %s32
    %s33 = sphi 0, %s30
    %s34 = sphi 0, %s33
    %s50 = sphi 0, %s34
    %s54 = sphi 0, %s54
    %s56 = sphi 0, %s54
    %s57 = sphi 0, %s56
    %s71 = sphi 0, %s57
    %s75 = sphi 0, %s75
    %s77 = sphi 0, %s75
    %s78 = sphi 0, %s77
    %s92 = sphi 0, %s78
    %s96 = sphi 0, %s96
    %s98 = sphi 0, %s96
    %s99 = sphi 0, %s98
    %s113 = sphi 0, %s99
    %s117 = sphi 0, %s117
    %s119 = sphi 0, %s117
    %s120 = sphi 0, %s119
    %s134 = sphi 0, %s120
    %s138 = sphi 0, %s138
    %s140 = sphi 0, %s138
    %s141 = sphi 0, %s140
    %s155 = sphi 0, %s141
    %s159 = sphi 0, %s159
    %s161 = sphi 0, %s159
    %s162 = sphi 0, %s161
    %s176 = sphi 0, %s162
    %s180 = sphi 0, %s180
    %s182 = sphi 0, %s180
    %s183 = sphi 0, %s182
    %s197 = sphi 0, %s183
    %s201 = sphi 0, %s201
    %s203 = sphi 0, %s201
    %s204 = sphi 0, %s203
    %s218 = sphi 0, %s204
    %s222 = sphi 0, %s222
    %s224 = sphi 0, %s222
    %s225 = sphi 0, %s224
    %s239 = sphi 0, %s225
    %s243 = sphi 0, %s243
    %s245 = sphi 0, %s243
    %s246 = sphi 0, %s245
    %s260 = sphi 0, %s246
    %s264 = sphi 0, %s264
    %s266 = sphi 0, %s264
    %s267 = sphi 0, %s266
    %s281 = sphi 0, %s267
    %s287 = sphi 0, %s289
    %s290 = sphi 0, %s287
    %s291 = sphi 0, %s290
    %s307 = sphi 0, %s291
  $region4: #{tinysleepnet_forward.1} parent=0 // loop_header_branch
    %23 = sbr.rel (%p21) target = $region8
  $region5: #{tinysleepnet_forward.1} parent=0 // loop_body
    %s25 = ssub.s32 %s20, 1
    %s26 = ssub.s32 %s20, 2
    %s27 = sadd.s32 %s20, 1
    %s28 = ssub.s32 %s20, %s27
    %p29 = scmp.eq.s32.totalorder %s28, 0
    %s31 = sadd.s32 %s30, 1
    %s32 = scalar_select %p29, %s30, %s31
    %p35 = pneg %p29
    %p36 = scmp.eq.s32.totalorder %s20, 1
    %p37 = por %p35, %p36
    %p38 = scmp.ne.s32.totalorder %s30, %s33
    %p39 = scmp.eq.s32.totalorder %s20, 0
    %p40 = por %p38, %p39
    %p41 = scmp.ne.s32.totalorder %s30, %s33
    %p42 = scmp.eq.s32.totalorder %s25, 1
    %p43 = por %p41, %p42
    %p44 = scmp.ne.s32.totalorder %s33, %s34
    %p45 = scmp.eq.s32.totalorder %s25, 0
    %p46 = por %p44, %p45
    %p47 = scmp.ne.s32.totalorder %s33, %s34
    %p48 = scmp.eq.s32.totalorder %s26, 1
    %p49 = por %p47, %p48
    %p51 = scmp.ne.s32.totalorder %s34, %s50
    %p52 = scmp.eq.s32.totalorder %s26, 0
    %p53 = por %p51, %p52
    %s55 = sadd.s32 %s54, 1
    %p58 = scmp.eq.s32.totalorder %s20, 1
    %p59 = scmp.ne.s32.totalorder %s54, %s56
    %p60 = scmp.eq.s32.totalorder %s20, 0
    %p61 = por %p59, %p60
    %p62 = scmp.ne.s32.totalorder %s54, %s56
    %p63 = scmp.eq.s32.totalorder %s25, 1
    %p64 = por %p62, %p63
    %p65 = scmp.ne.s32.totalorder %s56, %s57
    %p66 = scmp.eq.s32.totalorder %s25, 0
    %p67 = por %p65, %p66
    %p68 = scmp.ne.s32.totalorder %s56, %s57
    %p69 = scmp.eq.s32.totalorder %s26, 1
    %p70 = por %p68, %p69
    %p72 = scmp.ne.s32.totalorder %s57, %s71
    %p73 = scmp.eq.s32.totalorder %s26, 0
    %p74 = por %p72, %p73
    %s76 = sadd.s32 %s75, 1
    %p79 = scmp.eq.s32.totalorder %s20, 1
    %p80 = scmp.ne.s32.totalorder %s75, %s77
    %p81 = scmp.eq.s32.totalorder %s20, 0
    %p82 = por %p80, %p81
    %p83 = scmp.ne.s32.totalorder %s75, %s77
    %p84 = scmp.eq.s32.totalorder %s25, 1
    %p85 = por %p83, %p84
    %p86 = scmp.ne.s32.totalorder %s77, %s78
    %p87 = scmp.eq.s32.totalorder %s25, 0
    %p88 = por %p86, %p87
    %p89 = scmp.ne.s32.totalorder %s77, %s78
    %p90 = scmp.eq.s32.totalorder %s26, 1
    %p91 = por %p89, %p90
    %p93 = scmp.ne.s32.totalorder %s78, %s92
    %p94 = scmp.eq.s32.totalorder %s26, 0
    %p95 = por %p93, %p94
    %s97 = sadd.s32 %s96, 1
    %p100 = scmp.eq.s32.totalorder %s20, 1
    %p101 = scmp.ne.s32.totalorder %s96, %s98
    %p102 = scmp.eq.s32.totalorder %s20, 0
    %p103 = por %p101, %p102
    %p104 = scmp.ne.s32.totalorder %s96, %s98
    %p105 = scmp.eq.s32.totalorder %s25, 1
    %p106 = por %p104, %p105
    %p107 = scmp.ne.s32.totalorder %s98, %s99
    %p108 = scmp.eq.s32.totalorder %s25, 0
    %p109 = por %p107, %p108
    %p110 = scmp.ne.s32.totalorder %s98, %s99
    %p111 = scmp.eq.s32.totalorder %s26, 1
    %p112 = por %p110, %p111
    %p114 = scmp.ne.s32.totalorder %s99, %s113
    %p115 = scmp.eq.s32.totalorder %s26, 0
    %p116 = por %p114, %p115
    %s118 = sadd.s32 %s117, 1
    %p121 = scmp.eq.s32.totalorder %s20, 1
    %p122 = scmp.ne.s32.totalorder %s117, %s119
    %p123 = scmp.eq.s32.totalorder %s20, 0
    %p124 = por %p122, %p123
    %p125 = scmp.ne.s32.totalorder %s117, %s119
    %p126 = scmp.eq.s32.totalorder %s25, 1
    %p127 = por %p125, %p126
    %p128 = scmp.ne.s32.totalorder %s119, %s120
    %p129 = scmp.eq.s32.totalorder %s25, 0
    %p130 = por %p128, %p129
    %p131 = scmp.ne.s32.totalorder %s119, %s120
    %p132 = scmp.eq.s32.totalorder %s26, 1
    %p133 = por %p131, %p132
    %p135 = scmp.ne.s32.totalorder %s120, %s134
    %p136 = scmp.eq.s32.totalorder %s26, 0
    %p137 = por %p135, %p136
    %s139 = sadd.s32 %s138, 1
    %p142 = scmp.eq.s32.totalorder %s20, 1
    %p143 = scmp.ne.s32.totalorder %s138, %s140
    %p144 = scmp.eq.s32.totalorder %s20, 0
    %p145 = por %p143, %p144
    %p146 = scmp.ne.s32.totalorder %s138, %s140
    %p147 = scmp.eq.s32.totalorder %s25, 1
    %p148 = por %p146, %p147
    %p149 = scmp.ne.s32.totalorder %s140, %s141
    %p150 = scmp.eq.s32.totalorder %s25, 0
    %p151 = por %p149, %p150
    %p152 = scmp.ne.s32.totalorder %s140, %s141
    %p153 = scmp.eq.s32.totalorder %s26, 1
    %p154 = por %p152, %p153
    %p156 = scmp.ne.s32.totalorder %s141, %s155
    %p157 = scmp.eq.s32.totalorder %s26, 0
    %p158 = por %p156, %p157
    %s160 = sadd.s32 %s159, 1
    %p163 = scmp.eq.s32.totalorder %s20, 1
    %p164 = scmp.ne.s32.totalorder %s159, %s161
    %p165 = scmp.eq.s32.totalorder %s20, 0
    %p166 = por %p164, %p165
    %p167 = scmp.ne.s32.totalorder %s159, %s161
    %p168 = scmp.eq.s32.totalorder %s25, 1
    %p169 = por %p167, %p168
    %p170 = scmp.ne.s32.totalorder %s161, %s162
    %p171 = scmp.eq.s32.totalorder %s25, 0
    %p172 = por %p170, %p171
    %p173 = scmp.ne.s32.totalorder %s161, %s162
    %p174 = scmp.eq.s32.totalorder %s26, 1
    %p175 = por %p173, %p174
    %p177 = scmp.ne.s32.totalorder %s162, %s176
    %p178 = scmp.eq.s32.totalorder %s26, 0
    %p179 = por %p177, %p178
    %s181 = sadd.s32 %s180, 1
    %p184 = scmp.eq.s32.totalorder %s20, 1
    %p185 = scmp.ne.s32.totalorder %s180, %s182
    %p186 = scmp.eq.s32.totalorder %s20, 0
    %p187 = por %p185, %p186
    %p188 = scmp.ne.s32.totalorder %s180, %s182
    %p189 = scmp.eq.s32.totalorder %s25, 1
    %p190 = por %p188, %p189
    %p191 = scmp.ne.s32.totalorder %s182, %s183
    %p192 = scmp.eq.s32.totalorder %s25, 0
    %p193 = por %p191, %p192
    %p194 = scmp.ne.s32.totalorder %s182, %s183
    %p195 = scmp.eq.s32.totalorder %s26, 1
    %p196 = por %p194, %p195
    %p198 = scmp.ne.s32.totalorder %s183, %s197
    %p199 = scmp.eq.s32.totalorder %s26, 0
    %p200 = por %p198, %p199
    %s202 = sadd.s32 %s201, 1
    %p205 = scmp.eq.s32.totalorder %s20, 1
    %p206 = scmp.ne.s32.totalorder %s201, %s203
    %p207 = scmp.eq.s32.totalorder %s20, 0
    %p208 = por %p206, %p207
    %p209 = scmp.ne.s32.totalorder %s201, %s203
    %p210 = scmp.eq.s32.totalorder %s25, 1
    %p211 = por %p209, %p210
    %p212 = scmp.ne.s32.totalorder %s203, %s204
    %p213 = scmp.eq.s32.totalorder %s25, 0
    %p214 = por %p212, %p213
    %p215 = scmp.ne.s32.totalorder %s203, %s204
    %p216 = scmp.eq.s32.totalorder %s26, 1
    %p217 = por %p215, %p216
    %p219 = scmp.ne.s32.totalorder %s204, %s218
    %p220 = scmp.eq.s32.totalorder %s26, 0
    %p221 = por %p219, %p220
    %s223 = sadd.s32 %s222, 1
    %p226 = scmp.eq.s32.totalorder %s20, 1
    %p227 = scmp.ne.s32.totalorder %s222, %s224
    %p228 = scmp.eq.s32.totalorder %s20, 0
    %p229 = por %p227, %p228
    %p230 = scmp.ne.s32.totalorder %s222, %s224
    %p231 = scmp.eq.s32.totalorder %s25, 1
    %p232 = por %p230, %p231
    %p233 = scmp.ne.s32.totalorder %s224, %s225
    %p234 = scmp.eq.s32.totalorder %s25, 0
    %p235 = por %p233, %p234
    %p236 = scmp.ne.s32.totalorder %s224, %s225
    %p237 = scmp.eq.s32.totalorder %s26, 1
    %p238 = por %p236, %p237
    %p240 = scmp.ne.s32.totalorder %s225, %s239
    %p241 = scmp.eq.s32.totalorder %s26, 0
    %p242 = por %p240, %p241
    %s244 = sadd.s32 %s243, 1
    %p247 = scmp.eq.s32.totalorder %s20, 1
    %p248 = scmp.ne.s32.totalorder %s243, %s245
    %p249 = scmp.eq.s32.totalorder %s20, 0
    %p250 = por %p248, %p249
    %p251 = scmp.ne.s32.totalorder %s243, %s245
    %p252 = scmp.eq.s32.totalorder %s25, 1
    %p253 = por %p251, %p252
    %p254 = scmp.ne.s32.totalorder %s245, %s246
    %p255 = scmp.eq.s32.totalorder %s25, 0
    %p256 = por %p254, %p255
    %p257 = scmp.ne.s32.totalorder %s245, %s246
    %p258 = scmp.eq.s32.totalorder %s26, 1
    %p259 = por %p257, %p258
    %p261 = scmp.ne.s32.totalorder %s246, %s260
    %p262 = scmp.eq.s32.totalorder %s26, 0
    %p263 = por %p261, %p262
    %s265 = sadd.s32 %s264, 1
    %p268 = scmp.eq.s32.totalorder %s20, 1
    %p269 = scmp.ne.s32.totalorder %s264, %s266
    %p270 = scmp.eq.s32.totalorder %s20, 0
    %p271 = por %p269, %p270
    %p272 = scmp.ne.s32.totalorder %s264, %s266
    %p273 = scmp.eq.s32.totalorder %s25, 1
    %p274 = por %p272, %p273
    %p275 = scmp.ne.s32.totalorder %s266, %s267
    %p276 = scmp.eq.s32.totalorder %s25, 0
    %p277 = por %p275, %p276
    %p278 = scmp.ne.s32.totalorder %s266, %s267
    %p279 = scmp.eq.s32.totalorder %s26, 1
    %p280 = por %p278, %p279
    %p282 = scmp.ne.s32.totalorder %s267, %s281
    %p283 = scmp.eq.s32.totalorder %s26, 0
    %p284 = por %p282, %p283
    %s285 = ssub.s32 %s20, %s27
    %p286 = scmp.eq.s32.totalorder %s285, 0
    %s288 = sadd.s32 %s287, 1
    %s289 = scalar_select %p286, %s287, %s288
    %p292 = pneg %p286
    %p293 = scmp.eq.s32.totalorder %s20, 1
    %p294 = por %p292, %p293
    %p295 = scmp.ne.s32.totalorder %s287, %s290
    %p296 = scmp.eq.s32.totalorder %s20, 0
    %p297 = por %p295, %p296
    %p298 = scmp.ne.s32.totalorder %s287, %s290
    %p299 = scmp.eq.s32.totalorder %s25, 1
    %p300 = por %p298, %p299
    %p301 = scmp.ne.s32.totalorder %s290, %s291
    %p302 = scmp.eq.s32.totalorder %s25, 0
    %p303 = por %p301, %p302
    %p304 = scmp.ne.s32.totalorder %s290, %s291
    %p305 = scmp.eq.s32.totalorder %s26, 1
    %p306 = por %p304, %p305
    %p308 = scmp.ne.s32.totalorder %s291, %s307
    %p309 = scmp.eq.s32.totalorder %s26, 0
    %p310 = por %p308, %p309
    %p311 = scmp.le.s32.totalorder 1, %s20
    %p312 = scmp.lt.s32.totalorder %s20, 3
    %p313 = pnand %p311, %p312
    %p314 = pneg %p313
    // Predicated region
    $region9: #{tinysleepnet_forward.1} parent=5 // pred_check
      _
    $region10: #{tinysleepnet_forward.1} parent=5 // pred_check_branch
      %316 = sbr.rel (%p313) target = $region12
    $region11: #{tinysleepnet_forward.1} parent=5 // pred_region
      %s317 = ssub.s32 %s20, 1
      // Predicated region
      $region13: #{tinysleepnet_forward.1} parent=11 // pred_check
        %p318 = pneg %p67
      $region14: #{tinysleepnet_forward.1} parent=11 // pred_check_branch
        %320 = sbr.rel (%p318) target = $region16
      $region15: #{tinysleepnet_forward.1} parent=11 // pred_region
        _
      $region16: #{tinysleepnet_forward.1} parent=11 // pred_fallthru
        _
      // Predicated region
      $region17: #{tinysleepnet_forward.1} parent=11 // pred_check
        %p321 = pneg %p88
      $region18: #{tinysleepnet_forward.1} parent=11 // pred_check_branch
        %323 = sbr.rel (%p321) target = $region20
      $region19: #{tinysleepnet_forward.1} parent=11 // pred_region
        _
      $region20: #{tinysleepnet_forward.1} parent=11 // pred_fallthru
        _
      // Predicated region
      $region21: #{tinysleepnet_forward.1} parent=11 // pred_check
        %p324 = pneg %p109
      $region22: #{tinysleepnet_forward.1} parent=11 // pred_check_branch
        %326 = sbr.rel (%p324) target = $region24
      $region23: #{tinysleepnet_forward.1} parent=11 // pred_region
        _
      $region24: #{tinysleepnet_forward.1} parent=11 // pred_fallthru
        _
      // Predicated region
      $region25: #{tinysleepnet_forward.1} parent=11 // pred_check
        %p327 = pneg %p130
      $region26: #{tinysleepnet_forward.1} parent=11 // pred_check_branch
        %329 = sbr.rel (%p327) target = $region28
      $region27: #{tinysleepnet_forward.1} parent=11 // pred_region
        _
      $region28: #{tinysleepnet_forward.1} parent=11 // pred_fallthru
        _
      // Predicated region
      $region29: #{tinysleepnet_forward.1} parent=11 // pred_check
        %p330 = pneg %p151
      $region30: #{tinysleepnet_forward.1} parent=11 // pred_check_branch
        %332 = sbr.rel (%p330) target = $region32
      $region31: #{tinysleepnet_forward.1} parent=11 // pred_region
        _
      $region32: #{tinysleepnet_forward.1} parent=11 // pred_fallthru
        _
      // Predicated region
      $region33: #{tinysleepnet_forward.1} parent=11 // pred_check
        %p333 = pneg %p172
      $region34: #{tinysleepnet_forward.1} parent=11 // pred_check_branch
        %335 = sbr.rel (%p333) target = $region36
      $region35: #{tinysleepnet_forward.1} parent=11 // pred_region
        _
      $region36: #{tinysleepnet_forward.1} parent=11 // pred_fallthru
        _
      // Predicated region
      $region37: #{tinysleepnet_forward.1} parent=11 // pred_check
        %p336 = pneg %p193
      $region38: #{tinysleepnet_forward.1} parent=11 // pred_check_branch
        %338 = sbr.rel (%p336) target = $region40
      $region39: #{tinysleepnet_forward.1} parent=11 // pred_region
        _
      $region40: #{tinysleepnet_forward.1} parent=11 // pred_fallthru
        _
      // Predicated region
      $region41: #{tinysleepnet_forward.1} parent=11 // pred_check
        %p339 = pneg %p214
      $region42: #{tinysleepnet_forward.1} parent=11 // pred_check_branch
        %341 = sbr.rel (%p339) target = $region44
      $region43: #{tinysleepnet_forward.1} parent=11 // pred_region
        _
      $region44: #{tinysleepnet_forward.1} parent=11 // pred_fallthru
        _
      // Predicated region
      $region45: #{tinysleepnet_forward.1} parent=11 // pred_check
        %p342 = pneg %p235
      $region46: #{tinysleepnet_forward.1} parent=11 // pred_check_branch
        %344 = sbr.rel (%p342) target = $region48
      $region47: #{tinysleepnet_forward.1} parent=11 // pred_region
        _
      $region48: #{tinysleepnet_forward.1} parent=11 // pred_fallthru
        _
      // Predicated region
      $region49: #{tinysleepnet_forward.1} parent=11 // pred_check
        %p345 = pneg %p256
      $region50: #{tinysleepnet_forward.1} parent=11 // pred_check_branch
        %347 = sbr.rel (%p345) target = $region52
      $region51: #{tinysleepnet_forward.1} parent=11 // pred_region
        _
      $region52: #{tinysleepnet_forward.1} parent=11 // pred_fallthru
        _
      // Predicated region
      $region53: #{tinysleepnet_forward.1} parent=11 // pred_check
        %p348 = pneg %p277
      $region54: #{tinysleepnet_forward.1} parent=11 // pred_check_branch
        %350 = sbr.rel (%p348) target = $region56
      $region55: #{tinysleepnet_forward.1} parent=11 // pred_region
        _
      $region56: #{tinysleepnet_forward.1} parent=11 // pred_fallthru
        _
    $region12: #{tinysleepnet_forward.1} parent=5 // pred_fallthru
      _
    %p351 = scmp.lt.s32.totalorder %s20, 2
    // Predicated region
    $region57: #{tinysleepnet_forward.1} parent=5 // pred_check
      %p352 = pneg %p351
    $region58: #{tinysleepnet_forward.1} parent=5 // pred_check_branch
      %354 = sbr.rel (%p352) target = $region60
    $region59: #{tinysleepnet_forward.1} parent=5 // pred_region
      // Predicated region
      $region61: #{tinysleepnet_forward.1} parent=59 // pred_check
        %p355 = pneg %p40
      $region62: #{tinysleepnet_forward.1} parent=59 // pred_check_branch
        %357 = sbr.rel (%p355) target = $region64
      $region63: #{tinysleepnet_forward.1} parent=59 // pred_region
        %p358 = scmp.lt.s32.totalorder %s20, 1
        %s359 = scalar_select %p358, %s20, 1
        %s360 = smul.addr %s359, 37
        %s361 = smul.addr %s360, 4
        %s362 = scalar_lea.vmem %s0, %s361
      $region64: #{tinysleepnet_forward.1} parent=59 // pred_fallthru
        _
    $region60: #{tinysleepnet_forward.1} parent=5 // pred_fallthru
      _
    %p363 = scmp.le.s32.totalorder 1, %s20
    %p364 = scmp.lt.s32.totalorder %s20, 3
    %p365 = pnand %p363, %p364
    %p366 = pneg %p365
    // Predicated region
    $region65: #{tinysleepnet_forward.1} parent=5 // pred_check
      _
    $region66: #{tinysleepnet_forward.1} parent=5 // pred_check_branch
      %368 = sbr.rel (%p365) target = $region68
    $region67: #{tinysleepnet_forward.1} parent=5 // pred_region
      %s369 = ssub.s32 %s20, 1
      %p370 = scmp.lt.s32.totalorder %s25, 1
      %s371 = scalar_select %p370, %s25, 1
      %s372 = smul.addr %s371, 37
      %s373 = smul.addr %s372, 4
      %s374 = scalar_lea.vmem %s0, %s373
      %p375 = pneg %p46
      %p376 = pneg %p43
      %p377 = pneg %p67
      %p378 = pneg %p64
      %p379 = pneg %p88
      %p380 = pneg %p85
      %p381 = pneg %p109
      %p382 = pneg %p106
      %p383 = pneg %p130
      %p384 = pneg %p127
      %p385 = pneg %p151
      %p386 = pneg %p148
      %p387 = pneg %p172
      %p388 = pneg %p169
      %p389 = pneg %p193
      %p390 = pneg %p190
      %p391 = pneg %p214
      %p392 = pneg %p211
      %p393 = pneg %p235
      %p394 = pneg %p232
      %p395 = pneg %p256
      %p396 = pneg %p253
      %p397 = pneg %p277
      %p398 = pneg %p274
      %p399 = pneg %p303
      %p400 = pneg %p300
      %p401 = scmp.lt.s32.totalorder %s25, 1
      %s402 = scalar_select %p401, %s25, 1
      %s403 = scalar_lea.vmem %s12, %s402
      %p404 = scmp.lt.s32.totalorder %s25, 1
      %s405 = scalar_select %p404, %s25, 1
      %s406 = smul.addr %s405, 37
      %s407 = smul.addr %s406, 4
      %s408 = scalar_lea.vmem %s0, %s407
      %p409 = scmp.lt.s32.totalorder %s25, 1
      %s410 = scalar_select %p409, %s25, 1
      %s411 = scalar_lea.vmem %s12, %s410
      %v413 = vld [vmem:[%s408] sm:$0xf]
      %v414 = vld [vmem:[%s408 + $0x4] sm:$0xf]
      %v415 = vld [vmem:[%s408 + $0x8] sm:$0xf]
      %v416 = vld [vmem:[%s408 + $0xc] sm:$0xf]
      %v417 = vld [vmem:[%s408 + $0x10] sm:$0xf]
      %v418 = vld [vmem:[%s408 + $0x14] sm:$0xf]
      %v419 = vld [vmem:[%s408 + $0x18] sm:$0xf]
      %v420 = vld [vmem:[%s408 + $0x1c] sm:$0xf]
      %v421 = vld [vmem:[%s408 + $0x20] sm:$0xf]
      %v422 = vld [vmem:[%s408 + $0x24] sm:$0xf]
      %v423 = vld [vmem:[%s408 + $0x28] sm:$0xf]
      %v424 = vld [vmem:[%s408 + $0x2c] sm:$0xf]
      %v425 = vld [vmem:[%s408 + $0x30] sm:$0xf]
      %v426 = vld [vmem:[%s408 + $0x34] sm:$0xf]
      %v427 = vld [vmem:[%s408 + $0x38] sm:$0xf]
      %v428 = vld [vmem:[%s408 + $0x3c] sm:$0xf]
      %v429 = vld [vmem:[%s408 + $0x40] sm:$0xf]
      %v430 = vld [vmem:[%s408 + $0x44] sm:$0xf]
      %v431 = vld [vmem:[%s408 + $0x48] sm:$0xf]
      %v432 = vld [vmem:[%s408 + $0x4c] sm:$0xf]
      %v433 = vld [vmem:[%s408 + $0x50] sm:$0xf]
      %v434 = vld [vmem:[%s408 + $0x54] sm:$0xf]
      %v435 = vld [vmem:[%s408 + $0x58] sm:$0xf]
      %v436 = vld [vmem:[%s408 + $0x5c] sm:$0xf]
      %v437 = vld [vmem:[%s408 + $0x60] sm:$0xf]
      %v438 = vld [vmem:[%s408 + $0x64] sm:$0xf]
      %v439 = vld [vmem:[%s408 + $0x68] sm:$0xf]
      %v440 = vld [vmem:[%s408 + $0x6c] sm:$0xf]
      %v441 = vld [vmem:[%s408 + $0x70] sm:$0xf]
      %v442 = vld [vmem:[%s408 + $0x74] sm:$0xf]
      %v443 = vld [vmem:[%s408 + $0x78] sm:$0xf]
      %v444 = vld [vmem:[%s408 + $0x7c] sm:$0xf]
      %v445 = vld [vmem:[%s408 + $0x80] sm:$0xf]
      %v446 = vld [vmem:[%s408 + $0x84] sm:$0xf]
      %v447 = vld [vmem:[%s408 + $0x88] sm:$0xf]
      %v448 = vld [vmem:[%s408 + $0x8c] sm:$0xf]
      %v449 = vld [vmem:[%s408 + $0x90] sm:$0x1]
      %v450 = vld [vmem:[%s1] sm:$0xf]
      %v451 = vld [vmem:[%s1 + $0x4] sm:$0xf]
      %v452 = vld [vmem:[%s1 + $0x8] sm:$0xf]
      %v453 = vld [vmem:[%s1 + $0xc] sm:$0xf]
      %v454 = vld [vmem:[%s1 + $0x10] sm:$0xf]
      %v455 = vld [vmem:[%s1 + $0x14] sm:$0xf]
      %v456 = vld [vmem:[%s1 + $0x18] sm:$0xf]
      %v457 = vld [vmem:[%s1 + $0x1c] sm:$0xf]
      %v458 = vld [vmem:[%s1 + $0x20] sm:$0xf]
      %v459 = vld [vmem:[%s1 + $0x24] sm:$0xf]
      %v460 = vld [vmem:[%s1 + $0x28] sm:$0xf]
      %v461 = vld [vmem:[%s1 + $0x2c] sm:$0xf]
      %v462 = vld [vmem:[%s1 + $0x30] sm:$0xf]
      %v463 = vld [vmem:[%s1 + $0x34] sm:$0xf]
      %v464 = vld [vmem:[%s1 + $0x38] sm:$0xf]
      %v465 = vld [vmem:[%s1 + $0x3c] sm:$0xf]
      %v466 = vld [vmem:[%s2] sm:$0xf]
      %v467 = vld [vmem:[%s2 + $0x4] sm:$0xf]
      %v468 = vld [vmem:[%s2 + $0x8] sm:$0xf]
      %v469 = vld [vmem:[%s2 + $0xc] sm:$0xf]
      %v470 = vld [vmem:[%s2 + $0x10] sm:$0xf]
      %v471 = vld [vmem:[%s2 + $0x14] sm:$0xf]
      %v472 = vld [vmem:[%s2 + $0x18] sm:$0xf]
      %v473 = vld [vmem:[%s2 + $0x1c] sm:$0xf]
      %v474 = vld [vmem:[%s2 + $0x20] sm:$0xf]
      %v475 = vld [vmem:[%s2 + $0x24] sm:$0xf]
      %v476 = vld [vmem:[%s2 + $0x28] sm:$0xf]
      %v477 = vld [vmem:[%s2 + $0x2c] sm:$0xf]
      %v478 = vld [vmem:[%s2 + $0x30] sm:$0xf]
      %v479 = vld [vmem:[%s2 + $0x34] sm:$0xf]
      %v480 = vld [vmem:[%s2 + $0x38] sm:$0xf]
      %v481 = vld [vmem:[%s2 + $0x3c] sm:$0xf]
      %v519 = vunpack.c.l.b16 %v413
      %v520 = vunpack.c.l.b16 %v414
      %v521 = vunpack.c.l.b16 %v415
      %v522 = vunpack.c.l.b16 %v416
      %v523 = vunpack.c.l.b16 %v417
      %v524 = vunpack.c.l.b16 %v418
      %v525 = vunpack.c.l.b16 %v419
      %v526 = vunpack.c.l.b16 %v420
      %v527 = vunpack.c.l.b16 %v421
      %v528 = vunpack.c.l.b16 %v422
      %v529 = vunpack.c.l.b16 %v423
      %v530 = vunpack.c.l.b16 %v424
      %v531 = vunpack.c.l.b16 %v425
      %v532 = vunpack.c.l.b16 %v426
      %v533 = vunpack.c.l.b16 %v427
      %v534 = vunpack.c.l.b16 %v428
      %v535 = vunpack.c.l.b16 %v429
      %v536 = vunpack.c.l.b16 %v430
      %v537 = vunpack.c.l.b16 %v431
      %v538 = vunpack.c.l.b16 %v432
      %v539 = vunpack.c.l.b16 %v433
      %v540 = vunpack.c.l.b16 %v434
      %v541 = vunpack.c.l.b16 %v435
      %v542 = vunpack.c.l.b16 %v436
      %v543 = vunpack.c.l.b16 %v437
      %v544 = vunpack.c.l.b16 %v438
      %v545 = vunpack.c.l.b16 %v439
      %v546 = vunpack.c.l.b16 %v440
      %v547 = vunpack.c.l.b16 %v441
      %v548 = vunpack.c.l.b16 %v442
      %v549 = vunpack.c.l.b16 %v443
      %v550 = vunpack.c.l.b16 %v444
      %v551 = vunpack.c.l.b16 %v445
      %v552 = vunpack.c.l.b16 %v446
      %v553 = vunpack.c.l.b16 %v447
      %v554 = vunpack.c.l.b16 %v448
      %v555 = vunpack.c.l.b16 %v449
      %v556 = vpack.c.b16 %v520, %v519
      %v557 = vpack.c.b16 %v522, %v521
      %v558 = vpack.c.b16 %v524, %v523
      %v559 = vpack.c.b16 %v526, %v525
      %v560 = vpack.c.b16 %v528, %v527
      %v561 = vpack.c.b16 %v530, %v529
      %v562 = vpack.c.b16 %v532, %v531
      %v563 = vpack.c.b16 %v534, %v533
      %v564 = vpack.c.b16 %v536, %v535
      %v565 = vpack.c.b16 %v538, %v537
      %v566 = vpack.c.b16 %v540, %v539
      %v567 = vpack.c.b16 %v542, %v541
      %v568 = vpack.c.b16 %v544, %v543
      %v569 = vpack.c.b16 %v546, %v545
      %v570 = vpack.c.b16 %v548, %v547
      %v571 = vpack.c.b16 %v550, %v549
      %v572 = vpack.c.b16 %v552, %v551
      %v573 = vpack.c.b16 %v554, %v553
      %v574 = vpack.c.b16 %v555, %v555
      %vm575 = vsmask.f32 7424
      %v577 = vshrl.u32 %v556, 16
      %v579 = vshll.u32 %v556, 16
      %v581 = vrot.slane %v579, 1
      %v582 = vor.u32 %v577, %v581
      %v584 = vshll.u32 %v557, 16
      %v586 = vrot.slane %v584, 1
      %v587 = vsel %vm575, %v582, %v586
      %v588 = vshrl.u32 %v557, 16
      %v590 = vor.u32 %v588, %v586
      %v592 = vshll.u32 %v558, 16
      %v594 = vrot.slane %v592, 1
      %v595 = vsel %vm575, %v590, %v594
      %v596 = vshrl.u32 %v558, 16
      %v598 = vor.u32 %v596, %v594
      %v600 = vshll.u32 %v559, 16
      %v602 = vrot.slane %v600, 1
      %v603 = vsel %vm575, %v598, %v602
      %v604 = vshrl.u32 %v559, 16
      %v606 = vor.u32 %v604, %v602
      %v608 = vshll.u32 %v560, 16
      %v610 = vrot.slane %v608, 1
      %v611 = vsel %vm575, %v606, %v610
      %v612 = vshrl.u32 %v560, 16
      %v614 = vor.u32 %v612, %v610
      %v616 = vshll.u32 %v561, 16
      %v618 = vrot.slane %v616, 1
      %v619 = vsel %vm575, %v614, %v618
      %v620 = vshrl.u32 %v561, 16
      %v622 = vor.u32 %v620, %v618
      %v624 = vshll.u32 %v562, 16
      %v626 = vrot.slane %v624, 1
      %v627 = vsel %vm575, %v622, %v626
      %v628 = vshrl.u32 %v562, 16
      %v630 = vor.u32 %v628, %v626
      %v632 = vshll.u32 %v563, 16
      %v634 = vrot.slane %v632, 1
      %v635 = vsel %vm575, %v630, %v634
      %v636 = vshrl.u32 %v563, 16
      %v638 = vor.u32 %v636, %v634
      %v640 = vshll.u32 %v564, 16
      %v642 = vrot.slane %v640, 1
      %v643 = vsel %vm575, %v638, %v642
      %v644 = vshrl.u32 %v564, 16
      %v646 = vor.u32 %v644, %v642
      %v648 = vshll.u32 %v565, 16
      %v650 = vrot.slane %v648, 1
      %v651 = vsel %vm575, %v646, %v650
      %v652 = vshrl.u32 %v565, 16
      %v654 = vor.u32 %v652, %v650
      %v656 = vshll.u32 %v566, 16
      %v658 = vrot.slane %v656, 1
      %v659 = vsel %vm575, %v654, %v658
      %v660 = vshrl.u32 %v566, 16
      %v662 = vor.u32 %v660, %v658
      %v664 = vshll.u32 %v567, 16
      %v666 = vrot.slane %v664, 1
      %v667 = vsel %vm575, %v662, %v666
      %v668 = vshrl.u32 %v567, 16
      %v670 = vor.u32 %v668, %v666
      %v672 = vshll.u32 %v568, 16
      %v674 = vrot.slane %v672, 1
      %v675 = vsel %vm575, %v670, %v674
      %v676 = vshrl.u32 %v568, 16
      %v678 = vor.u32 %v676, %v674
      %v680 = vshll.u32 %v569, 16
      %v682 = vrot.slane %v680, 1
      %v683 = vsel %vm575, %v678, %v682
      %v684 = vshrl.u32 %v569, 16
      %v686 = vor.u32 %v684, %v682
      %v688 = vshll.u32 %v570, 16
      %v690 = vrot.slane %v688, 1
      %v691 = vsel %vm575, %v686, %v690
      %v692 = vshrl.u32 %v570, 16
      %v694 = vor.u32 %v692, %v690
      %v696 = vshll.u32 %v571, 16
      %v698 = vrot.slane %v696, 1
      %v699 = vsel %vm575, %v694, %v698
      %v700 = vshrl.u32 %v571, 16
      %v702 = vor.u32 %v700, %v698
      %v704 = vshll.u32 %v572, 16
      %v706 = vrot.slane %v704, 1
      %v707 = vsel %vm575, %v702, %v706
      %v708 = vshrl.u32 %v572, 16
      %v710 = vor.u32 %v708, %v706
      %v712 = vshll.u32 %v573, 16
      %v714 = vrot.slane %v712, 1
      %v715 = vsel %vm575, %v710, %v714
      %v716 = vshrl.u32 %v573, 16
      %v718 = vor.u32 %v716, %v714
      %v720 = vshll.u32 %v574, 16
      %v722 = vrot.slane %v720, 1
      %v723 = vsel %vm575, %v718, %v722
      %v758 = vunpack.c.l.b16 %v466
      %v759 = vunpack.c.l.b16 %v467
      %v760 = vunpack.c.l.b16 %v468
      %v761 = vunpack.c.l.b16 %v469
      %v762 = vunpack.c.l.b16 %v470
      %v763 = vunpack.c.l.b16 %v471
      %v764 = vunpack.c.l.b16 %v472
      %v765 = vunpack.c.l.b16 %v473
      %v766 = vunpack.c.l.b16 %v474
      %v767 = vunpack.c.l.b16 %v475
      %v768 = vunpack.c.l.b16 %v476
      %v769 = vunpack.c.l.b16 %v477
      %v770 = vunpack.c.l.b16 %v478
      %v771 = vunpack.c.l.b16 %v479
      %v772 = vunpack.c.l.b16 %v480
      %v773 = vunpack.c.l.b16 %v481
      %v774 = vpack.c.b16 %v759, %v758
      %v775 = vpack.c.b16 %v761, %v760
      %v776 = vpack.c.b16 %v763, %v762
      %v777 = vpack.c.b16 %v765, %v764
      %v778 = vpack.c.b16 %v767, %v766
      %v779 = vpack.c.b16 %v769, %v768
      %v780 = vpack.c.b16 %v771, %v770
      %v781 = vpack.c.b16 %v773, %v772
      %790 = vmatprep.subr.bf16.mxu0 0
      %791 = vmatpush1.bf16.msra.mxu0 %v774
      %792 = vmatprep.subr.bf16.mxu0 0
      %793 = vmatpush1.bf16.msra.mxu0 %v775
      %794 = vmatprep.subr.bf16.mxu0 0
      %795 = vmatpush1.bf16.msra.mxu0 %v776
      %796 = vmatprep.subr.bf16.mxu0 0
      %797 = vmatpush1.bf16.msra.mxu0 %v777
      %798 = vmatprep.subr.bf16.mxu0 0
      %799 = vmatpush1.bf16.msra.mxu0 %v778
      %800 = vmatprep.subr.bf16.mxu0 0
      %801 = vmatpush1.bf16.msra.mxu0 %v779
      %802 = vmatprep.subr.bf16.mxu0 0
      %803 = vmatpush1.bf16.msra.mxu0 %v780
      %804 = vmatprep.subr.bf16.mxu0 0
      %805 = vmatpush1.bf16.msra.mxu0 %v781
      %806 = vmatprep.subr.bf16.mxu0 0
      %807 = vmatpush1.bf16.msra.mxu0 0
      %808 = vmatprep.subr.bf16.mxu0 0
      %809 = vmatpush1.bf16.msra.mxu0 0
      %810 = vmatprep.subr.bf16.mxu0 0
      %811 = vmatpush1.bf16.msra.mxu0 0
      %812 = vmatprep.subr.bf16.mxu0 0
      %813 = vmatpush1.bf16.msra.mxu0 0
      %814 = vmatprep.subr.bf16.mxu0 0
      %815 = vmatpush1.bf16.msra.mxu0 0
      %816 = vmatprep.subr.bf16.mxu0 0
      %817 = vmatpush1.bf16.msra.mxu0 0
      %818 = vmatprep.subr.bf16.mxu0 0
      %819 = vmatpush1.bf16.msra.mxu0 0
      %820 = vmatprep.subr.bf16.mxu0 0
      %821 = vmatpush1.bf16.msra.mxu0 0
      %822 = vmatprep.mubr.bf16.mxu0 0
      %823 = vmatmul.mubr.bf16.gmra.mrb[0].mxu0 %v587
      %v824 = vpop.f32.mrb[0].mxu0
      %v825 = vadd.f32 0.0, %v824
      %v826 = vpop.f32.mrb[0].mxu0
      %v827 = vpop.f32.mrb[0].mxu0
      %v828 = vadd.f32 0.0, %v827
      %v829 = vpop.f32.mrb[0].mxu0
      %830 = vmatprep.mubr.bf16.mxu0 0
      %831 = vmatmul.mubr.bf16.gmra.mrb[0].mxu0 %v595
      %v832 = vpop.f32.mrb[0].mxu0
      %v833 = vadd.f32 0.0, %v832
      %v834 = vpop.f32.mrb[0].mxu0
      %v835 = vpop.f32.mrb[0].mxu0
      %v836 = vadd.f32 0.0, %v835
      %v837 = vpop.f32.mrb[0].mxu0
      %838 = vmatprep.mubr.bf16.mxu0 0
      %839 = vmatmul.mubr.bf16.gmra.mrb[0].mxu0 %v603
      %v840 = vpop.f32.mrb[0].mxu0
      %v841 = vadd.f32 0.0, %v840
      %v842 = vpop.f32.mrb[0].mxu0
      %v843 = vpop.f32.mrb[0].mxu0
      %v844 = vadd.f32 0.0, %v843
      %v845 = vpop.f32.mrb[0].mxu0
      %846 = vmatprep.mubr.bf16.mxu0 0
      %847 = vmatmul.mubr.bf16.gmra.mrb[0].mxu0 %v611
      %v848 = vpop.f32.mrb[0].mxu0
      %v849 = vadd.f32 0.0, %v848
      %v850 = vpop.f32.mrb[0].mxu0
      %v851 = vpop.f32.mrb[0].mxu0
      %v852 = vadd.f32 0.0, %v851
      %v853 = vpop.f32.mrb[0].mxu0
      %854 = vmatprep.mubr.bf16.mxu0 0
      %855 = vmatmul.mubr.bf16.gmra.mrb[0].mxu0 %v619
      %v856 = vpop.f32.mrb[0].mxu0
      %v857 = vadd.f32 0.0, %v856
      %v858 = vpop.f32.mrb[0].mxu0
      %v859 = vpop.f32.mrb[0].mxu0
      %v860 = vadd.f32 0.0, %v859
      %v861 = vpop.f32.mrb[0].mxu0
      %862 = vmatprep.mubr.bf16.mxu0 0
      %863 = vmatmul.mubr.bf16.gmra.mrb[0].mxu0 %v627
      %v864 = vpop.f32.mrb[0].mxu0
      %v865 = vadd.f32 0.0, %v864
      %v866 = vpop.f32.mrb[0].mxu0
      %v867 = vpop.f32.mrb[0].mxu0
      %v868 = vadd.f32 0.0, %v867
      %v869 = vpop.f32.mrb[0].mxu0
      %870 = vmatprep.mubr.bf16.mxu0 0
      %871 = vmatmul.mubr.bf16.gmra.mrb[0].mxu0 %v635
      %v872 = vpop.f32.mrb[0].mxu0
      %v873 = vadd.f32 0.0, %v872
      %v874 = vpop.f32.mrb[0].mxu0
      %v875 = vpop.f32.mrb[0].mxu0
      %v876 = vadd.f32 0.0, %v875
      %v877 = vpop.f32.mrb[0].mxu0
      %878 = vmatprep.mubr.bf16.mxu0 0
      %879 = vmatmul.mubr.bf16.gmra.mrb[0].mxu0 %v643
      %v880 = vpop.f32.mrb[0].mxu0
      %v881 = vadd.f32 0.0, %v880
      %v882 = vpop.f32.mrb[0].mxu0
      %v883 = vpop.f32.mrb[0].mxu0
      %v884 = vadd.f32 0.0, %v883
      %v885 = vpop.f32.mrb[0].mxu0
      %886 = vmatprep.mubr.bf16.mxu0 0
      %887 = vmatmul.mubr.bf16.gmra.mrb[0].mxu0 %v651
      %v888 = vpop.f32.mrb[0].mxu0
      %v889 = vadd.f32 0.0, %v888
      %v890 = vpop.f32.mrb[0].mxu0
      %v891 = vpop.f32.mrb[0].mxu0
      %v892 = vadd.f32 0.0, %v891
      %v893 = vpop.f32.mrb[0].mxu0
      %894 = vmatprep.mubr.bf16.mxu0 0
      %895 = vmatmul.mubr.bf16.gmra.mrb[0].mxu0 %v659
      %v896 = vpop.f32.mrb[0].mxu0
      %v897 = vadd.f32 0.0, %v896
      %v898 = vpop.f32.mrb[0].mxu0
      %v899 = vpop.f32.mrb[0].mxu0
      %v900 = vadd.f32 0.0, %v899
      %v901 = vpop.f32.mrb[0].mxu0
      %902 = vmatprep.mubr.bf16.mxu0 0
      %903 = vmatmul.mubr.bf16.gmra.mrb[0].mxu0 %v667
      %v904 = vpop.f32.mrb[0].mxu0
      %v905 = vadd.f32 0.0, %v904
      %v906 = vpop.f32.mrb[0].mxu0
      %v907 = vpop.f32.mrb[0].mxu0
      %v908 = vadd.f32 0.0, %v907
      %v909 = vpop.f32.mrb[0].mxu0
      %910 = vmatprep.mubr.bf16.mxu0 0
      %911 = vmatmul.mubr.bf16.gmra.mrb[0].mxu0 %v675
      %v912 = vpop.f32.mrb[0].mxu0
      %v913 = vadd.f32 0.0, %v912
      %v914 = vpop.f32.mrb[0].mxu0
      %v915 = vpop.f32.mrb[0].mxu0
      %v916 = vadd.f32 0.0, %v915
      %v917 = vpop.f32.mrb[0].mxu0
      %918 = vmatprep.mubr.bf16.mxu0 0
      %919 = vmatmul.mubr.bf16.gmra.mrb[0].mxu0 %v683
      %v920 = vpop.f32.mrb[0].mxu0
      %v921 = vadd.f32 0.0, %v920
      %v922 = vpop.f32.mrb[0].mxu0
      %v923 = vpop.f32.mrb[0].mxu0
      %v924 = vadd.f32 0.0, %v923
      %v925 = vpop.f32.mrb[0].mxu0
      %926 = vmatprep.mubr.bf16.mxu0 0
      %927 = vmatmul.mubr.bf16.gmra.mrb[0].mxu0 %v691
      %v928 = vpop.f32.mrb[0].mxu0
      %v929 = vadd.f32 0.0, %v928
      %v930 = vpop.f32.mrb[0].mxu0
      %v931 = vpop.f32.mrb[0].mxu0
      %v932 = vadd.f32 0.0, %v931
      %v933 = vpop.f32.mrb[0].mxu0
      %934 = vmatprep.mubr.bf16.mxu0 0
      %935 = vmatmul.mubr.bf16.gmra.mrb[0].mxu0 %v699
      %v936 = vpop.f32.mrb[0].mxu0
      %v937 = vadd.f32 0.0, %v936
      %v938 = vpop.f32.mrb[0].mxu0
      %v939 = vpop.f32.mrb[0].mxu0
      %v940 = vadd.f32 0.0, %v939
      %v941 = vpop.f32.mrb[0].mxu0
      %942 = vmatprep.mubr.bf16.mxu0 0
      %943 = vmatmul.mubr.bf16.gmra.mrb[0].mxu0 %v707
      %v944 = vpop.f32.mrb[0].mxu0
      %v945 = vadd.f32 0.0, %v944
      %v946 = vpop.f32.mrb[0].mxu0
      %v947 = vpop.f32.mrb[0].mxu0
      %v948 = vadd.f32 0.0, %v947
      %v949 = vpop.f32.mrb[0].mxu0
      %950 = vmatprep.mubr.bf16.mxu0 0
      %951 = vmatmul.mubr.bf16.gmra.mrb[0].mxu0 %v715
      %v952 = vpop.f32.mrb[0].mxu0
      %v953 = vadd.f32 0.0, %v952
      %v954 = vpop.f32.mrb[0].mxu0
      %v955 = vpop.f32.mrb[0].mxu0
      %v956 = vadd.f32 0.0, %v955
      %v957 = vpop.f32.mrb[0].mxu0
      %958 = vmatprep.mubr.bf16.mxu0 0
      %959 = vmatmul.mubr.bf16.gmra.mrb[0].mxu0 %v723
      %v960 = vpop.f32.mrb[0].mxu0
      %v961 = vadd.f32 0.0, %v960
      %v962 = vpop.f32.mrb[0].mxu0
      %v963 = vpop.f32.mrb[0].mxu0
      %v964 = vadd.f32 0.0, %v963
      %v965 = vpop.f32.mrb[0].mxu0
      %966 = vdwg.mxu0
      %v1001 = vunpack.c.l.b16 %v450
      %v1002 = vunpack.c.l.b16 %v451
      %v1003 = vunpack.c.l.b16 %v452
      %v1004 = vunpack.c.l.b16 %v453
      %v1005 = vunpack.c.l.b16 %v454
      %v1006 = vunpack.c.l.b16 %v455
      %v1007 = vunpack.c.l.b16 %v456
      %v1008 = vunpack.c.l.b16 %v457
      %v1009 = vunpack.c.l.b16 %v458
      %v1010 = vunpack.c.l.b16 %v459
      %v1011 = vunpack.c.l.b16 %v460
      %v1012 = vunpack.c.l.b16 %v461
      %v1013 = vunpack.c.l.b16 %v462
      %v1014 = vunpack.c.l.b16 %v463
      %v1015 = vunpack.c.l.b16 %v464
      %v1016 = vunpack.c.l.b16 %v465
      %v1017 = vpack.c.b16 %v1002, %v1001
      %v1018 = vpack.c.b16 %v1004, %v1003
      %v1019 = vpack.c.b16 %v1006, %v1005
      %v1020 = vpack.c.b16 %v1008, %v1007
      %v1021 = vpack.c.b16 %v1010, %v1009
      %v1022 = vpack.c.b16 %v1012, %v1011
      %v1023 = vpack.c.b16 %v1014, %v1013
      %v1024 = vpack.c.b16 %v1016, %v1015
      %1033 = vmatprep.subr.bf16.mxu0 0
      %1034 = vmatpush1.bf16.msra.mxu0 %v1017
      %1035 = vmatprep.subr.bf16.mxu0 0
      %1036 = vmatpush1.bf16.msra.mxu0 %v1018
      %1037 = vmatprep.subr.bf16.mxu0 0
      %1038 = vmatpush1.bf16.msra.mxu0 %v1019
      %1039 = vmatprep.subr.bf16.mxu0 0
      %1040 = vmatpush1.bf16.msra.mxu0 %v1020
      %1041 = vmatprep.subr.bf16.mxu0 0
      %1042 = vmatpush1.bf16.msra.mxu0 %v1021
      %1043 = vmatprep.subr.bf16.mxu0 0
      %1044 = vmatpush1.bf16.msra.mxu0 %v1022
      %1045 = vmatprep.subr.bf16.mxu0 0
      %1046 = vmatpush1.bf16.msra.mxu0 %v1023
      %1047 = vmatprep.subr.bf16.mxu0 0
      %1048 = vmatpush1.bf16.msra.mxu0 %v1024
      %1049 = vmatprep.subr.bf16.mxu0 0
      %1050 = vmatpush1.bf16.msra.mxu0 0
      %1051 = vmatprep.subr.bf16.mxu0 0
      %1052 = vmatpush1.bf16.msra.mxu0 0
      %1053 = vmatprep.subr.bf16.mxu0 0
      %1054 = vmatpush1.bf16.msra.mxu0 0
      %1055 = vmatprep.subr.bf16.mxu0 0
      %1056 = vmatpush1.bf16.msra.mxu0 0
      %1057 = vmatprep.subr.bf16.mxu0 0
      %1058 = vmatpush1.bf16.msra.mxu0 0
      %1059 = vmatprep.subr.bf16.mxu0 0
      %1060 = vmatpush1.bf16.msra.mxu0 0
      %1061 = vmatprep.subr.bf16.mxu0 0
      %1062 = vmatpush1.bf16.msra.mxu0 0
      %1063 = vmatprep.subr.bf16.mxu0 0
      %1064 = vmatpush1.bf16.msra.mxu0 0
      %1065 = vmatprep.mubr.bf16.mxu0 0
      %1066 = vmatmul.mubr.bf16.gmra.mrb[0].mxu0 %v556
      %v1067 = vpop.f32.mrb[0].mxu0
      %v1068 = vadd.f32 %v825, %v1067
      %v1069 = vpop.f32.mrb[0].mxu0
      %v1070 = vpop.f32.mrb[0].mxu0
      %v1071 = vadd.f32 %v828, %v1070
      %v1072 = vpop.f32.mrb[0].mxu0
      %1073 = vmatprep.mubr.bf16.mxu0 0
      %1074 = vmatmul.mubr.bf16.gmra.mrb[0].mxu0 %v557
      %v1075 = vpop.f32.mrb[0].mxu0
      %v1076 = vadd.f32 %v833, %v1075
      %v1077 = vpop.f32.mrb[0].mxu0
      %v1078 = vpop.f32.mrb[0].mxu0
      %v1079 = vadd.f32 %v836, %v1078
      %v1080 = vpop.f32.mrb[0].mxu0
      %1081 = vmatprep.mubr.bf16.mxu0 0
      %1082 = vmatmul.mubr.bf16.gmra.mrb[0].mxu0 %v558
      %v1083 = vpop.f32.mrb[0].mxu0
      %v1084 = vadd.f32 %v841, %v1083
      %v1085 = vpop.f32.mrb[0].mxu0
      %v1086 = vpop.f32.mrb[0].mxu0
      %v1087 = vadd.f32 %v844, %v1086
      %v1088 = vpop.f32.mrb[0].mxu0
      %1089 = vmatprep.mubr.bf16.mxu0 0
      %1090 = vmatmul.mubr.bf16.gmra.mrb[0].mxu0 %v559
      %v1091 = vpop.f32.mrb[0].mxu0
      %v1092 = vadd.f32 %v849, %v1091
      %v1093 = vpop.f32.mrb[0].mxu0
      %v1094 = vpop.f32.mrb[0].mxu0
      %v1095 = vadd.f32 %v852, %v1094
      %v1096 = vpop.f32.mrb[0].mxu0
      %1097 = vmatprep.mubr.bf16.mxu0 0
      %1098 = vmatmul.mubr.bf16.gmra.mrb[0].mxu0 %v560
      %v1099 = vpop.f32.mrb[0].mxu0
      %v1100 = vadd.f32 %v857, %v1099
      %v1101 = vpop.f32.mrb[0].mxu0
      %v1102 = vpop.f32.mrb[0].mxu0
      %v1103 = vadd.f32 %v860, %v1102
      %v1104 = vpop.f32.mrb[0].mxu0
      %1105 = vmatprep.mubr.bf16.mxu0 0
      %1106 = vmatmul.mubr.bf16.gmra.mrb[0].mxu0 %v561
      %v1107 = vpop.f32.mrb[0].mxu0
      %v1108 = vadd.f32 %v865, %v1107
      %v1109 = vpop.f32.mrb[0].mxu0
      %v1110 = vpop.f32.mrb[0].mxu0
      %v1111 = vadd.f32 %v868, %v1110
      %v1112 = vpop.f32.mrb[0].mxu0
      %1113 = vmatprep.mubr.bf16.mxu0 0
      %1114 = vmatmul.mubr.bf16.gmra.mrb[0].mxu0 %v562
      %v1115 = vpop.f32.mrb[0].mxu0
      %v1116 = vadd.f32 %v873, %v1115
      %v1117 = vpop.f32.mrb[0].mxu0
      %v1118 = vpop.f32.mrb[0].mxu0
      %v1119 = vadd.f32 %v876, %v1118
      %v1120 = vpop.f32.mrb[0].mxu0
      %1121 = vmatprep.mubr.bf16.mxu0 0
      %1122 = vmatmul.mubr.bf16.gmra.mrb[0].mxu0 %v563
      %v1123 = vpop.f32.mrb[0].mxu0
      %v1124 = vadd.f32 %v881, %v1123
      %v1125 = vpop.f32.mrb[0].mxu0
      %v1126 = vpop.f32.mrb[0].mxu0
      %v1127 = vadd.f32 %v884, %v1126
      %v1128 = vpop.f32.mrb[0].mxu0
      %1129 = vmatprep.mubr.bf16.mxu0 0
      %1130 = vmatmul.mubr.bf16.gmra.mrb[0].mxu0 %v564
      %v1131 = vpop.f32.mrb[0].mxu0
      %v1132 = vadd.f32 %v889, %v1131
      %v1133 = vpop.f32.mrb[0].mxu0
      %v1134 = vpop.f32.mrb[0].mxu0
      %v1135 = vadd.f32 %v892, %v1134
      %v1136 = vpop.f32.mrb[0].mxu0
      %1137 = vmatprep.mubr.bf16.mxu0 0
      %1138 = vmatmul.mubr.bf16.gmra.mrb[0].mxu0 %v565
      %v1139 = vpop.f32.mrb[0].mxu0
      %v1140 = vadd.f32 %v897, %v1139
      %v1141 = vpop.f32.mrb[0].mxu0
      %v1142 = vpop.f32.mrb[0].mxu0
      %v1143 = vadd.f32 %v900, %v1142
      %v1144 = vpop.f32.mrb[0].mxu0
      %1145 = vmatprep.mubr.bf16.mxu0 0
      %1146 = vmatmul.mubr.bf16.gmra.mrb[0].mxu0 %v566
      %v1147 = vpop.f32.mrb[0].mxu0
      %v1148 = vadd.f32 %v905, %v1147
      %v1149 = vpop.f32.mrb[0].mxu0
      %v1150 = vpop.f32.mrb[0].mxu0
      %v1151 = vadd.f32 %v908, %v1150
      %v1152 = vpop.f32.mrb[0].mxu0
      %1153 = vmatprep.mubr.bf16.mxu0 0
      %1154 = vmatmul.mubr.bf16.gmra.mrb[0].mxu0 %v567
      %v1155 = vpop.f32.mrb[0].mxu0
      %v1156 = vadd.f32 %v913, %v1155
      %v1157 = vpop.f32.mrb[0].mxu0
      %v1158 = vpop.f32.mrb[0].mxu0
      %v1159 = vadd.f32 %v916, %v1158
      %v1160 = vpop.f32.mrb[0].mxu0
      %1161 = vmatprep.mubr.bf16.mxu0 0
      %1162 = vmatmul.mubr.bf16.gmra.mrb[0].mxu0 %v568
      %v1163 = vpop.f32.mrb[0].mxu0
      %v1164 = vadd.f32 %v921, %v1163
      %v1165 = vpop.f32.mrb[0].mxu0
      %v1166 = vpop.f32.mrb[0].mxu0
      %v1167 = vadd.f32 %v924, %v1166
      %v1168 = vpop.f32.mrb[0].mxu0
      %1169 = vmatprep.mubr.bf16.mxu0 0
      %1170 = vmatmul.mubr.bf16.gmra.mrb[0].mxu0 %v569
      %v1171 = vpop.f32.mrb[0].mxu0
      %v1172 = vadd.f32 %v929, %v1171
      %v1173 = vpop.f32.mrb[0].mxu0
      %v1174 = vpop.f32.mrb[0].mxu0
      %v1175 = vadd.f32 %v932, %v1174
      %v1176 = vpop.f32.mrb[0].mxu0
      %1177 = vmatprep.mubr.bf16.mxu0 0
      %1178 = vmatmul.mubr.bf16.gmra.mrb[0].mxu0 %v570
      %v1179 = vpop.f32.mrb[0].mxu0
      %v1180 = vadd.f32 %v937, %v1179
      %v1181 = vpop.f32.mrb[0].mxu0
      %v1182 = vpop.f32.mrb[0].mxu0
      %v1183 = vadd.f32 %v940, %v1182
      %v1184 = vpop.f32.mrb[0].mxu0
      %1185 = vmatprep.mubr.bf16.mxu0 0
      %1186 = vmatmul.mubr.bf16.gmra.mrb[0].mxu0 %v571
      %v1187 = vpop.f32.mrb[0].mxu0
      %v1188 = vadd.f32 %v945, %v1187
      %v1189 = vpop.f32.mrb[0].mxu0
      %v1190 = vpop.f32.mrb[0].mxu0
      %v1191 = vadd.f32 %v948, %v1190
      %v1192 = vpop.f32.mrb[0].mxu0
      %1193 = vmatprep.mubr.bf16.mxu0 0
      %1194 = vmatmul.mubr.bf16.gmra.mrb[0].mxu0 %v572
      %v1195 = vpop.f32.mrb[0].mxu0
      %v1196 = vadd.f32 %v953, %v1195
      %v1197 = vpop.f32.mrb[0].mxu0
      %v1198 = vpop.f32.mrb[0].mxu0
      %v1199 = vadd.f32 %v956, %v1198
      %v1200 = vpop.f32.mrb[0].mxu0
      %1201 = vmatprep.mubr.bf16.mxu0 0
      %1202 = vmatmul.mubr.bf16.gmra.mrb[0].mxu0 %v573
      %v1203 = vpop.f32.mrb[0].mxu0
      %v1204 = vadd.f32 %v961, %v1203
      %v1205 = vpop.f32.mrb[0].mxu0
      %v1206 = vpop.f32.mrb[0].mxu0
      %v1207 = vadd.f32 %v964, %v1206
      %v1208 = vpop.f32.mrb[0].mxu0
      %1209 = vdwg.mxu0
      %v1210 = vld [vmem:[%s6] sm:$0x1]
      %v1211 = vlaneseq
      %v1212 = vshrl.u32 %v1211, 7
      %v1213 = vsub.s32 0, %v1212
      %v1214 = vrot.slane %v1210, %v1213
      %v1215 = vadd.f32 %v1068, %v1214
      %v1216 = vadd.f32 %v1071, %v1214
      %v1217 = vadd.f32 %v1076, %v1214
      %v1218 = vadd.f32 %v1079, %v1214
      %v1219 = vadd.f32 %v1084, %v1214
      %v1220 = vadd.f32 %v1087, %v1214
      %v1221 = vadd.f32 %v1092, %v1214
      %v1222 = vadd.f32 %v1095, %v1214
      %v1223 = vadd.f32 %v1100, %v1214
      %v1224 = vadd.f32 %v1103, %v1214
      %v1225 = vadd.f32 %v1108, %v1214
      %v1226 = vadd.f32 %v1111, %v1214
      %v1227 = vadd.f32 %v1116, %v1214
      %v1228 = vadd.f32 %v1119, %v1214
      %v1229 = vadd.f32 %v1124, %v1214
      %v1230 = vadd.f32 %v1127, %v1214
      %v1231 = vadd.f32 %v1132, %v1214
      %v1232 = vadd.f32 %v1135, %v1214
      %v1233 = vadd.f32 %v1140, %v1214
      %v1234 = vadd.f32 %v1143, %v1214
      %v1235 = vadd.f32 %v1148, %v1214
      %v1236 = vadd.f32 %v1151, %v1214
      %v1237 = vadd.f32 %v1156, %v1214
      %v1238 = vadd.f32 %v1159, %v1214
      %v1239 = vadd.f32 %v1164, %v1214
      %v1240 = vadd.f32 %v1167, %v1214
      %v1241 = vadd.f32 %v1172, %v1214
      %v1242 = vadd.f32 %v1175, %v1214
      %v1243 = vadd.f32 %v1180, %v1214
      %v1244 = vadd.f32 %v1183, %v1214
      %v1245 = vadd.f32 %v1188, %v1214
      %v1246 = vadd.f32 %v1191, %v1214
      %v1247 = vadd.f32 %v1196, %v1214
      %v1248 = vadd.f32 %v1199, %v1214
      %v1249 = vadd.f32 %v1204, %v1214
      %v1250 = vadd.f32 %v1207, %v1214
      %v1251 = vmax.f32 %v1215, 0.0
      %v1252 = vmax.f32 %v1216, 0.0
      %v1253 = vmax.f32 %v1217, 0.0
      %v1254 = vmax.f32 %v1218, 0.0
      %v1255 = vmax.f32 %v1219, 0.0
      %v1256 = vmax.f32 %v1220, 0.0
      %v1257 = vmax.f32 %v1221, 0.0
      %v1258 = vmax.f32 %v1222, 0.0
      %v1259 = vmax.f32 %v1223, 0.0
      %v1260 = vmax.f32 %v1224, 0.0
      %v1261 = vmax.f32 %v1225, 0.0
      %v1262 = vmax.f32 %v1226, 0.0
      %v1263 = vmax.f32 %v1227, 0.0
      %v1264 = vmax.f32 %v1228, 0.0
      %v1265 = vmax.f32 %v1229, 0.0
      %v1266 = vmax.f32 %v1230, 0.0
      %v1267 = vmax.f32 %v1231, 0.0
      %v1268 = vmax.f32 %v1232, 0.0
      %v1269 = vmax.f32 %v1233, 0.0
      %v1270 = vmax.f32 %v1234, 0.0
      %v1271 = vmax.f32 %v1235, 0.0
      %v1272 = vmax.f32 %v1236, 0.0
      %v1273 = vmax.f32 %v1237, 0.0
      %v1274 = vmax.f32 %v1238, 0.0
      %v1275 = vmax.f32 %v1239, 0.0
      %v1276 = vmax.f32 %v1240, 0.0
      %v1277 = vmax.f32 %v1241, 0.0
      %v1278 = vmax.f32 %v1242, 0.0
      %v1279 = vmax.f32 %v1243, 0.0
      %v1280 = vmax.f32 %v1244, 0.0
      %v1281 = vmax.f32 %v1245, 0.0
      %v1282 = vmax.f32 %v1246, 0.0
      %v1283 = vmax.f32 %v1247, 0.0
      %v1284 = vmax.f32 %v1248, 0.0
      %v1285 = vmax.f32 %v1249, 0.0
      %v1286 = vmax.f32 %v1250, 0.0
      %v1287 = vrot.slane %v1251, 4
      %v1288 = vmax.f32 %v1251, %v1287
      %v1289 = vrot.slane %v1288, 2
      %v1290 = vmax.f32 %v1288, %v1289
      %v1291 = vrot.slane %v1290, 1
      %v1292 = vmax.f32 %v1290, %v1291
      %v1293 = vrot.slane %v1252, 4
      %v1294 = vmax.f32 %v1252, %v1293
      %v1295 = vrot.slane %v1294, 2
      %v1296 = vmax.f32 %v1294, %v1295
      %v1297 = vrot.slane %v1296, 1
      %v1298 = vmax.f32 %v1296, %v1297
      %v1299 = vrot.slane %v1253, 4
      %v1300 = vmax.f32 %v1253, %v1299
      %v1301 = vrot.slane %v1300, 2
      %v1302 = vmax.f32 %v1300, %v1301
      %v1303 = vrot.slane %v1302, 1
      %v1304 = vmax.f32 %v1302, %v1303
      %v1305 = vrot.slane %v1254, 4
      %v1306 = vmax.f32 %v1254, %v1305
      %v1307 = vrot.slane %v1306, 2
      %v1308 = vmax.f32 %v1306, %v1307
      %v1309 = vrot.slane %v1308, 1
      %v1310 = vmax.f32 %v1308, %v1309
      %v1311 = vrot.slane %v1255, 4
      %v1312 = vmax.f32 %v1255, %v1311
      %v1313 = vrot.slane %v1312, 2
      %v1314 = vmax.f32 %v1312, %v1313
      %v1315 = vrot.slane %v1314, 1
      %v1316 = vmax.f32 %v1314, %v1315
      %v1317 = vrot.slane %v1256, 4
      %v1318 = vmax.f32 %v1256, %v1317
      %v1319 = vrot.slane %v1318, 2
      %v1320 = vmax.f32 %v1318, %v1319
      %v1321 = vrot.slane %v1320, 1
      %v1322 = vmax.f32 %v1320, %v1321
      %v1323 = vrot.slane %v1257, 4
      %v1324 = vmax.f32 %v1257, %v1323
      %v1325 = vrot.slane %v1324, 2
      %v1326 = vmax.f32 %v1324, %v1325
      %v1327 = vrot.slane %v1326, 1
      %v1328 = vmax.f32 %v1326, %v1327
      %v1329 = vrot.slane %v1258, 4
      %v1330 = vmax.f32 %v1258, %v1329
      %v1331 = vrot.slane %v1330, 2
      %v1332 = vmax.f32 %v1330, %v1331
      %v1333 = vrot.slane %v1332, 1
      %v1334 = vmax.f32 %v1332, %v1333
      %v1335 = vrot.slane %v1259, 4
      %v1336 = vmax.f32 %v1259, %v1335
      %v1337 = vrot.slane %v1336, 2
      %v1338 = vmax.f32 %v1336, %v1337
      %v1339 = vrot.slane %v1338, 1
      %v1340 = vmax.f32 %v1338, %v1339
      %v1341 = vrot.slane %v1260, 4
      %v1342 = vmax.f32 %v1260, %v1341
      %v1343 = vrot.slane %v1342, 2
      %v1344 = vmax.f32 %v1342, %v1343
      %v1345 = vrot.slane %v1344, 1
      %v1346 = vmax.f32 %v1344, %v1345
      %v1347 = vrot.slane %v1261, 4
      %v1348 = vmax.f32 %v1261, %v1347
      %v1349 = vrot.slane %v1348, 2
      %v1350 = vmax.f32 %v1348, %v1349
      %v1351 = vrot.slane %v1350, 1
      %v1352 = vmax.f32 %v1350, %v1351
      %v1353 = vrot.slane %v1262, 4
      %v1354 = vmax.f32 %v1262, %v1353
      %v1355 = vrot.slane %v1354, 2
      %v1356 = vmax.f32 %v1354, %v1355
      %v1357 = vrot.slane %v1356, 1
      %v1358 = vmax.f32 %v1356, %v1357
      %v1359 = vrot.slane %v1263, 4
      %v1360 = vmax.f32 %v1263, %v1359
      %v1361 = vrot.slane %v1360, 2
      %v1362 = vmax.f32 %v1360, %v1361
      %v1363 = vrot.slane %v1362, 1
      %v1364 = vmax.f32 %v1362, %v1363
      %v1365 = vrot.slane %v1264, 4
      %v1366 = vmax.f32 %v1264, %v1365
      %v1367 = vrot.slane %v1366, 2
      %v1368 = vmax.f32 %v1366, %v1367
      %v1369 = vrot.slane %v1368, 1
      %v1370 = vmax.f32 %v1368, %v1369
      %v1371 = vrot.slane %v1265, 4
      %v1372 = vmax.f32 %v1265, %v1371
      %v1373 = vrot.slane %v1372, 2
      %v1374 = vmax.f32 %v1372, %v1373
      %v1375 = vrot.slane %v1374, 1
      %v1376 = vmax.f32 %v1374, %v1375
      %v1377 = vrot.slane %v1266, 4
      %v1378 = vmax.f32 %v1266, %v1377
      %v1379 = vrot.slane %v1378, 2
      %v1380 = vmax.f32 %v1378, %v1379
      %v1381 = vrot.slane %v1380, 1
      %v1382 = vmax.f32 %v1380, %v1381
      %v1383 = vrot.slane %v1267, 4
      %v1384 = vmax.f32 %v1267, %v1383
      %v1385 = vrot.slane %v1384, 2
      %v1386 = vmax.f32 %v1384, %v1385
      %v1387 = vrot.slane %v1386, 1
      %v1388 = vmax.f32 %v1386, %v1387
      %v1389 = vrot.slane %v1268, 4
      %v1390 = vmax.f32 %v1268, %v1389
      %v1391 = vrot.slane %v1390, 2
      %v1392 = vmax.f32 %v1390, %v1391
      %v1393 = vrot.slane %v1392, 1
      %v1394 = vmax.f32 %v1392, %v1393
      %v1395 = vrot.slane %v1269, 4
      %v1396 = vmax.f32 %v1269, %v1395
      %v1397 = vrot.slane %v1396, 2
      %v1398 = vmax.f32 %v1396, %v1397
      %v1399 = vrot.slane %v1398, 1
      %v1400 = vmax.f32 %v1398, %v1399
      %v1401 = vrot.slane %v1270, 4
      %v1402 = vmax.f32 %v1270, %v1401
      %v1403 = vrot.slane %v1402, 2
      %v1404 = vmax.f32 %v1402, %v1403
      %v1405 = vrot.slane %v1404, 1
      %v1406 = vmax.f32 %v1404, %v1405
      %v1407 = vrot.slane %v1271, 4
      %v1408 = vmax.f32 %v1271, %v1407
      %v1409 = vrot.slane %v1408, 2
      %v1410 = vmax.f32 %v1408, %v1409
      %v1411 = vrot.slane %v1410, 1
      %v1412 = vmax.f32 %v1410, %v1411
      %v1413 = vrot.slane %v1272, 4
      %v1414 = vmax.f32 %v1272, %v1413
      %v1415 = vrot.slane %v1414, 2
      %v1416 = vmax.f32 %v1414, %v1415
      %v1417 = vrot.slane %v1416, 1
      %v1418 = vmax.f32 %v1416, %v1417
      %v1419 = vrot.slane %v1273, 4
      %v1420 = vmax.f32 %v1273, %v1419
      %v1421 = vrot.slane %v1420, 2
      %v1422 = vmax.f32 %v1420, %v1421
      %v1423 = vrot.slane %v1422, 1
      %v1424 = vmax.f32 %v1422, %v1423
      %v1425 = vrot.slane %v1274, 4
      %v1426 = vmax.f32 %v1274, %v1425
      %v1427 = vrot.slane %v1426, 2
      %v1428 = vmax.f32 %v1426, %v1427
      %v1429 = vrot.slane %v1428, 1
      %v1430 = vmax.f32 %v1428, %v1429
      %v1431 = vrot.slane %v1275, 4
      %v1432 = vmax.f32 %v1275, %v1431
      %v1433 = vrot.slane %v1432, 2
      %v1434 = vmax.f32 %v1432, %v1433
      %v1435 = vrot.slane %v1434, 1
      %v1436 = vmax.f32 %v1434, %v1435
      %v1437 = vrot.slane %v1276, 4
      %v1438 = vmax.f32 %v1276, %v1437
      %v1439 = vrot.slane %v1438, 2
      %v1440 = vmax.f32 %v1438, %v1439
      %v1441 = vrot.slane %v1440, 1
      %v1442 = vmax.f32 %v1440, %v1441
      %v1443 = vrot.slane %v1277, 4
      %v1444 = vmax.f32 %v1277, %v1443
      %v1445 = vrot.slane %v1444, 2
      %v1446 = vmax.f32 %v1444, %v1445
      %v1447 = vrot.slane %v1446, 1
      %v1448 = vmax.f32 %v1446, %v1447
      %v1449 = vrot.slane %v1278, 4
      %v1450 = vmax.f32 %v1278, %v1449
      %v1451 = vrot.slane %v1450, 2
      %v1452 = vmax.f32 %v1450, %v1451
      %v1453 = vrot.slane %v1452, 1
      %v1454 = vmax.f32 %v1452, %v1453
      %v1455 = vrot.slane %v1279, 4
      %v1456 = vmax.f32 %v1279, %v1455
      %v1457 = vrot.slane %v1456, 2
      %v1458 = vmax.f32 %v1456, %v1457
      %v1459 = vrot.slane %v1458, 1
      %v1460 = vmax.f32 %v1458, %v1459
      %v1461 = vrot.slane %v1280, 4
      %v1462 = vmax.f32 %v1280, %v1461
      %v1463 = vrot.slane %v1462, 2
      %v1464 = vmax.f32 %v1462, %v1463
      %v1465 = vrot.slane %v1464, 1
      %v1466 = vmax.f32 %v1464, %v1465
      %v1467 = vrot.slane %v1281, 4
      %v1468 = vmax.f32 %v1281, %v1467
      %v1469 = vrot.slane %v1468, 2
      %v1470 = vmax.f32 %v1468, %v1469
      %v1471 = vrot.slane %v1470, 1
      %v1472 = vmax.f32 %v1470, %v1471
      %v1473 = vrot.slane %v1282, 4
      %v1474 = vmax.f32 %v1282, %v1473
      %v1475 = vrot.slane %v1474, 2
      %v1476 = vmax.f32 %v1474, %v1475
      %v1477 = vrot.slane %v1476, 1
      %v1478 = vmax.f32 %v1476, %v1477
      %v1479 = vrot.slane %v1283, 4
      %v1480 = vmax.f32 %v1283, %v1479
      %v1481 = vrot.slane %v1480, 2
      %v1482 = vmax.f32 %v1480, %v1481
      %v1483 = vrot.slane %v1482, 1
      %v1484 = vmax.f32 %v1482, %v1483
      %v1485 = vrot.slane %v1284, 4
      %v1486 = vmax.f32 %v1284, %v1485
      %v1487 = vrot.slane %v1486, 2
      %v1488 = vmax.f32 %v1486, %v1487
      %v1489 = vrot.slane %v1488, 1
      %v1490 = vmax.f32 %v1488, %v1489
      %v1491 = vrot.slane %v1285, 4
      %v1492 = vmax.f32 %v1285, %v1491
      %v1493 = vrot.slane %v1492, 2
      %v1494 = vmax.f32 %v1492, %v1493
      %v1495 = vrot.slane %v1494, 1
      %v1496 = vmax.f32 %v1494, %v1495
      %v1497 = vrot.slane %v1286, 4
      %v1498 = vmax.f32 %v1286, %v1497
      %v1499 = vrot.slane %v1498, 2
      %v1500 = vmax.f32 %v1498, %v1499
      %v1501 = vrot.slane %v1500, 1
      %v1502 = vmax.f32 %v1500, %v1501
      %v1503 = vpack.c.bf16 %v1292, %v1292
      %v1504 = vpack.c.bf16 %v1298, %v1298
      %v1505 = vpack.c.bf16 %v1304, %v1304
      %v1506 = vpack.c.bf16 %v1310, %v1310
      %v1507 = vpack.c.bf16 %v1316, %v1316
      %v1508 = vpack.c.bf16 %v1322, %v1322
      %v1509 = vpack.c.bf16 %v1328, %v1328
      %v1510 = vpack.c.bf16 %v1334, %v1334
      %v1511 = vpack.c.bf16 %v1340, %v1340
      %v1512 = vpack.c.bf16 %v1346, %v1346
      %v1513 = vpack.c.bf16 %v1352, %v1352
      %v1514 = vpack.c.bf16 %v1358, %v1358
      %v1515 = vpack.c.bf16 %v1364, %v1364
      %v1516 = vpack.c.bf16 %v1370, %v1370
      %v1517 = vpack.c.bf16 %v1376, %v1376
      %v1518 = vpack.c.bf16 %v1382, %v1382
      %v1519 = vpack.c.bf16 %v1388, %v1388
      %v1520 = vpack.c.bf16 %v1394, %v1394
      %v1521 = vpack.c.bf16 %v1400, %v1400
      %v1522 = vpack.c.bf16 %v1406, %v1406
      %v1523 = vpack.c.bf16 %v1412, %v1412
      %v1524 = vpack.c.bf16 %v1418, %v1418
      %v1525 = vpack.c.bf16 %v1424, %v1424
      %v1526 = vpack.c.bf16 %v1430, %v1430
      %v1527 = vpack.c.bf16 %v1436, %v1436
      %v1528 = vpack.c.bf16 %v1442, %v1442
      %v1529 = vpack.c.bf16 %v1448, %v1448
      %v1530 = vpack.c.bf16 %v1454, %v1454
      %v1531 = vpack.c.bf16 %v1460, %v1460
      %v1532 = vpack.c.bf16 %v1466, %v1466
      %v1533 = vpack.c.bf16 %v1472, %v1472
      %v1534 = vpack.c.bf16 %v1478, %v1478
      %v1535 = vpack.c.bf16 %v1484, %v1484
      %v1536 = vpack.c.bf16 %v1490, %v1490
      %v1537 = vpack.c.bf16 %v1496, %v1496
      %v1538 = vpack.c.bf16 %v1502, %v1502
      %v1539 = vld [vmem:[%s3] sm:$0xf]
      %v1540 = vld [vmem:[%s3 + $0x4] sm:$0xf]
      %v1541 = vld [vmem:[%s3 + $0x8] sm:$0xf]
      %v1542 = vld [vmem:[%s3 + $0xc] sm:$0xf]
      %v1543 = vld [vmem:[%s3 + $0x10] sm:$0xf]
      %v1544 = vld [vmem:[%s3 + $0x14] sm:$0xf]
      %v1545 = vld [vmem:[%s3 + $0x18] sm:$0xf]
      %v1546 = vld [vmem:[%s3 + $0x1c] sm:$0xf]
      %v1547 = vld [vmem:[%s3 + $0x20] sm:$0xf]
      %v1548 = vld [vmem:[%s3 + $0x24] sm:$0xf]
      %v1549 = vld [vmem:[%s3 + $0x28] sm:$0xf]
      %v1550 = vld [vmem:[%s3 + $0x2c] sm:$0xf]
      %v1551 = vld [vmem:[%s3 + $0x30] sm:$0xf]
      %v1552 = vld [vmem:[%s3 + $0x34] sm:$0xf]
      %v1553 = vld [vmem:[%s3 + $0x38] sm:$0xf]
      %v1554 = vld [vmem:[%s3 + $0x3c] sm:$0xf]
      %s1555 = scalar_lea.vmem %s3, 64
      %v1556 = vld [vmem:[%s1555] sm:$0xf]
      %v1557 = vld [vmem:[%s1555 + $0x4] sm:$0xf]
      %v1558 = vld [vmem:[%s1555 + $0x8] sm:$0xf]
      %v1559 = vld [vmem:[%s1555 + $0xc] sm:$0xf]
      %v1560 = vld [vmem:[%s1555 + $0x10] sm:$0xf]
      %v1561 = vld [vmem:[%s1555 + $0x14] sm:$0xf]
      %v1562 = vld [vmem:[%s1555 + $0x18] sm:$0xf]
      %v1563 = vld [vmem:[%s1555 + $0x1c] sm:$0xf]
      %v1564 = vld [vmem:[%s1555 + $0x20] sm:$0xf]
      %v1565 = vld [vmem:[%s1555 + $0x24] sm:$0xf]
      %v1566 = vld [vmem:[%s1555 + $0x28] sm:$0xf]
      %v1567 = vld [vmem:[%s1555 + $0x2c] sm:$0xf]
      %v1568 = vld [vmem:[%s1555 + $0x30] sm:$0xf]
      %v1569 = vld [vmem:[%s1555 + $0x34] sm:$0xf]
      %v1570 = vld [vmem:[%s1555 + $0x38] sm:$0xf]
      %v1571 = vld [vmem:[%s1555 + $0x3c] sm:$0xf]
      %v1601 = vunpack.c.l.b16 %v1504
      %v1602 = vunpack.c.l.b16 %v1505
      %v1603 = vunpack.c.l.b16 %v1506
      %v1604 = vunpack.c.l.b16 %v1507
      %v1605 = vunpack.c.l.b16 %v1508
      %v1606 = vunpack.c.l.b16 %v1509
      %v1607 = vunpack.c.l.b16 %v1510
      %v1608 = vunpack.c.l.b16 %v1511
      %v1609 = vunpack.c.l.b16 %v1512
      %v1610 = vunpack.c.l.b16 %v1513
      %v1611 = vunpack.c.l.b16 %v1514
      %v1612 = vunpack.c.l.b16 %v1515
      %v1613 = vunpack.c.l.b16 %v1516
      %v1614 = vunpack.c.l.b16 %v1517
      %v1615 = vunpack.c.l.b16 %v1518
      %v1616 = vunpack.c.l.b16 %v1519
      %v1617 = vunpack.c.l.b16 %v1520
      %v1618 = vunpack.c.l.b16 %v1521
      %v1619 = vunpack.c.l.b16 %v1522
      %v1620 = vunpack.c.l.b16 %v1523
      %v1621 = vunpack.c.l.b16 %v1524
      %v1622 = vunpack.c.l.b16 %v1525
      %v1623 = vunpack.c.l.b16 %v1526
      %v1624 = vunpack.c.l.b16 %v1527
      %v1625 = vunpack.c.l.b16 %v1528
      %v1626 = vunpack.c.l.b16 %v1529
      %v1627 = vunpack.c.l.b16 %v1530
      %v1628 = vunpack.c.l.b16 %v1531
      %v1629 = vunpack.c.l.b16 %v1532
      %vm1630 = vcmask 1041409
      %v1631 = vsel %vm1630, %v1602, %v1601
      %vm1632 = vcmask 1042434
      %v1633 = vsel %vm1632, %v1603, %v1631
      %vm1634 = vcmask 1043459
      %v1635 = vsel %vm1634, %v1604, %v1633
      %vm1636 = vcmask 1044484
      %v1637 = vsel %vm1636, %v1605, %v1635
      %vm1638 = vcmask 1045509
      %v1639 = vsel %vm1638, %v1606, %v1637
      %vm1640 = vcmask 1046534
      %v1641 = vsel %vm1640, %v1607, %v1639
      %vm1642 = vcmask 1047559
      %v1643 = vsel %vm1642, %v1608, %v1641
      %v1644 = vsel %vm1630, %v1610, %v1609
      %v1645 = vsel %vm1632, %v1611, %v1644
      %v1646 = vsel %vm1634, %v1612, %v1645
      %v1647 = vsel %vm1636, %v1613, %v1646
      %v1648 = vsel %vm1638, %v1614, %v1647
      %v1649 = vsel %vm1640, %v1615, %v1648
      %v1650 = vsel %vm1642, %v1616, %v1649
      %v1651 = vsel %vm1630, %v1618, %v1617
      %v1652 = vsel %vm1632, %v1619, %v1651
      %v1653 = vsel %vm1634, %v1620, %v1652
      %v1654 = vsel %vm1636, %v1621, %v1653
      %v1655 = vsel %vm1638, %v1622, %v1654
      %v1656 = vsel %vm1640, %v1623, %v1655
      %v1657 = vsel %vm1642, %v1624, %v1656
      %v1658 = vsel %vm1630, %v1626, %v1625
      %v1659 = vsel %vm1632, %v1627, %v1658
      %v1660 = vsel %vm1634, %v1628, %v1659
      %v1661 = vsel %vm1636, %v1629, %v1660
      %v1662 = vpack.c.b16 %v1650, %v1643
      %v1663 = vpack.c.b16 %v1661, %v1657
      %v1682 = vunpack.c.l.b16 %v1556
      %v1683 = vunpack.c.l.b16 %v1557
      %v1684 = vunpack.c.l.b16 %v1558
      %v1685 = vunpack.c.l.b16 %v1559
      %v1686 = vunpack.c.l.b16 %v1560
      %v1687 = vunpack.c.l.b16 %v1561
      %v1688 = vunpack.c.l.b16 %v1562
      %v1689 = vunpack.c.l.b16 %v1563
      %v1690 = vunpack.c.l.b16 %v1564
      %v1691 = vunpack.c.l.b16 %v1565
      %v1692 = vunpack.c.l.b16 %v1566
      %v1693 = vunpack.c.l.b16 %v1567
      %v1694 = vunpack.c.l.b16 %v1568
      %v1695 = vunpack.c.l.b16 %v1569
      %v1696 = vunpack.c.l.b16 %v1570
      %v1697 = vunpack.c.l.b16 %v1571
      %v1698 = vpack.c.b16 %v1683, %v1682
      %v1699 = vpack.c.b16 %v1685, %v1684
      %v1700 = vpack.c.b16 %v1687, %v1686
      %v1701 = vpack.c.b16 %v1689, %v1688
      %v1702 = vpack.c.b16 %v1691, %v1690
      %v1703 = vpack.c.b16 %v1693, %v1692
      %v1704 = vpack.c.b16 %v1695, %v1694
      %v1705 = vpack.c.b16 %v1697, %v1696
      %1714 = vmatprep.subr.bf16.mxu0 0
      %1715 = vmatpush1.bf16.msra.mxu0 %v1698
      %1716 = vmatprep.subr.bf16.mxu0 0
      %1717 = vmatpush1.bf16.msra.mxu0 %v1699
      %1718 = vmatprep.subr.bf16.mxu0 0
      %1719 = vmatpush1.bf16.msra.mxu0 %v1700
      %1720 = vmatprep.subr.bf16.mxu0 0
      %1721 = vmatpush1.bf16.msra.mxu0 %v1701
      %1722 = vmatprep.subr.bf16.mxu0 0
      %1723 = vmatpush1.bf16.msra.mxu0 %v1702
      %1724 = vmatprep.subr.bf16.mxu0 0
      %1725 = vmatpush1.bf16.msra.mxu0 %v1703
      %1726 = vmatprep.subr.bf16.mxu0 0
      %1727 = vmatpush1.bf16.msra.mxu0 %v1704
      %1728 = vmatprep.subr.bf16.mxu0 0
      %1729 = vmatpush1.bf16.msra.mxu0 %v1705
      %1730 = vmatprep.subr.bf16.mxu0 0
      %1731 = vmatpush1.bf16.msra.mxu0 0
      %1732 = vmatprep.subr.bf16.mxu0 0
      %1733 = vmatpush1.bf16.msra.mxu0 0
      %1734 = vmatprep.subr.bf16.mxu0 0
      %1735 = vmatpush1.bf16.msra.mxu0 0
      %1736 = vmatprep.subr.bf16.mxu0 0
      %1737 = vmatpush1.bf16.msra.mxu0 0
      %1738 = vmatprep.subr.bf16.mxu0 0
      %1739 = vmatpush1.bf16.msra.mxu0 0
      %1740 = vmatprep.subr.bf16.mxu0 0
      %1741 = vmatpush1.bf16.msra.mxu0 0
      %1742 = vmatprep.subr.bf16.mxu0 0
      %1743 = vmatpush1.bf16.msra.mxu0 0
      %1744 = vmatprep.subr.bf16.mxu0 0
      %1745 = vmatpush1.bf16.msra.mxu0 0
      %1746 = vmatprep.mubr.bf16.mxu0 0
      %1747 = vmatmul.mubr.bf16.gmra.mrb[0].mxu0 %v1662
      %v1748 = vpop.f32.mrb[0].mxu0
      %v1749 = vadd.f32 0.0, %v1748
      %v1750 = vpop.f32.mrb[0].mxu0
      %v1751 = vpop.f32.mrb[0].mxu0
      %v1752 = vadd.f32 0.0, %v1751
      %v1753 = vpop.f32.mrb[0].mxu0
      %1754 = vmatprep.mubr.bf16.mxu0 0
      %1755 = vmatmul.mubr.bf16.gmra.mrb[0].mxu0 %v1663
      %v1756 = vpop.f32.mrb[0].mxu0
      %v1757 = vadd.f32 0.0, %v1756
      %v1758 = vpop.f32.mrb[0].mxu0
      %v1759 = vpop.f32.mrb[0].mxu0
      %v1760 = vadd.f32 0.0, %v1759
      %v1761 = vpop.f32.mrb[0].mxu0
      %1762 = vdwg.mxu0
      %v1764 = vunpack.c.l.b16 %v1503
      %v1765 = vsel %vm1630, %v1601, %v1764
      %v1766 = vsel %vm1632, %v1602, %v1765
      %v1767 = vsel %vm1634, %v1603, %v1766
      %v1768 = vsel %vm1636, %v1604, %v1767
      %v1769 = vsel %vm1638, %v1605, %v1768
      %v1770 = vsel %vm1640, %v1606, %v1769
      %v1771 = vsel %vm1642, %v1607, %v1770
      %v1772 = vsel %vm1630, %v1609, %v1608
      %v1773 = vsel %vm1632, %v1610, %v1772
      %v1774 = vsel %vm1634, %v1611, %v1773
      %v1775 = vsel %vm1636, %v1612, %v1774
      %v1776 = vsel %vm1638, %v1613, %v1775
      %v1777 = vsel %vm1640, %v1614, %v1776
      %v1778 = vsel %vm1642, %v1615, %v1777
      %v1779 = vsel %vm1630, %v1617, %v1616
      %v1780 = vsel %vm1632, %v1618, %v1779
      %v1781 = vsel %vm1634, %v1619, %v1780
      %v1782 = vsel %vm1636, %v1620, %v1781
      %v1783 = vsel %vm1638, %v1621, %v1782
      %v1784 = vsel %vm1640, %v1622, %v1783
      %v1785 = vsel %vm1642, %v1623, %v1784
      %v1786 = vsel %vm1630, %v1625, %v1624
      %v1787 = vsel %vm1632, %v1626, %v1786
      %v1788 = vsel %vm1634, %v1627, %v1787
      %v1789 = vsel %vm1636, %v1628, %v1788
      %v1790 = vpack.c.b16 %v1778, %v1771
      %v1791 = vpack.c.b16 %v1789, %v1785
      %v1810 = vunpack.c.l.b16 %v1539
      %v1811 = vunpack.c.l.b16 %v1540
      %v1812 = vunpack.c.l.b16 %v1541
      %v1813 = vunpack.c.l.b16 %v1542
      %v1814 = vunpack.c.l.b16 %v1543
      %v1815 = vunpack.c.l.b16 %v1544
      %v1816 = vunpack.c.l.b16 %v1545
      %v1817 = vunpack.c.l.b16 %v1546
      %v1818 = vunpack.c.l.b16 %v1547
      %v1819 = vunpack.c.l.b16 %v1548
      %v1820 = vunpack.c.l.b16 %v1549
      %v1821 = vunpack.c.l.b16 %v1550
      %v1822 = vunpack.c.l.b16 %v1551
      %v1823 = vunpack.c.l.b16 %v1552
      %v1824 = vunpack.c.l.b16 %v1553
      %v1825 = vunpack.c.l.b16 %v1554
      %v1826 = vpack.c.b16 %v1811, %v1810
      %v1827 = vpack.c.b16 %v1813, %v1812
      %v1828 = vpack.c.b16 %v1815, %v1814
      %v1829 = vpack.c.b16 %v1817, %v1816
      %v1830 = vpack.c.b16 %v1819, %v1818
      %v1831 = vpack.c.b16 %v1821, %v1820
      %v1832 = vpack.c.b16 %v1823, %v1822
      %v1833 = vpack.c.b16 %v1825, %v1824
      %1842 = vmatprep.subr.bf16.mxu0 0
      %1843 = vmatpush1.bf16.msra.mxu0 %v1826
      %1844 = vmatprep.subr.bf16.mxu0 0
      %1845 = vmatpush1.bf16.msra.mxu0 %v1827
      %1846 = vmatprep.subr.bf16.mxu0 0
      %1847 = vmatpush1.bf16.msra.mxu0 %v1828
      %1848 = vmatprep.subr.bf16.mxu0 0
      %1849 = vmatpush1.bf16.msra.mxu0 %v1829
      %1850 = vmatprep.subr.bf16.mxu0 0
      %1851 = vmatpush1.bf16.msra.mxu0 %v1830
      %1852 = vmatprep.subr.bf16.mxu0 0
      %1853 = vmatpush1.bf16.msra.mxu0 %v1831
      %1854 = vmatprep.subr.bf16.mxu0 0
      %1855 = vmatpush1.bf16.msra.mxu0 %v1832
      %1856 = vmatprep.subr.bf16.mxu0 0
      %1857 = vmatpush1.bf16.msra.mxu0 %v1833
      %1858 = vmatprep.subr.bf16.mxu0 0
      %1859 = vmatpush1.bf16.msra.mxu0 0
      %1860 = vmatprep.subr.bf16.mxu0 0
      %1861 = vmatpush1.bf16.msra.mxu0 0
      %1862 = vmatprep.subr.bf16.mxu0 0
      %1863 = vmatpush1.bf16.msra.mxu0 0
      %1864 = vmatprep.subr.bf16.mxu0 0
      %1865 = vmatpush1.bf16.msra.mxu0 0
      %1866 = vmatprep.subr.bf16.mxu0 0
      %1867 = vmatpush1.bf16.msra.mxu0 0
      %1868 = vmatprep.subr.bf16.mxu0 0
      %1869 = vmatpush1.bf16.msra.mxu0 0
      %1870 = vmatprep.subr.bf16.mxu0 0
      %1871 = vmatpush1.bf16.msra.mxu0 0
      %1872 = vmatprep.subr.bf16.mxu0 0
      %1873 = vmatpush1.bf16.msra.mxu0 0
      %1874 = vmatprep.mubr.bf16.mxu0 0
      %1875 = vmatmul.mubr.bf16.gmra.mrb[0].mxu0 %v1790
      %v1876 = vpop.f32.mrb[0].mxu0
      %v1877 = vadd.f32 %v1749, %v1876
      %v1878 = vpop.f32.mrb[0].mxu0
      %v1879 = vpop.f32.mrb[0].mxu0
      %v1880 = vadd.f32 %v1752, %v1879
      %v1881 = vpop.f32.mrb[0].mxu0
      %1882 = vmatprep.mubr.bf16.mxu0 0
      %1883 = vmatmul.mubr.bf16.gmra.mrb[0].mxu0 %v1791
      %v1884 = vpop.f32.mrb[0].mxu0
      %v1885 = vadd.f32 %v1757, %v1884
      %v1886 = vpop.f32.mrb[0].mxu0
      %v1887 = vpop.f32.mrb[0].mxu0
      %v1888 = vadd.f32 %v1760, %v1887
      %v1889 = vpop.f32.mrb[0].mxu0
      %1890 = vdwg.mxu0
      %s1891 = scalar_lea.vmem %s3, 128
      %v1892 = vld [vmem:[%s1891] sm:$0xf]
      %v1893 = vld [vmem:[%s1891 + $0x4] sm:$0xf]
      %v1894 = vld [vmem:[%s1891 + $0x8] sm:$0xf]
      %v1895 = vld [vmem:[%s1891 + $0xc] sm:$0xf]
      %v1896 = vld [vmem:[%s1891 + $0x10] sm:$0xf]
      %v1897 = vld [vmem:[%s1891 + $0x14] sm:$0xf]
      %v1898 = vld [vmem:[%s1891 + $0x18] sm:$0xf]
      %v1899 = vld [vmem:[%s1891 + $0x1c] sm:$0xf]
      %v1900 = vld [vmem:[%s1891 + $0x20] sm:$0xf]
      %v1901 = vld [vmem:[%s1891 + $0x24] sm:$0xf]
      %v1902 = vld [vmem:[%s1891 + $0x28] sm:$0xf]
      %v1903 = vld [vmem:[%s1891 + $0x2c] sm:$0xf]
      %v1904 = vld [vmem:[%s1891 + $0x30] sm:$0xf]
      %v1905 = vld [vmem:[%s1891 + $0x34] sm:$0xf]
      %v1906 = vld [vmem:[%s1891 + $0x38] sm:$0xf]
      %v1907 = vld [vmem:[%s1891 + $0x3c] sm:$0xf]
      %v1909 = vunpack.c.l.b16 %v1533
      %v1910 = vsel %vm1630, %v1603, %v1602
      %v1911 = vsel %vm1632, %v1604, %v1910
      %v1912 = vsel %vm1634, %v1605, %v1911
      %v1913 = vsel %vm1636, %v1606, %v1912
      %v1914 = vsel %vm1638, %v1607, %v1913
      %v1915 = vsel %vm1640, %v1608, %v1914
      %v1916 = vsel %vm1642, %v1609, %v1915
      %v1917 = vsel %vm1630, %v1611, %v1610
      %v1918 = vsel %vm1632, %v1612, %v1917
      %v1919 = vsel %vm1634, %v1613, %v1918
      %v1920 = vsel %vm1636, %v1614, %v1919
      %v1921 = vsel %vm1638, %v1615, %v1920
      %v1922 = vsel %vm1640, %v1616, %v1921
      %v1923 = vsel %vm1642, %v1617, %v1922
      %v1924 = vsel %vm1630, %v1619, %v1618
      %v1925 = vsel %vm1632, %v1620, %v1924
      %v1926 = vsel %vm1634, %v1621, %v1925
      %v1927 = vsel %vm1636, %v1622, %v1926
      %v1928 = vsel %vm1638, %v1623, %v1927
      %v1929 = vsel %vm1640, %v1624, %v1928
      %v1930 = vsel %vm1642, %v1625, %v1929
      %v1931 = vsel %vm1630, %v1627, %v1626
      %v1932 = vsel %vm1632, %v1628, %v1931
      %v1933 = vsel %vm1634, %v1629, %v1932
      %v1934 = vsel %vm1636, %v1909, %v1933
      %v1935 = vpack.c.b16 %v1923, %v1916
      %v1936 = vpack.c.b16 %v1934, %v1930
      %v1955 = vunpack.c.l.b16 %v1892
      %v1956 = vunpack.c.l.b16 %v1893
      %v1957 = vunpack.c.l.b16 %v1894
      %v1958 = vunpack.c.l.b16 %v1895
      %v1959 = vunpack.c.l.b16 %v1896
      %v1960 = vunpack.c.l.b16 %v1897
      %v1961 = vunpack.c.l.b16 %v1898
      %v1962 = vunpack.c.l.b16 %v1899
      %v1963 = vunpack.c.l.b16 %v1900
      %v1964 = vunpack.c.l.b16 %v1901
      %v1965 = vunpack.c.l.b16 %v1902
      %v1966 = vunpack.c.l.b16 %v1903
      %v1967 = vunpack.c.l.b16 %v1904
      %v1968 = vunpack.c.l.b16 %v1905
      %v1969 = vunpack.c.l.b16 %v1906
      %v1970 = vunpack.c.l.b16 %v1907
      %v1971 = vpack.c.b16 %v1956, %v1955
      %v1972 = vpack.c.b16 %v1958, %v1957
      %v1973 = vpack.c.b16 %v1960, %v1959
      %v1974 = vpack.c.b16 %v1962, %v1961
      %v1975 = vpack.c.b16 %v1964, %v1963
      %v1976 = vpack.c.b16 %v1966, %v1965
      %v1977 = vpack.c.b16 %v1968, %v1967
      %v1978 = vpack.c.b16 %v1970, %v1969
      %1987 = vmatprep.subr.bf16.mxu0 0
      %1988 = vmatpush1.bf16.msra.mxu0 %v1971
      %1989 = vmatprep.subr.bf16.mxu0 0
      %1990 = vmatpush1.bf16.msra.mxu0 %v1972
      %1991 = vmatprep.subr.bf16.mxu0 0
      %1992 = vmatpush1.bf16.msra.mxu0 %v1973
      %1993 = vmatprep.subr.bf16.mxu0 0
      %1994 = vmatpush1.bf16.msra.mxu0 %v1974
      %1995 = vmatprep.subr.bf16.mxu0 0
      %1996 = vmatpush1.bf16.msra.mxu0 %v1975
      %1997 = vmatprep.subr.bf16.mxu0 0
      %1998 = vmatpush1.bf16.msra.mxu0 %v1976
      %1999 = vmatprep.subr.bf16.mxu0 0
      %2000 = vmatpush1.bf16.msra.mxu0 %v1977
      %2001 = vmatprep.subr.bf16.mxu0 0
      %2002 = vmatpush1.bf16.msra.mxu0 %v1978
      %2003 = vmatprep.subr.bf16.mxu0 0
      %2004 = vmatpush1.bf16.msra.mxu0 0
      %2005 = vmatprep.subr.bf16.mxu0 0
      %2006 = vmatpush1.bf16.msra.mxu0 0
      %2007 = vmatprep.subr.bf16.mxu0 0
      %2008 = vmatpush1.bf16.msra.mxu0 0
      %2009 = vmatprep.subr.bf16.mxu0 0
      %2010 = vmatpush1.bf16.msra.mxu0 0
      %2011 = vmatprep.subr.bf16.mxu0 0
      %2012 = vmatpush1.bf16.msra.mxu0 0
      %2013 = vmatprep.subr.bf16.mxu0 0
      %2014 = vmatpush1.bf16.msra.mxu0 0
      %2015 = vmatprep.subr.bf16.mxu0 0
      %2016 = vmatpush1.bf16.msra.mxu0 0
      %2017 = vmatprep.subr.bf16.mxu0 0
      %2018 = vmatpush1.bf16.msra.mxu0 0
      %2019 = vmatprep.mubr.bf16.mxu0 0
      %2020 = vmatmul.mubr.bf16.gmra.mrb[0].mxu0 %v1935
      %v2021 = vpop.f32.mrb[0].mxu0
      %v2022 = vadd.f32 0.0, %v2021
      %v2023 = vpop.f32.mrb[0].mxu0
      %v2024 = vpop.f32.mrb[0].mxu0
      %v2025 = vadd.f32 0.0, %v2024
      %v2026 = vpop.f32.mrb[0].mxu0
      %2027 = vmatprep.mubr.bf16.mxu0 0
      %2028 = vmatmul.mubr.bf16.gmra.mrb[0].mxu0 %v1936
      %v2029 = vpop.f32.mrb[0].mxu0
      %v2030 = vadd.f32 0.0, %v2029
      %v2031 = vpop.f32.mrb[0].mxu0
      %v2032 = vpop.f32.mrb[0].mxu0
      %v2033 = vadd.f32 0.0, %v2032
      %v2034 = vpop.f32.mrb[0].mxu0
      %2035 = vdwg.mxu0
      %v2036 = vadd.f32 %v1877, %v2022
      %v2037 = vadd.f32 %v1880, %v2025
      %v2038 = vadd.f32 %v1885, %v2030
      %v2039 = vadd.f32 %v1888, %v2033
      %s2040 = scalar_lea.vmem %s3, 192
      %v2041 = vld [vmem:[%s2040] sm:$0xf]
      %v2042 = vld [vmem:[%s2040 + $0x4] sm:$0xf]
      %v2043 = vld [vmem:[%s2040 + $0x8] sm:$0xf]
      %v2044 = vld [vmem:[%s2040 + $0xc] sm:$0xf]
      %v2045 = vld [vmem:[%s2040 + $0x10] sm:$0xf]
      %v2046 = vld [vmem:[%s2040 + $0x14] sm:$0xf]
      %v2047 = vld [vmem:[%s2040 + $0x18] sm:$0xf]
      %v2048 = vld [vmem:[%s2040 + $0x1c] sm:$0xf]
      %v2049 = vld [vmem:[%s2040 + $0x20] sm:$0xf]
      %v2050 = vld [vmem:[%s2040 + $0x24] sm:$0xf]
      %v2051 = vld [vmem:[%s2040 + $0x28] sm:$0xf]
      %v2052 = vld [vmem:[%s2040 + $0x2c] sm:$0xf]
      %v2053 = vld [vmem:[%s2040 + $0x30] sm:$0xf]
      %v2054 = vld [vmem:[%s2040 + $0x34] sm:$0xf]
      %v2055 = vld [vmem:[%s2040 + $0x38] sm:$0xf]
      %v2056 = vld [vmem:[%s2040 + $0x3c] sm:$0xf]
      %v2058 = vunpack.c.l.b16 %v1534
      %v2059 = vsel %vm1630, %v1604, %v1603
      %v2060 = vsel %vm1632, %v1605, %v2059
      %v2061 = vsel %vm1634, %v1606, %v2060
      %v2062 = vsel %vm1636, %v1607, %v2061
      %v2063 = vsel %vm1638, %v1608, %v2062
      %v2064 = vsel %vm1640, %v1609, %v2063
      %v2065 = vsel %vm1642, %v1610, %v2064
      %v2066 = vsel %vm1630, %v1612, %v1611
      %v2067 = vsel %vm1632, %v1613, %v2066
      %v2068 = vsel %vm1634, %v1614, %v2067
      %v2069 = vsel %vm1636, %v1615, %v2068
      %v2070 = vsel %vm1638, %v1616, %v2069
      %v2071 = vsel %vm1640, %v1617, %v2070
      %v2072 = vsel %vm1642, %v1618, %v2071
      %v2073 = vsel %vm1630, %v1620, %v1619
      %v2074 = vsel %vm1632, %v1621, %v2073
      %v2075 = vsel %vm1634, %v1622, %v2074
      %v2076 = vsel %vm1636, %v1623, %v2075
      %v2077 = vsel %vm1638, %v1624, %v2076
      %v2078 = vsel %vm1640, %v1625, %v2077
      %v2079 = vsel %vm1642, %v1626, %v2078
      %v2080 = vsel %vm1630, %v1628, %v1627
      %v2081 = vsel %vm1632, %v1629, %v2080
      %v2082 = vsel %vm1634, %v1909, %v2081
      %v2083 = vsel %vm1636, %v2058, %v2082
      %v2084 = vpack.c.b16 %v2072, %v2065
      %v2085 = vpack.c.b16 %v2083, %v2079
      %v2104 = vunpack.c.l.b16 %v2041
      %v2105 = vunpack.c.l.b16 %v2042
      %v2106 = vunpack.c.l.b16 %v2043
      %v2107 = vunpack.c.l.b16 %v2044
      %v2108 = vunpack.c.l.b16 %v2045
      %v2109 = vunpack.c.l.b16 %v2046
      %v2110 = vunpack.c.l.b16 %v2047
      %v2111 = vunpack.c.l.b16 %v2048
      %v2112 = vunpack.c.l.b16 %v2049
      %v2113 = vunpack.c.l.b16 %v2050
      %v2114 = vunpack.c.l.b16 %v2051
      %v2115 = vunpack.c.l.b16 %v2052
      %v2116 = vunpack.c.l.b16 %v2053
      %v2117 = vunpack.c.l.b16 %v2054
      %v2118 = vunpack.c.l.b16 %v2055
      %v2119 = vunpack.c.l.b16 %v2056
      %v2120 = vpack.c.b16 %v2105, %v2104
      %v2121 = vpack.c.b16 %v2107, %v2106
      %v2122 = vpack.c.b16 %v2109, %v2108
      %v2123 = vpack.c.b16 %v2111, %v2110
      %v2124 = vpack.c.b16 %v2113, %v2112
      %v2125 = vpack.c.b16 %v2115, %v2114
      %v2126 = vpack.c.b16 %v2117, %v2116
      %v2127 = vpack.c.b16 %v2119, %v2118
      %2136 = vmatprep.subr.bf16.mxu0 0
      %2137 = vmatpush1.bf16.msra.mxu0 %v2120
      %2138 = vmatprep.subr.bf16.mxu0 0
      %2139 = vmatpush1.bf16.msra.mxu0 %v2121
      %2140 = vmatprep.subr.bf16.mxu0 0
      %2141 = vmatpush1.bf16.msra.mxu0 %v2122
      %2142 = vmatprep.subr.bf16.mxu0 0
      %2143 = vmatpush1.bf16.msra.mxu0 %v2123
      %2144 = vmatprep.subr.bf16.mxu0 0
      %2145 = vmatpush1.bf16.msra.mxu0 %v2124
      %2146 = vmatprep.subr.bf16.mxu0 0
      %2147 = vmatpush1.bf16.msra.mxu0 %v2125
      %2148 = vmatprep.subr.bf16.mxu0 0
      %2149 = vmatpush1.bf16.msra.mxu0 %v2126
      %2150 = vmatprep.subr.bf16.mxu0 0
      %2151 = vmatpush1.bf16.msra.mxu0 %v2127
      %2152 = vmatprep.subr.bf16.mxu0 0
      %2153 = vmatpush1.bf16.msra.mxu0 0
      %2154 = vmatprep.subr.bf16.mxu0 0
      %2155 = vmatpush1.bf16.msra.mxu0 0
      %2156 = vmatprep.subr.bf16.mxu0 0
      %2157 = vmatpush1.bf16.msra.mxu0 0
      %2158 = vmatprep.subr.bf16.mxu0 0
      %2159 = vmatpush1.bf16.msra.mxu0 0
      %2160 = vmatprep.subr.bf16.mxu0 0
      %2161 = vmatpush1.bf16.msra.mxu0 0
      %2162 = vmatprep.subr.bf16.mxu0 0
      %2163 = vmatpush1.bf16.msra.mxu0 0
      %2164 = vmatprep.subr.bf16.mxu0 0
      %2165 = vmatpush1.bf16.msra.mxu0 0
      %2166 = vmatprep.subr.bf16.mxu0 0
      %2167 = vmatpush1.bf16.msra.mxu0 0
      %2168 = vmatprep.mubr.bf16.mxu0 0
      %2169 = vmatmul.mubr.bf16.gmra.mrb[0].mxu0 %v2084
      %v2170 = vpop.f32.mrb[0].mxu0
      %v2171 = vadd.f32 0.0, %v2170
      %v2172 = vpop.f32.mrb[0].mxu0
      %v2173 = vpop.f32.mrb[0].mxu0
      %v2174 = vadd.f32 0.0, %v2173
      %v2175 = vpop.f32.mrb[0].mxu0
      %2176 = vmatprep.mubr.bf16.mxu0 0
      %2177 = vmatmul.mubr.bf16.gmra.mrb[0].mxu0 %v2085
      %v2178 = vpop.f32.mrb[0].mxu0
      %v2179 = vadd.f32 0.0, %v2178
      %v2180 = vpop.f32.mrb[0].mxu0
      %v2181 = vpop.f32.mrb[0].mxu0
      %v2182 = vadd.f32 0.0, %v2181
      %v2183 = vpop.f32.mrb[0].mxu0
      %2184 = vdwg.mxu0
      %v2185 = vadd.f32 %v2036, %v2171
      %v2186 = vadd.f32 %v2037, %v2174
      %v2187 = vadd.f32 %v2038, %v2179
      %v2188 = vadd.f32 %v2039, %v2182
      %s2189 = scalar_lea.vmem %s3, 256
      %v2190 = vld [vmem:[%s2189] sm:$0xf]
      %v2191 = vld [vmem:[%s2189 + $0x4] sm:$0xf]
      %v2192 = vld [vmem:[%s2189 + $0x8] sm:$0xf]
      %v2193 = vld [vmem:[%s2189 + $0xc] sm:$0xf]
      %v2194 = vld [vmem:[%s2189 + $0x10] sm:$0xf]
      %v2195 = vld [vmem:[%s2189 + $0x14] sm:$0xf]
      %v2196 = vld [vmem:[%s2189 + $0x18] sm:$0xf]
      %v2197 = vld [vmem:[%s2189 + $0x1c] sm:$0xf]
      %v2198 = vld [vmem:[%s2189 + $0x20] sm:$0xf]
      %v2199 = vld [vmem:[%s2189 + $0x24] sm:$0xf]
      %v2200 = vld [vmem:[%s2189 + $0x28] sm:$0xf]
      %v2201 = vld [vmem:[%s2189 + $0x2c] sm:$0xf]
      %v2202 = vld [vmem:[%s2189 + $0x30] sm:$0xf]
      %v2203 = vld [vmem:[%s2189 + $0x34] sm:$0xf]
      %v2204 = vld [vmem:[%s2189 + $0x38] sm:$0xf]
      %v2205 = vld [vmem:[%s2189 + $0x3c] sm:$0xf]
      %v2207 = vunpack.c.l.b16 %v1535
      %v2208 = vsel %vm1630, %v1605, %v1604
      %v2209 = vsel %vm1632, %v1606, %v2208
      %v2210 = vsel %vm1634, %v1607, %v2209
      %v2211 = vsel %vm1636, %v1608, %v2210
      %v2212 = vsel %vm1638, %v1609, %v2211
      %v2213 = vsel %vm1640, %v1610, %v2212
      %v2214 = vsel %vm1642, %v1611, %v2213
      %v2215 = vsel %vm1630, %v1613, %v1612
      %v2216 = vsel %vm1632, %v1614, %v2215
      %v2217 = vsel %vm1634, %v1615, %v2216
      %v2218 = vsel %vm1636, %v1616, %v2217
      %v2219 = vsel %vm1638, %v1617, %v2218
      %v2220 = vsel %vm1640, %v1618, %v2219
      %v2221 = vsel %vm1642, %v1619, %v2220
      %v2222 = vsel %vm1630, %v1621, %v1620
      %v2223 = vsel %vm1632, %v1622, %v2222
      %v2224 = vsel %vm1634, %v1623, %v2223
      %v2225 = vsel %vm1636, %v1624, %v2224
      %v2226 = vsel %vm1638, %v1625, %v2225
      %v2227 = vsel %vm1640, %v1626, %v2226
      %v2228 = vsel %vm1642, %v1627, %v2227
      %v2229 = vsel %vm1630, %v1629, %v1628
      %v2230 = vsel %vm1632, %v1909, %v2229
      %v2231 = vsel %vm1634, %v2058, %v2230
      %v2232 = vsel %vm1636, %v2207, %v2231
      %v2233 = vpack.c.b16 %v2221, %v2214
      %v2234 = vpack.c.b16 %v2232, %v2228
      %v2253 = vunpack.c.l.b16 %v2190
      %v2254 = vunpack.c.l.b16 %v2191
      %v2255 = vunpack.c.l.b16 %v2192
      %v2256 = vunpack.c.l.b16 %v2193
      %v2257 = vunpack.c.l.b16 %v2194
      %v2258 = vunpack.c.l.b16 %v2195
      %v2259 = vunpack.c.l.b16 %v2196
      %v2260 = vunpack.c.l.b16 %v2197
      %v2261 = vunpack.c.l.b16 %v2198
      %v2262 = vunpack.c.l.b16 %v2199
      %v2263 = vunpack.c.l.b16 %v2200
      %v2264 = vunpack.c.l.b16 %v2201
      %v2265 = vunpack.c.l.b16 %v2202
      %v2266 = vunpack.c.l.b16 %v2203
      %v2267 = vunpack.c.l.b16 %v2204
      %v2268 = vunpack.c.l.b16 %v2205
      %v2269 = vpack.c.b16 %v2254, %v2253
      %v2270 = vpack.c.b16 %v2256, %v2255
      %v2271 = vpack.c.b16 %v2258, %v2257
      %v2272 = vpack.c.b16 %v2260, %v2259
      %v2273 = vpack.c.b16 %v2262, %v2261
      %v2274 = vpack.c.b16 %v2264, %v2263
      %v2275 = vpack.c.b16 %v2266, %v2265
      %v2276 = vpack.c.b16 %v2268, %v2267
      %2285 = vmatprep.subr.bf16.mxu0 0
      %2286 = vmatpush1.bf16.msra.mxu0 %v2269
      %2287 = vmatprep.subr.bf16.mxu0 0
      %2288 = vmatpush1.bf16.msra.mxu0 %v2270
      %2289 = vmatprep.subr.bf16.mxu0 0
      %2290 = vmatpush1.bf16.msra.mxu0 %v2271
      %2291 = vmatprep.subr.bf16.mxu0 0
      %2292 = vmatpush1.bf16.msra.mxu0 %v2272
      %2293 = vmatprep.subr.bf16.mxu0 0
      %2294 = vmatpush1.bf16.msra.mxu0 %v2273
      %2295 = vmatprep.subr.bf16.mxu0 0
      %2296 = vmatpush1.bf16.msra.mxu0 %v2274
      %2297 = vmatprep.subr.bf16.mxu0 0
      %2298 = vmatpush1.bf16.msra.mxu0 %v2275
      %2299 = vmatprep.subr.bf16.mxu0 0
      %2300 = vmatpush1.bf16.msra.mxu0 %v2276
      %2301 = vmatprep.subr.bf16.mxu0 0
      %2302 = vmatpush1.bf16.msra.mxu0 0
      %2303 = vmatprep.subr.bf16.mxu0 0
      %2304 = vmatpush1.bf16.msra.mxu0 0
      %2305 = vmatprep.subr.bf16.mxu0 0
      %2306 = vmatpush1.bf16.msra.mxu0 0
      %2307 = vmatprep.subr.bf16.mxu0 0
      %2308 = vmatpush1.bf16.msra.mxu0 0
      %2309 = vmatprep.subr.bf16.mxu0 0
      %2310 = vmatpush1.bf16.msra.mxu0 0
      %2311 = vmatprep.subr.bf16.mxu0 0
      %2312 = vmatpush1.bf16.msra.mxu0 0
      %2313 = vmatprep.subr.bf16.mxu0 0
      %2314 = vmatpush1.bf16.msra.mxu0 0
      %2315 = vmatprep.subr.bf16.mxu0 0
      %2316 = vmatpush1.bf16.msra.mxu0 0
      %2317 = vmatprep.mubr.bf16.mxu0 0
      %2318 = vmatmul.mubr.bf16.gmra.mrb[0].mxu0 %v2233
      %v2319 = vpop.f32.mrb[0].mxu0
      %v2320 = vadd.f32 0.0, %v2319
      %v2321 = vpop.f32.mrb[0].mxu0
      %v2322 = vpop.f32.mrb[0].mxu0
      %v2323 = vadd.f32 0.0, %v2322
      %v2324 = vpop.f32.mrb[0].mxu0
      %2325 = vmatprep.mubr.bf16.mxu0 0
      %2326 = vmatmul.mubr.bf16.gmra.mrb[0].mxu0 %v2234
      %v2327 = vpop.f32.mrb[0].mxu0
      %v2328 = vadd.f32 0.0, %v2327
      %v2329 = vpop.f32.mrb[0].mxu0
      %v2330 = vpop.f32.mrb[0].mxu0
      %v2331 = vadd.f32 0.0, %v2330
      %v2332 = vpop.f32.mrb[0].mxu0
      %2333 = vdwg.mxu0
      %v2334 = vadd.f32 %v2185, %v2320
      %v2335 = vadd.f32 %v2186, %v2323
      %v2336 = vadd.f32 %v2187, %v2328
      %v2337 = vadd.f32 %v2188, %v2331
      %s2338 = scalar_lea.vmem %s3, 320
      %v2339 = vld [vmem:[%s2338] sm:$0xf]
      %v2340 = vld [vmem:[%s2338 + $0x4] sm:$0xf]
      %v2341 = vld [vmem:[%s2338 + $0x8] sm:$0xf]
      %v2342 = vld [vmem:[%s2338 + $0xc] sm:$0xf]
      %v2343 = vld [vmem:[%s2338 + $0x10] sm:$0xf]
      %v2344 = vld [vmem:[%s2338 + $0x14] sm:$0xf]
      %v2345 = vld [vmem:[%s2338 + $0x18] sm:$0xf]
      %v2346 = vld [vmem:[%s2338 + $0x1c] sm:$0xf]
      %v2347 = vld [vmem:[%s2338 + $0x20] sm:$0xf]
      %v2348 = vld [vmem:[%s2338 + $0x24] sm:$0xf]
      %v2349 = vld [vmem:[%s2338 + $0x28] sm:$0xf]
      %v2350 = vld [vmem:[%s2338 + $0x2c] sm:$0xf]
      %v2351 = vld [vmem:[%s2338 + $0x30] sm:$0xf]
      %v2352 = vld [vmem:[%s2338 + $0x34] sm:$0xf]
      %v2353 = vld [vmem:[%s2338 + $0x38] sm:$0xf]
      %v2354 = vld [vmem:[%s2338 + $0x3c] sm:$0xf]
      %v2356 = vunpack.c.l.b16 %v1536
      %v2357 = vsel %vm1630, %v1606, %v1605
      %v2358 = vsel %vm1632, %v1607, %v2357
      %v2359 = vsel %vm1634, %v1608, %v2358
      %v2360 = vsel %vm1636, %v1609, %v2359
      %v2361 = vsel %vm1638, %v1610, %v2360
      %v2362 = vsel %vm1640, %v1611, %v2361
      %v2363 = vsel %vm1642, %v1612, %v2362
      %v2364 = vsel %vm1630, %v1614, %v1613
      %v2365 = vsel %vm1632, %v1615, %v2364
      %v2366 = vsel %vm1634, %v1616, %v2365
      %v2367 = vsel %vm1636, %v1617, %v2366
      %v2368 = vsel %vm1638, %v1618, %v2367
      %v2369 = vsel %vm1640, %v1619, %v2368
      %v2370 = vsel %vm1642, %v1620, %v2369
      %v2371 = vsel %vm1630, %v1622, %v1621
      %v2372 = vsel %vm1632, %v1623, %v2371
      %v2373 = vsel %vm1634, %v1624, %v2372
      %v2374 = vsel %vm1636, %v1625, %v2373
      %v2375 = vsel %vm1638, %v1626, %v2374
      %v2376 = vsel %vm1640, %v1627, %v2375
      %v2377 = vsel %vm1642, %v1628, %v2376
      %v2378 = vsel %vm1630, %v1909, %v1629
      %v2379 = vsel %vm1632, %v2058, %v2378
      %v2380 = vsel %vm1634, %v2207, %v2379
      %v2381 = vsel %vm1636, %v2356, %v2380
      %v2382 = vpack.c.b16 %v2370, %v2363
      %v2383 = vpack.c.b16 %v2381, %v2377
      %v2402 = vunpack.c.l.b16 %v2339
      %v2403 = vunpack.c.l.b16 %v2340
      %v2404 = vunpack.c.l.b16 %v2341
      %v2405 = vunpack.c.l.b16 %v2342
      %v2406 = vunpack.c.l.b16 %v2343
      %v2407 = vunpack.c.l.b16 %v2344
      %v2408 = vunpack.c.l.b16 %v2345
      %v2409 = vunpack.c.l.b16 %v2346
      %v2410 = vunpack.c.l.b16 %v2347
      %v2411 = vunpack.c.l.b16 %v2348
      %v2412 = vunpack.c.l.b16 %v2349
      %v2413 = vunpack.c.l.b16 %v2350
      %v2414 = vunpack.c.l.b16 %v2351
      %v2415 = vunpack.c.l.b16 %v2352
      %v2416 = vunpack.c.l.b16 %v2353
      %v2417 = vunpack.c.l.b16 %v2354
      %v2418 = vpack.c.b16 %v2403, %v2402
      %v2419 = vpack.c.b16 %v2405, %v2404
      %v2420 = vpack.c.b16 %v2407, %v2406
      %v2421 = vpack.c.b16 %v2409, %v2408
      %v2422 = vpack.c.b16 %v2411, %v2410
      %v2423 = vpack.c.b16 %v2413, %v2412
      %v2424 = vpack.c.b16 %v2415, %v2414
      %v2425 = vpack.c.b16 %v2417, %v2416
      %2434 = vmatprep.subr.bf16.mxu0 0
      %2435 = vmatpush1.bf16.msra.mxu0 %v2418
      %2436 = vmatprep.subr.bf16.mxu0 0
      %2437 = vmatpush1.bf16.msra.mxu0 %v2419
      %2438 = vmatprep.subr.bf16.mxu0 0
      %2439 = vmatpush1.bf16.msra.mxu0 %v2420
      %2440 = vmatprep.subr.bf16.mxu0 0
      %2441 = vmatpush1.bf16.msra.mxu0 %v2421
      %2442 = vmatprep.subr.bf16.mxu0 0
      %2443 = vmatpush1.bf16.msra.mxu0 %v2422
      %2444 = vmatprep.subr.bf16.mxu0 0
      %2445 = vmatpush1.bf16.msra.mxu0 %v2423
      %2446 = vmatprep.subr.bf16.mxu0 0
      %2447 = vmatpush1.bf16.msra.mxu0 %v2424
      %2448 = vmatprep.subr.bf16.mxu0 0
      %2449 = vmatpush1.bf16.msra.mxu0 %v2425
      %2450 = vmatprep.subr.bf16.mxu0 0
      %2451 = vmatpush1.bf16.msra.mxu0 0
      %2452 = vmatprep.subr.bf16.mxu0 0
      %2453 = vmatpush1.bf16.msra.mxu0 0
      %2454 = vmatprep.subr.bf16.mxu0 0
      %2455 = vmatpush1.bf16.msra.mxu0 0
      %2456 = vmatprep.subr.bf16.mxu0 0
      %2457 = vmatpush1.bf16.msra.mxu0 0
      %2458 = vmatprep.subr.bf16.mxu0 0
      %2459 = vmatpush1.bf16.msra.mxu0 0
      %2460 = vmatprep.subr.bf16.mxu0 0
      %2461 = vmatpush1.bf16.msra.mxu0 0
      %2462 = vmatprep.subr.bf16.mxu0 0
      %2463 = vmatpush1.bf16.msra.mxu0 0
      %2464 = vmatprep.subr.bf16.mxu0 0
      %2465 = vmatpush1.bf16.msra.mxu0 0
      %2466 = vmatprep.mubr.bf16.mxu0 0
      %2467 = vmatmul.mubr.bf16.gmra.mrb[0].mxu0 %v2382
      %v2468 = vpop.f32.mrb[0].mxu0
      %v2469 = vadd.f32 0.0, %v2468
      %v2470 = vpop.f32.mrb[0].mxu0
      %v2471 = vpop.f32.mrb[0].mxu0
      %v2472 = vadd.f32 0.0, %v2471
      %v2473 = vpop.f32.mrb[0].mxu0
      %2474 = vmatprep.mubr.bf16.mxu0 0
      %2475 = vmatmul.mubr.bf16.gmra.mrb[0].mxu0 %v2383
      %v2476 = vpop.f32.mrb[0].mxu0
      %v2477 = vadd.f32 0.0, %v2476
      %v2478 = vpop.f32.mrb[0].mxu0
      %v2479 = vpop.f32.mrb[0].mxu0
      %v2480 = vadd.f32 0.0, %v2479
      %v2481 = vpop.f32.mrb[0].mxu0
      %2482 = vdwg.mxu0
      %v2483 = vadd.f32 %v2334, %v2469
      %v2484 = vadd.f32 %v2335, %v2472
      %v2485 = vadd.f32 %v2336, %v2477
      %v2486 = vadd.f32 %v2337, %v2480
      %s2487 = scalar_lea.vmem %s3, 384
      %v2488 = vld [vmem:[%s2487] sm:$0xf]
      %v2489 = vld [vmem:[%s2487 + $0x4] sm:$0xf]
      %v2490 = vld [vmem:[%s2487 + $0x8] sm:$0xf]
      %v2491 = vld [vmem:[%s2487 + $0xc] sm:$0xf]
      %v2492 = vld [vmem:[%s2487 + $0x10] sm:$0xf]
      %v2493 = vld [vmem:[%s2487 + $0x14] sm:$0xf]
      %v2494 = vld [vmem:[%s2487 + $0x18] sm:$0xf]
      %v2495 = vld [vmem:[%s2487 + $0x1c] sm:$0xf]
      %v2496 = vld [vmem:[%s2487 + $0x20] sm:$0xf]
      %v2497 = vld [vmem:[%s2487 + $0x24] sm:$0xf]
      %v2498 = vld [vmem:[%s2487 + $0x28] sm:$0xf]
      %v2499 = vld [vmem:[%s2487 + $0x2c] sm:$0xf]
      %v2500 = vld [vmem:[%s2487 + $0x30] sm:$0xf]
      %v2501 = vld [vmem:[%s2487 + $0x34] sm:$0xf]
      %v2502 = vld [vmem:[%s2487 + $0x38] sm:$0xf]
      %v2503 = vld [vmem:[%s2487 + $0x3c] sm:$0xf]
      %v2505 = vunpack.c.l.b16 %v1537
      %v2506 = vsel %vm1630, %v1607, %v1606
      %v2507 = vsel %vm1632, %v1608, %v2506
      %v2508 = vsel %vm1634, %v1609, %v2507
      %v2509 = vsel %vm1636, %v1610, %v2508
      %v2510 = vsel %vm1638, %v1611, %v2509
      %v2511 = vsel %vm1640, %v1612, %v2510
      %v2512 = vsel %vm1642, %v1613, %v2511
      %v2513 = vsel %vm1630, %v1615, %v1614
      %v2514 = vsel %vm1632, %v1616, %v2513
      %v2515 = vsel %vm1634, %v1617, %v2514
      %v2516 = vsel %vm1636, %v1618, %v2515
      %v2517 = vsel %vm1638, %v1619, %v2516
      %v2518 = vsel %vm1640, %v1620, %v2517
      %v2519 = vsel %vm1642, %v1621, %v2518
      %v2520 = vsel %vm1630, %v1623, %v1622
      %v2521 = vsel %vm1632, %v1624, %v2520
      %v2522 = vsel %vm1634, %v1625, %v2521
      %v2523 = vsel %vm1636, %v1626, %v2522
      %v2524 = vsel %vm1638, %v1627, %v2523
      %v2525 = vsel %vm1640, %v1628, %v2524
      %v2526 = vsel %vm1642, %v1629, %v2525
      %v2527 = vsel %vm1630, %v2058, %v1909
      %v2528 = vsel %vm1632, %v2207, %v2527
      %v2529 = vsel %vm1634, %v2356, %v2528
      %v2530 = vsel %vm1636, %v2505, %v2529
      %v2531 = vpack.c.b16 %v2519, %v2512
      %v2532 = vpack.c.b16 %v2530, %v2526
      %v2551 = vunpack.c.l.b16 %v2488
      %v2552 = vunpack.c.l.b16 %v2489
      %v2553 = vunpack.c.l.b16 %v2490
      %v2554 = vunpack.c.l.b16 %v2491
      %v2555 = vunpack.c.l.b16 %v2492
      %v2556 = vunpack.c.l.b16 %v2493
      %v2557 = vunpack.c.l.b16 %v2494
      %v2558 = vunpack.c.l.b16 %v2495
      %v2559 = vunpack.c.l.b16 %v2496
      %v2560 = vunpack.c.l.b16 %v2497
      %v2561 = vunpack.c.l.b16 %v2498
      %v2562 = vunpack.c.l.b16 %v2499
      %v2563 = vunpack.c.l.b16 %v2500
      %v2564 = vunpack.c.l.b16 %v2501
      %v2565 = vunpack.c.l.b16 %v2502
      %v2566 = vunpack.c.l.b16 %v2503
      %v2567 = vpack.c.b16 %v2552, %v2551
      %v2568 = vpack.c.b16 %v2554, %v2553
      %v2569 = vpack.c.b16 %v2556, %v2555
      %v2570 = vpack.c.b16 %v2558, %v2557
      %v2571 = vpack.c.b16 %v2560, %v2559
      %v2572 = vpack.c.b16 %v2562, %v2561
      %v2573 = vpack.c.b16 %v2564, %v2563
      %v2574 = vpack.c.b16 %v2566, %v2565
      %2583 = vmatprep.subr.bf16.mxu0 0
      %2584 = vmatpush1.bf16.msra.mxu0 %v2567
      %2585 = vmatprep.subr.bf16.mxu0 0
      %2586 = vmatpush1.bf16.msra.mxu0 %v2568
      %2587 = vmatprep.subr.bf16.mxu0 0
      %2588 = vmatpush1.bf16.msra.mxu0 %v2569
      %2589 = vmatprep.subr.bf16.mxu0 0
      %2590 = vmatpush1.bf16.msra.mxu0 %v2570
      %2591 = vmatprep.subr.bf16.mxu0 0
      %2592 = vmatpush1.bf16.msra.mxu0 %v2571
      %2593 = vmatprep.subr.bf16.mxu0 0
      %2594 = vmatpush1.bf16.msra.mxu0 %v2572
      %2595 = vmatprep.subr.bf16.mxu0 0
      %2596 = vmatpush1.bf16.msra.mxu0 %v2573
      %2597 = vmatprep.subr.bf16.mxu0 0
      %2598 = vmatpush1.bf16.msra.mxu0 %v2574
      %2599 = vmatprep.subr.bf16.mxu0 0
      %2600 = vmatpush1.bf16.msra.mxu0 0
      %2601 = vmatprep.subr.bf16.mxu0 0
      %2602 = vmatpush1.bf16.msra.mxu0 0
      %2603 = vmatprep.subr.bf16.mxu0 0
      %2604 = vmatpush1.bf16.msra.mxu0 0
      %2605 = vmatprep.subr.bf16.mxu0 0
      %2606 = vmatpush1.bf16.msra.mxu0 0
      %2607 = vmatprep.subr.bf16.mxu0 0
      %2608 = vmatpush1.bf16.msra.mxu0 0
      %2609 = vmatprep.subr.bf16.mxu0 0
      %2610 = vmatpush1.bf16.msra.mxu0 0
      %2611 = vmatprep.subr.bf16.mxu0 0
      %2612 = vmatpush1.bf16.msra.mxu0 0
      %2613 = vmatprep.subr.bf16.mxu0 0
      %2614 = vmatpush1.bf16.msra.mxu0 0
      %2615 = vmatprep.mubr.bf16.mxu0 0
      %2616 = vmatmul.mubr.bf16.gmra.mrb[0].mxu0 %v2531
      %v2617 = vpop.f32.mrb[0].mxu0
      %v2618 = vadd.f32 0.0, %v2617
      %v2619 = vpop.f32.mrb[0].mxu0
      %v2620 = vpop.f32.mrb[0].mxu0
      %v2621 = vadd.f32 0.0, %v2620
      %v2622 = vpop.f32.mrb[0].mxu0
      %2623 = vmatprep.mubr.bf16.mxu0 0
      %2624 = vmatmul.mubr.bf16.gmra.mrb[0].mxu0 %v2532
      %v2625 = vpop.f32.mrb[0].mxu0
      %v2626 = vadd.f32 0.0, %v2625
      %v2627 = vpop.f32.mrb[0].mxu0
      %v2628 = vpop.f32.mrb[0].mxu0
      %v2629 = vadd.f32 0.0, %v2628
      %v2630 = vpop.f32.mrb[0].mxu0
      %2631 = vdwg.mxu0
      %v2632 = vadd.f32 %v2483, %v2618
      %v2633 = vadd.f32 %v2484, %v2621
      %v2634 = vadd.f32 %v2485, %v2626
      %v2635 = vadd.f32 %v2486, %v2629
      %s2636 = scalar_lea.vmem %s3, 448
      %v2637 = vld [vmem:[%s2636] sm:$0xf]
      %v2638 = vld [vmem:[%s2636 + $0x4] sm:$0xf]
      %v2639 = vld [vmem:[%s2636 + $0x8] sm:$0xf]
      %v2640 = vld [vmem:[%s2636 + $0xc] sm:$0xf]
      %v2641 = vld [vmem:[%s2636 + $0x10] sm:$0xf]
      %v2642 = vld [vmem:[%s2636 + $0x14] sm:$0xf]
      %v2643 = vld [vmem:[%s2636 + $0x18] sm:$0xf]
      %v2644 = vld [vmem:[%s2636 + $0x1c] sm:$0xf]
      %v2645 = vld [vmem:[%s2636 + $0x20] sm:$0xf]
      %v2646 = vld [vmem:[%s2636 + $0x24] sm:$0xf]
      %v2647 = vld [vmem:[%s2636 + $0x28] sm:$0xf]
      %v2648 = vld [vmem:[%s2636 + $0x2c] sm:$0xf]
      %v2649 = vld [vmem:[%s2636 + $0x30] sm:$0xf]
      %v2650 = vld [vmem:[%s2636 + $0x34] sm:$0xf]
      %v2651 = vld [vmem:[%s2636 + $0x38] sm:$0xf]
      %v2652 = vld [vmem:[%s2636 + $0x3c] sm:$0xf]
      %v2654 = vunpack.c.l.b16 %v1538
      %v2655 = vsel %vm1630, %v1608, %v1607
      %v2656 = vsel %vm1632, %v1609, %v2655
      %v2657 = vsel %vm1634, %v1610, %v2656
      %v2658 = vsel %vm1636, %v1611, %v2657
      %v2659 = vsel %vm1638, %v1612, %v2658
      %v2660 = vsel %vm1640, %v1613, %v2659
      %v2661 = vsel %vm1642, %v1614, %v2660
      %v2662 = vsel %vm1630, %v1616, %v1615
      %v2663 = vsel %vm1632, %v1617, %v2662
      %v2664 = vsel %vm1634, %v1618, %v2663
      %v2665 = vsel %vm1636, %v1619, %v2664
      %v2666 = vsel %vm1638, %v1620, %v2665
      %v2667 = vsel %vm1640, %v1621, %v2666
      %v2668 = vsel %vm1642, %v1622, %v2667
      %v2669 = vsel %vm1630, %v1624, %v1623
      %v2670 = vsel %vm1632, %v1625, %v2669
      %v2671 = vsel %vm1634, %v1626, %v2670
      %v2672 = vsel %vm1636, %v1627, %v2671
      %v2673 = vsel %vm1638, %v1628, %v2672
      %v2674 = vsel %vm1640, %v1629, %v2673
      %v2675 = vsel %vm1642, %v1909, %v2674
      %v2676 = vsel %vm1630, %v2207, %v2058
      %v2677 = vsel %vm1632, %v2356, %v2676
      %v2678 = vsel %vm1634, %v2505, %v2677
      %v2679 = vsel %vm1636, %v2654, %v2678
      %v2680 = vpack.c.b16 %v2668, %v2661
      %v2681 = vpack.c.b16 %v2679, %v2675
      %v2700 = vunpack.c.l.b16 %v2637
      %v2701 = vunpack.c.l.b16 %v2638
      %v2702 = vunpack.c.l.b16 %v2639
      %v2703 = vunpack.c.l.b16 %v2640
      %v2704 = vunpack.c.l.b16 %v2641
      %v2705 = vunpack.c.l.b16 %v2642
      %v2706 = vunpack.c.l.b16 %v2643
      %v2707 = vunpack.c.l.b16 %v2644
      %v2708 = vunpack.c.l.b16 %v2645
      %v2709 = vunpack.c.l.b16 %v2646
      %v2710 = vunpack.c.l.b16 %v2647
      %v2711 = vunpack.c.l.b16 %v2648
      %v2712 = vunpack.c.l.b16 %v2649
      %v2713 = vunpack.c.l.b16 %v2650
      %v2714 = vunpack.c.l.b16 %v2651
      %v2715 = vunpack.c.l.b16 %v2652
      %v2716 = vpack.c.b16 %v2701, %v2700
      %v2717 = vpack.c.b16 %v2703, %v2702
      %v2718 = vpack.c.b16 %v2705, %v2704
      %v2719 = vpack.c.b16 %v2707, %v2706
      %v2720 = vpack.c.b16 %v2709, %v2708
      %v2721 = vpack.c.b16 %v2711, %v2710
      %v2722 = vpack.c.b16 %v2713, %v2712
      %v2723 = vpack.c.b16 %v2715, %v2714
      %2732 = vmatprep.subr.bf16.mxu0 0
      %2733 = vmatpush1.bf16.msra.mxu0 %v2716
      %2734 = vmatprep.subr.bf16.mxu0 0
      %2735 = vmatpush1.bf16.msra.mxu0 %v2717
      %2736 = vmatprep.subr.bf16.mxu0 0
      %2737 = vmatpush1.bf16.msra.mxu0 %v2718
      %2738 = vmatprep.subr.bf16.mxu0 0
      %2739 = vmatpush1.bf16.msra.mxu0 %v2719
      %2740 = vmatprep.subr.bf16.mxu0 0
      %2741 = vmatpush1.bf16.msra.mxu0 %v2720
      %2742 = vmatprep.subr.bf16.mxu0 0
      %2743 = vmatpush1.bf16.msra.mxu0 %v2721
      %2744 = vmatprep.subr.bf16.mxu0 0
      %2745 = vmatpush1.bf16.msra.mxu0 %v2722
      %2746 = vmatprep.subr.bf16.mxu0 0
      %2747 = vmatpush1.bf16.msra.mxu0 %v2723
      %2748 = vmatprep.subr.bf16.mxu0 0
      %2749 = vmatpush1.bf16.msra.mxu0 0
      %2750 = vmatprep.subr.bf16.mxu0 0
      %2751 = vmatpush1.bf16.msra.mxu0 0
      %2752 = vmatprep.subr.bf16.mxu0 0
      %2753 = vmatpush1.bf16.msra.mxu0 0
      %2754 = vmatprep.subr.bf16.mxu0 0
      %2755 = vmatpush1.bf16.msra.mxu0 0
      %2756 = vmatprep.subr.bf16.mxu0 0
      %2757 = vmatpush1.bf16.msra.mxu0 0
      %2758 = vmatprep.subr.bf16.mxu0 0
      %2759 = vmatpush1.bf16.msra.mxu0 0
      %2760 = vmatprep.subr.bf16.mxu0 0
      %2761 = vmatpush1.bf16.msra.mxu0 0
      %2762 = vmatprep.subr.bf16.mxu0 0
      %2763 = vmatpush1.bf16.msra.mxu0 0
      %2764 = vmatprep.mubr.bf16.mxu0 0
      %2765 = vmatmul.mubr.bf16.gmra.mrb[0].mxu0 %v2680
      %v2766 = vpop.f32.mrb[0].mxu0
      %v2767 = vadd.f32 0.0, %v2766
      %v2768 = vpop.f32.mrb[0].mxu0
      %v2769 = vpop.f32.mrb[0].mxu0
      %v2770 = vadd.f32 0.0, %v2769
      %v2771 = vpop.f32.mrb[0].mxu0
      %2772 = vmatprep.mubr.bf16.mxu0 0
      %2773 = vmatmul.mubr.bf16.gmra.mrb[0].mxu0 %v2681
      %v2774 = vpop.f32.mrb[0].mxu0
      %v2775 = vadd.f32 0.0, %v2774
      %v2776 = vpop.f32.mrb[0].mxu0
      %v2777 = vpop.f32.mrb[0].mxu0
      %v2778 = vadd.f32 0.0, %v2777
      %v2779 = vpop.f32.mrb[0].mxu0
      %2780 = vdwg.mxu0
      %v2781 = vadd.f32 %v2632, %v2767
      %v2782 = vadd.f32 %v2633, %v2770
      %v2783 = vadd.f32 %v2634, %v2775
      %v2784 = vadd.f32 %v2635, %v2778
      %v2785 = vld [vmem:[%s6 + $0x1] sm:$0x1]
      %v2786 = vlaneseq
      %v2787 = vshrl.u32 %v2786, 7
      %v2788 = vsub.s32 0, %v2787
      %v2789 = vrot.slane %v2785, %v2788
      %v2790 = vadd.f32 %v2781, %v2789
      %v2791 = vadd.f32 %v2782, %v2789
      %v2792 = vadd.f32 %v2783, %v2789
      %v2793 = vadd.f32 %v2784, %v2789
      %v2794 = vmax.f32 %v2790, 0.0
      %v2795 = vmax.f32 %v2791, 0.0
      %v2796 = vmax.f32 %v2792, 0.0
      %v2797 = vmax.f32 %v2793, 0.0
      %v2798 = vpack.c.bf16 %v2795, %v2794
      %v2799 = vpack.c.bf16 %v2797, %v2796
      %v2800 = vld [vmem:[%s4] sm:$0xf]
      %v2801 = vld [vmem:[%s4 + $0x4] sm:$0xf]
      %v2802 = vld [vmem:[%s4 + $0x8] sm:$0xf]
      %v2803 = vld [vmem:[%s4 + $0xc] sm:$0xf]
      %v2804 = vld [vmem:[%s4 + $0x10] sm:$0xf]
      %v2805 = vld [vmem:[%s4 + $0x14] sm:$0xf]
      %v2806 = vld [vmem:[%s4 + $0x18] sm:$0xf]
      %v2807 = vld [vmem:[%s4 + $0x1c] sm:$0xf]
      %v2808 = vld [vmem:[%s4 + $0x20] sm:$0xf]
      %v2809 = vld [vmem:[%s4 + $0x24] sm:$0xf]
      %v2810 = vld [vmem:[%s4 + $0x28] sm:$0xf]
      %v2811 = vld [vmem:[%s4 + $0x2c] sm:$0xf]
      %v2812 = vld [vmem:[%s4 + $0x30] sm:$0xf]
      %v2813 = vld [vmem:[%s4 + $0x34] sm:$0xf]
      %v2814 = vld [vmem:[%s4 + $0x38] sm:$0xf]
      %v2815 = vld [vmem:[%s4 + $0x3c] sm:$0xf]
      %s2816 = scalar_lea.vmem %s4, 64
      %v2817 = vld [vmem:[%s2816] sm:$0xf]
      %v2818 = vld [vmem:[%s2816 + $0x4] sm:$0xf]
      %v2819 = vld [vmem:[%s2816 + $0x8] sm:$0xf]
      %v2820 = vld [vmem:[%s2816 + $0xc] sm:$0xf]
      %v2821 = vld [vmem:[%s2816 + $0x10] sm:$0xf]
      %v2822 = vld [vmem:[%s2816 + $0x14] sm:$0xf]
      %v2823 = vld [vmem:[%s2816 + $0x18] sm:$0xf]
      %v2824 = vld [vmem:[%s2816 + $0x1c] sm:$0xf]
      %v2825 = vld [vmem:[%s2816 + $0x20] sm:$0xf]
      %v2826 = vld [vmem:[%s2816 + $0x24] sm:$0xf]
      %v2827 = vld [vmem:[%s2816 + $0x28] sm:$0xf]
      %v2828 = vld [vmem:[%s2816 + $0x2c] sm:$0xf]
      %v2829 = vld [vmem:[%s2816 + $0x30] sm:$0xf]
      %v2830 = vld [vmem:[%s2816 + $0x34] sm:$0xf]
      %v2831 = vld [vmem:[%s2816 + $0x38] sm:$0xf]
      %v2832 = vld [vmem:[%s2816 + $0x3c] sm:$0xf]
      %v2834 = vshrl.u32 %v2798, 16
      %v2836 = vshll.u32 %v2798, 16
      %v2838 = vrot.slane %v2836, 1
      %v2839 = vor.u32 %v2834, %v2838
      %v2841 = vshll.u32 %v2799, 16
      %v2843 = vrot.slane %v2841, 1
      %v2844 = vsel %vm575, %v2839, %v2843
      %v2845 = vshrl.u32 %v2799, 16
      %v2847 = vor.u32 %v2845, %v2843
      %v2866 = vunpack.c.l.b16 %v2817
      %v2867 = vunpack.c.l.b16 %v2818
      %v2868 = vunpack.c.l.b16 %v2819
      %v2869 = vunpack.c.l.b16 %v2820
      %v2870 = vunpack.c.l.b16 %v2821
      %v2871 = vunpack.c.l.b16 %v2822
      %v2872 = vunpack.c.l.b16 %v2823
      %v2873 = vunpack.c.l.b16 %v2824
      %v2874 = vunpack.c.l.b16 %v2825
      %v2875 = vunpack.c.l.b16 %v2826
      %v2876 = vunpack.c.l.b16 %v2827
      %v2877 = vunpack.c.l.b16 %v2828
      %v2878 = vunpack.c.l.b16 %v2829
      %v2879 = vunpack.c.l.b16 %v2830
      %v2880 = vunpack.c.l.b16 %v2831
      %v2881 = vunpack.c.l.b16 %v2832
      %v2882 = vpack.c.b16 %v2867, %v2866
      %v2883 = vpack.c.b16 %v2869, %v2868
      %v2884 = vpack.c.b16 %v2871, %v2870
      %v2885 = vpack.c.b16 %v2873, %v2872
      %v2886 = vpack.c.b16 %v2875, %v2874
      %v2887 = vpack.c.b16 %v2877, %v2876
      %v2888 = vpack.c.b16 %v2879, %v2878
      %v2889 = vpack.c.b16 %v2881, %v2880
      %2898 = vmatprep.subr.bf16.mxu0 0
      %2899 = vmatpush1.bf16.msra.mxu0 %v2882
      %2900 = vmatprep.subr.bf16.mxu0 0
      %2901 = vmatpush1.bf16.msra.mxu0 %v2883
      %2902 = vmatprep.subr.bf16.mxu0 0
      %2903 = vmatpush1.bf16.msra.mxu0 %v2884
      %2904 = vmatprep.subr.bf16.mxu0 0
      %2905 = vmatpush1.bf16.msra.mxu0 %v2885
      %2906 = vmatprep.subr.bf16.mxu0 0
      %2907 = vmatpush1.bf16.msra.mxu0 %v2886
      %2908 = vmatprep.subr.bf16.mxu0 0
      %2909 = vmatpush1.bf16.msra.mxu0 %v2887
      %2910 = vmatprep.subr.bf16.mxu0 0
      %2911 = vmatpush1.bf16.msra.mxu0 %v2888
      %2912 = vmatprep.subr.bf16.mxu0 0
      %2913 = vmatpush1.bf16.msra.mxu0 %v2889
      %2914 = vmatprep.subr.bf16.mxu0 0
      %2915 = vmatpush1.bf16.msra.mxu0 0
      %2916 = vmatprep.subr.bf16.mxu0 0
      %2917 = vmatpush1.bf16.msra.mxu0 0
      %2918 = vmatprep.subr.bf16.mxu0 0
      %2919 = vmatpush1.bf16.msra.mxu0 0
      %2920 = vmatprep.subr.bf16.mxu0 0
      %2921 = vmatpush1.bf16.msra.mxu0 0
      %2922 = vmatprep.subr.bf16.mxu0 0
      %2923 = vmatpush1.bf16.msra.mxu0 0
      %2924 = vmatprep.subr.bf16.mxu0 0
      %2925 = vmatpush1.bf16.msra.mxu0 0
      %2926 = vmatprep.subr.bf16.mxu0 0
      %2927 = vmatpush1.bf16.msra.mxu0 0
      %2928 = vmatprep.subr.bf16.mxu0 0
      %2929 = vmatpush1.bf16.msra.mxu0 0
      %2930 = vmatprep.mubr.bf16.mxu0 0
      %2931 = vmatmul.mubr.bf16.gmra.mrb[0].mxu0 %v2844
      %v2932 = vpop.f32.mrb[0].mxu0
      %v2933 = vadd.f32 0.0, %v2932
      %v2934 = vpop.f32.mrb[0].mxu0
      %v2935 = vpop.f32.mrb[0].mxu0
      %v2936 = vadd.f32 0.0, %v2935
      %v2937 = vpop.f32.mrb[0].mxu0
      %2938 = vmatprep.mubr.bf16.mxu0 0
      %2939 = vmatmul.mubr.bf16.gmra.mrb[0].mxu0 %v2847
      %v2940 = vpop.f32.mrb[0].mxu0
      %v2941 = vadd.f32 0.0, %v2940
      %v2942 = vpop.f32.mrb[0].mxu0
      %v2943 = vpop.f32.mrb[0].mxu0
      %v2944 = vpop.f32.mrb[0].mxu0
      %2945 = vdwg.mxu0
      %v2962 = vunpack.c.l.b16 %v2800
      %v2963 = vunpack.c.l.b16 %v2801
      %v2964 = vunpack.c.l.b16 %v2802
      %v2965 = vunpack.c.l.b16 %v2803
      %v2966 = vunpack.c.l.b16 %v2804
      %v2967 = vunpack.c.l.b16 %v2805
      %v2968 = vunpack.c.l.b16 %v2806
      %v2969 = vunpack.c.l.b16 %v2807
      %v2970 = vunpack.c.l.b16 %v2808
      %v2971 = vunpack.c.l.b16 %v2809
      %v2972 = vunpack.c.l.b16 %v2810
      %v2973 = vunpack.c.l.b16 %v2811
      %v2974 = vunpack.c.l.b16 %v2812
      %v2975 = vunpack.c.l.b16 %v2813
      %v2976 = vunpack.c.l.b16 %v2814
      %v2977 = vunpack.c.l.b16 %v2815
      %v2978 = vpack.c.b16 %v2963, %v2962
      %v2979 = vpack.c.b16 %v2965, %v2964
      %v2980 = vpack.c.b16 %v2967, %v2966
      %v2981 = vpack.c.b16 %v2969, %v2968
      %v2982 = vpack.c.b16 %v2971, %v2970
      %v2983 = vpack.c.b16 %v2973, %v2972
      %v2984 = vpack.c.b16 %v2975, %v2974
      %v2985 = vpack.c.b16 %v2977, %v2976
      %2994 = vmatprep.subr.bf16.mxu0 0
      %2995 = vmatpush1.bf16.msra.mxu0 %v2978
      %2996 = vmatprep.subr.bf16.mxu0 0
      %2997 = vmatpush1.bf16.msra.mxu0 %v2979
      %2998 = vmatprep.subr.bf16.mxu0 0
      %2999 = vmatpush1.bf16.msra.mxu0 %v2980
      %3000 = vmatprep.subr.bf16.mxu0 0
      %3001 = vmatpush1.bf16.msra.mxu0 %v2981
      %3002 = vmatprep.subr.bf16.mxu0 0
      %3003 = vmatpush1.bf16.msra.mxu0 %v2982
      %3004 = vmatprep.subr.bf16.mxu0 0
      %3005 = vmatpush1.bf16.msra.mxu0 %v2983
      %3006 = vmatprep.subr.bf16.mxu0 0
      %3007 = vmatpush1.bf16.msra.mxu0 %v2984
      %3008 = vmatprep.subr.bf16.mxu0 0
      %3009 = vmatpush1.bf16.msra.mxu0 %v2985
      %3010 = vmatprep.subr.bf16.mxu0 0
      %3011 = vmatpush1.bf16.msra.mxu0 0
      %3012 = vmatprep.subr.bf16.mxu0 0
      %3013 = vmatpush1.bf16.msra.mxu0 0
      %3014 = vmatprep.subr.bf16.mxu0 0
      %3015 = vmatpush1.bf16.msra.mxu0 0
      %3016 = vmatprep.subr.bf16.mxu0 0
      %3017 = vmatpush1.bf16.msra.mxu0 0
      %3018 = vmatprep.subr.bf16.mxu0 0
      %3019 = vmatpush1.bf16.msra.mxu0 0
      %3020 = vmatprep.subr.bf16.mxu0 0
      %3021 = vmatpush1.bf16.msra.mxu0 0
      %3022 = vmatprep.subr.bf16.mxu0 0
      %3023 = vmatpush1.bf16.msra.mxu0 0
      %3024 = vmatprep.subr.bf16.mxu0 0
      %3025 = vmatpush1.bf16.msra.mxu0 0
      %3026 = vmatprep.mubr.bf16.mxu0 0
      %3027 = vmatmul.mubr.bf16.gmra.mrb[0].mxu0 %v2798
      %v3028 = vpop.f32.mrb[0].mxu0
      %v3029 = vadd.f32 %v2933, %v3028
      %v3030 = vpop.f32.mrb[0].mxu0
      %v3031 = vpop.f32.mrb[0].mxu0
      %v3032 = vadd.f32 %v2936, %v3031
      %v3033 = vpop.f32.mrb[0].mxu0
      %3034 = vmatprep.mubr.bf16.mxu0 0
      %3035 = vmatmul.mubr.bf16.gmra.mrb[0].mxu0 %v2799
      %v3036 = vpop.f32.mrb[0].mxu0
      %v3037 = vadd.f32 %v2941, %v3036
      %v3038 = vpop.f32.mrb[0].mxu0
      %v3039 = vpop.f32.mrb[0].mxu0
      %v3040 = vpop.f32.mrb[0].mxu0
      %3041 = vdwg.mxu0
      %s3042 = scalar_lea.vmem %s4, 128
      %v3043 = vld [vmem:[%s3042] sm:$0xf]
      %v3044 = vld [vmem:[%s3042 + $0x4] sm:$0xf]
      %v3045 = vld [vmem:[%s3042 + $0x8] sm:$0xf]
      %v3046 = vld [vmem:[%s3042 + $0xc] sm:$0xf]
      %v3047 = vld [vmem:[%s3042 + $0x10] sm:$0xf]
      %v3048 = vld [vmem:[%s3042 + $0x14] sm:$0xf]
      %v3049 = vld [vmem:[%s3042 + $0x18] sm:$0xf]
      %v3050 = vld [vmem:[%s3042 + $0x1c] sm:$0xf]
      %v3051 = vld [vmem:[%s3042 + $0x20] sm:$0xf]
      %v3052 = vld [vmem:[%s3042 + $0x24] sm:$0xf]
      %v3053 = vld [vmem:[%s3042 + $0x28] sm:$0xf]
      %v3054 = vld [vmem:[%s3042 + $0x2c] sm:$0xf]
      %v3055 = vld [vmem:[%s3042 + $0x30] sm:$0xf]
      %v3056 = vld [vmem:[%s3042 + $0x34] sm:$0xf]
      %v3057 = vld [vmem:[%s3042 + $0x38] sm:$0xf]
      %v3058 = vld [vmem:[%s3042 + $0x3c] sm:$0xf]
      %vm3061 = vcmask 1046528
      %v3062 = vrot.slane %v2798, 1
      %v3063 = vrot.slane %v2799, 1
      %v3064 = vsel %vm3061, %v3062, %v3063
      %v3083 = vunpack.c.l.b16 %v3043
      %v3084 = vunpack.c.l.b16 %v3044
      %v3085 = vunpack.c.l.b16 %v3045
      %v3086 = vunpack.c.l.b16 %v3046
      %v3087 = vunpack.c.l.b16 %v3047
      %v3088 = vunpack.c.l.b16 %v3048
      %v3089 = vunpack.c.l.b16 %v3049
      %v3090 = vunpack.c.l.b16 %v3050
      %v3091 = vunpack.c.l.b16 %v3051
      %v3092 = vunpack.c.l.b16 %v3052
      %v3093 = vunpack.c.l.b16 %v3053
      %v3094 = vunpack.c.l.b16 %v3054
      %v3095 = vunpack.c.l.b16 %v3055
      %v3096 = vunpack.c.l.b16 %v3056
      %v3097 = vunpack.c.l.b16 %v3057
      %v3098 = vunpack.c.l.b16 %v3058
      %v3099 = vpack.c.b16 %v3084, %v3083
      %v3100 = vpack.c.b16 %v3086, %v3085
      %v3101 = vpack.c.b16 %v3088, %v3087
      %v3102 = vpack.c.b16 %v3090, %v3089
      %v3103 = vpack.c.b16 %v3092, %v3091
      %v3104 = vpack.c.b16 %v3094, %v3093
      %v3105 = vpack.c.b16 %v3096, %v3095
      %v3106 = vpack.c.b16 %v3098, %v3097
      %3115 = vmatprep.subr.bf16.mxu0 0
      %3116 = vmatpush1.bf16.msra.mxu0 %v3099
      %3117 = vmatprep.subr.bf16.mxu0 0
      %3118 = vmatpush1.bf16.msra.mxu0 %v3100
      %3119 = vmatprep.subr.bf16.mxu0 0
      %3120 = vmatpush1.bf16.msra.mxu0 %v3101
      %3121 = vmatprep.subr.bf16.mxu0 0
      %3122 = vmatpush1.bf16.msra.mxu0 %v3102
      %3123 = vmatprep.subr.bf16.mxu0 0
      %3124 = vmatpush1.bf16.msra.mxu0 %v3103
      %3125 = vmatprep.subr.bf16.mxu0 0
      %3126 = vmatpush1.bf16.msra.mxu0 %v3104
      %3127 = vmatprep.subr.bf16.mxu0 0
      %3128 = vmatpush1.bf16.msra.mxu0 %v3105
      %3129 = vmatprep.subr.bf16.mxu0 0
      %3130 = vmatpush1.bf16.msra.mxu0 %v3106
      %3131 = vmatprep.subr.bf16.mxu0 0
      %3132 = vmatpush1.bf16.msra.mxu0 0
      %3133 = vmatprep.subr.bf16.mxu0 0
      %3134 = vmatpush1.bf16.msra.mxu0 0
      %3135 = vmatprep.subr.bf16.mxu0 0
      %3136 = vmatpush1.bf16.msra.mxu0 0
      %3137 = vmatprep.subr.bf16.mxu0 0
      %3138 = vmatpush1.bf16.msra.mxu0 0
      %3139 = vmatprep.subr.bf16.mxu0 0
      %3140 = vmatpush1.bf16.msra.mxu0 0
      %3141 = vmatprep.subr.bf16.mxu0 0
      %3142 = vmatpush1.bf16.msra.mxu0 0
      %3143 = vmatprep.subr.bf16.mxu0 0
      %3144 = vmatpush1.bf16.msra.mxu0 0
      %3145 = vmatprep.subr.bf16.mxu0 0
      %3146 = vmatpush1.bf16.msra.mxu0 0
      %3147 = vmatprep.mubr.bf16.mxu0 0
      %3148 = vmatmul.mubr.bf16.gmra.mrb[0].mxu0 %v3064
      %v3149 = vpop.f32.mrb[0].mxu0
      %v3150 = vadd.f32 0.0, %v3149
      %v3151 = vpop.f32.mrb[0].mxu0
      %v3152 = vpop.f32.mrb[0].mxu0
      %v3153 = vadd.f32 0.0, %v3152
      %v3154 = vpop.f32.mrb[0].mxu0
      %3155 = vmatprep.mubr.bf16.mxu0 0
      %3156 = vmatmul.mubr.bf16.gmra.mrb[0].mxu0 %v3063
      %v3157 = vpop.f32.mrb[0].mxu0
      %v3158 = vadd.f32 0.0, %v3157
      %v3159 = vpop.f32.mrb[0].mxu0
      %v3160 = vpop.f32.mrb[0].mxu0
      %v3161 = vpop.f32.mrb[0].mxu0
      %3162 = vdwg.mxu0
      %v3163 = vadd.f32 %v3029, %v3150
      %v3164 = vadd.f32 %v3032, %v3153
      %v3165 = vadd.f32 %v3037, %v3158
      %s3166 = scalar_lea.vmem %s4, 192
      %v3167 = vld [vmem:[%s3166] sm:$0xf]
      %v3168 = vld [vmem:[%s3166 + $0x4] sm:$0xf]
      %v3169 = vld [vmem:[%s3166 + $0x8] sm:$0xf]
      %v3170 = vld [vmem:[%s3166 + $0xc] sm:$0xf]
      %v3171 = vld [vmem:[%s3166 + $0x10] sm:$0xf]
      %v3172 = vld [vmem:[%s3166 + $0x14] sm:$0xf]
      %v3173 = vld [vmem:[%s3166 + $0x18] sm:$0xf]
      %v3174 = vld [vmem:[%s3166 + $0x1c] sm:$0xf]
      %v3175 = vld [vmem:[%s3166 + $0x20] sm:$0xf]
      %v3176 = vld [vmem:[%s3166 + $0x24] sm:$0xf]
      %v3177 = vld [vmem:[%s3166 + $0x28] sm:$0xf]
      %v3178 = vld [vmem:[%s3166 + $0x2c] sm:$0xf]
      %v3179 = vld [vmem:[%s3166 + $0x30] sm:$0xf]
      %v3180 = vld [vmem:[%s3166 + $0x34] sm:$0xf]
      %v3181 = vld [vmem:[%s3166 + $0x38] sm:$0xf]
      %v3182 = vld [vmem:[%s3166 + $0x3c] sm:$0xf]
      %vm3183 = vsmask.f32 6400
      %v3184 = vrot.slane %v2834, 1
      %v3185 = vrot.slane %v2836, 2
      %v3186 = vor.u32 %v3184, %v3185
      %v3187 = vrot.slane %v2845, 1
      %v3188 = vrot.slane %v2841, 2
      %v3189 = vor.u32 %v3187, %v3188
      %v3190 = vsel %vm3183, %v3186, %v3189
      %v3209 = vunpack.c.l.b16 %v3167
      %v3210 = vunpack.c.l.b16 %v3168
      %v3211 = vunpack.c.l.b16 %v3169
      %v3212 = vunpack.c.l.b16 %v3170
      %v3213 = vunpack.c.l.b16 %v3171
      %v3214 = vunpack.c.l.b16 %v3172
      %v3215 = vunpack.c.l.b16 %v3173
      %v3216 = vunpack.c.l.b16 %v3174
      %v3217 = vunpack.c.l.b16 %v3175
      %v3218 = vunpack.c.l.b16 %v3176
      %v3219 = vunpack.c.l.b16 %v3177
      %v3220 = vunpack.c.l.b16 %v3178
      %v3221 = vunpack.c.l.b16 %v3179
      %v3222 = vunpack.c.l.b16 %v3180
      %v3223 = vunpack.c.l.b16 %v3181
      %v3224 = vunpack.c.l.b16 %v3182
      %v3225 = vpack.c.b16 %v3210, %v3209
      %v3226 = vpack.c.b16 %v3212, %v3211
      %v3227 = vpack.c.b16 %v3214, %v3213
      %v3228 = vpack.c.b16 %v3216, %v3215
      %v3229 = vpack.c.b16 %v3218, %v3217
      %v3230 = vpack.c.b16 %v3220, %v3219
      %v3231 = vpack.c.b16 %v3222, %v3221
      %v3232 = vpack.c.b16 %v3224, %v3223
      %3241 = vmatprep.subr.bf16.mxu0 0
      %3242 = vmatpush1.bf16.msra.mxu0 %v3225
      %3243 = vmatprep.subr.bf16.mxu0 0
      %3244 = vmatpush1.bf16.msra.mxu0 %v3226
      %3245 = vmatprep.subr.bf16.mxu0 0
      %3246 = vmatpush1.bf16.msra.mxu0 %v3227
      %3247 = vmatprep.subr.bf16.mxu0 0
      %3248 = vmatpush1.bf16.msra.mxu0 %v3228
      %3249 = vmatprep.subr.bf16.mxu0 0
      %3250 = vmatpush1.bf16.msra.mxu0 %v3229
      %3251 = vmatprep.subr.bf16.mxu0 0
      %3252 = vmatpush1.bf16.msra.mxu0 %v3230
      %3253 = vmatprep.subr.bf16.mxu0 0
      %3254 = vmatpush1.bf16.msra.mxu0 %v3231
      %3255 = vmatprep.subr.bf16.mxu0 0
      %3256 = vmatpush1.bf16.msra.mxu0 %v3232
      %3257 = vmatprep.subr.bf16.mxu0 0
      %3258 = vmatpush1.bf16.msra.mxu0 0
      %3259 = vmatprep.subr.bf16.mxu0 0
      %3260 = vmatpush1.bf16.msra.mxu0 0
      %3261 = vmatprep.subr.bf16.mxu0 0
      %3262 = vmatpush1.bf16.msra.mxu0 0
      %3263 = vmatprep.subr.bf16.mxu0 0
      %3264 = vmatpush1.bf16.msra.mxu0 0
      %3265 = vmatprep.subr.bf16.mxu0 0
      %3266 = vmatpush1.bf16.msra.mxu0 0
      %3267 = vmatprep.subr.bf16.mxu0 0
      %3268 = vmatpush1.bf16.msra.mxu0 0
      %3269 = vmatprep.subr.bf16.mxu0 0
      %3270 = vmatpush1.bf16.msra.mxu0 0
      %3271 = vmatprep.subr.bf16.mxu0 0
      %3272 = vmatpush1.bf16.msra.mxu0 0
      %3273 = vmatprep.mubr.bf16.mxu0 0
      %3274 = vmatmul.mubr.bf16.gmra.mrb[0].mxu0 %v3190
      %v3275 = vpop.f32.mrb[0].mxu0
      %v3276 = vadd.f32 0.0, %v3275
      %v3277 = vpop.f32.mrb[0].mxu0
      %v3278 = vpop.f32.mrb[0].mxu0
      %v3279 = vadd.f32 0.0, %v3278
      %v3280 = vpop.f32.mrb[0].mxu0
      %3281 = vmatprep.mubr.bf16.mxu0 0
      %3282 = vmatmul.mubr.bf16.gmra.mrb[0].mxu0 %v3189
      %v3283 = vpop.f32.mrb[0].mxu0
      %v3284 = vadd.f32 0.0, %v3283
      %v3285 = vpop.f32.mrb[0].mxu0
      %v3286 = vpop.f32.mrb[0].mxu0
      %v3287 = vpop.f32.mrb[0].mxu0
      %3288 = vdwg.mxu0
      %v3289 = vadd.f32 %v3163, %v3276
      %v3290 = vadd.f32 %v3164, %v3279
      %v3291 = vadd.f32 %v3165, %v3284
      %s3292 = scalar_lea.vmem %s4, 256
      %v3293 = vld [vmem:[%s3292] sm:$0xf]
      %v3294 = vld [vmem:[%s3292 + $0x4] sm:$0xf]
      %v3295 = vld [vmem:[%s3292 + $0x8] sm:$0xf]
      %v3296 = vld [vmem:[%s3292 + $0xc] sm:$0xf]
      %v3297 = vld [vmem:[%s3292 + $0x10] sm:$0xf]
      %v3298 = vld [vmem:[%s3292 + $0x14] sm:$0xf]
      %v3299 = vld [vmem:[%s3292 + $0x18] sm:$0xf]
      %v3300 = vld [vmem:[%s3292 + $0x1c] sm:$0xf]
      %v3301 = vld [vmem:[%s3292 + $0x20] sm:$0xf]
      %v3302 = vld [vmem:[%s3292 + $0x24] sm:$0xf]
      %v3303 = vld [vmem:[%s3292 + $0x28] sm:$0xf]
      %v3304 = vld [vmem:[%s3292 + $0x2c] sm:$0xf]
      %v3305 = vld [vmem:[%s3292 + $0x30] sm:$0xf]
      %v3306 = vld [vmem:[%s3292 + $0x34] sm:$0xf]
      %v3307 = vld [vmem:[%s3292 + $0x38] sm:$0xf]
      %v3308 = vld [vmem:[%s3292 + $0x3c] sm:$0xf]
      %vm3309 = vcmask 1045504
      %v3310 = vrot.slane %v2798, 2
      %v3311 = vrot.slane %v2799, 2
      %v3312 = vsel %vm3309, %v3310, %v3311
      %v3331 = vunpack.c.l.b16 %v3293
      %v3332 = vunpack.c.l.b16 %v3294
      %v3333 = vunpack.c.l.b16 %v3295
      %v3334 = vunpack.c.l.b16 %v3296
      %v3335 = vunpack.c.l.b16 %v3297
      %v3336 = vunpack.c.l.b16 %v3298
      %v3337 = vunpack.c.l.b16 %v3299
      %v3338 = vunpack.c.l.b16 %v3300
      %v3339 = vunpack.c.l.b16 %v3301
      %v3340 = vunpack.c.l.b16 %v3302
      %v3341 = vunpack.c.l.b16 %v3303
      %v3342 = vunpack.c.l.b16 %v3304
      %v3343 = vunpack.c.l.b16 %v3305
      %v3344 = vunpack.c.l.b16 %v3306
      %v3345 = vunpack.c.l.b16 %v3307
      %v3346 = vunpack.c.l.b16 %v3308
      %v3347 = vpack.c.b16 %v3332, %v3331
      %v3348 = vpack.c.b16 %v3334, %v3333
      %v3349 = vpack.c.b16 %v3336, %v3335
      %v3350 = vpack.c.b16 %v3338, %v3337
      %v3351 = vpack.c.b16 %v3340, %v3339
      %v3352 = vpack.c.b16 %v3342, %v3341
      %v3353 = vpack.c.b16 %v3344, %v3343
      %v3354 = vpack.c.b16 %v3346, %v3345
      %3363 = vmatprep.subr.bf16.mxu0 0
      %3364 = vmatpush1.bf16.msra.mxu0 %v3347
      %3365 = vmatprep.subr.bf16.mxu0 0
      %3366 = vmatpush1.bf16.msra.mxu0 %v3348
      %3367 = vmatprep.subr.bf16.mxu0 0
      %3368 = vmatpush1.bf16.msra.mxu0 %v3349
      %3369 = vmatprep.subr.bf16.mxu0 0
      %3370 = vmatpush1.bf16.msra.mxu0 %v3350
      %3371 = vmatprep.subr.bf16.mxu0 0
      %3372 = vmatpush1.bf16.msra.mxu0 %v3351
      %3373 = vmatprep.subr.bf16.mxu0 0
      %3374 = vmatpush1.bf16.msra.mxu0 %v3352
      %3375 = vmatprep.subr.bf16.mxu0 0
      %3376 = vmatpush1.bf16.msra.mxu0 %v3353
      %3377 = vmatprep.subr.bf16.mxu0 0
      %3378 = vmatpush1.bf16.msra.mxu0 %v3354
      %3379 = vmatprep.subr.bf16.mxu0 0
      %3380 = vmatpush1.bf16.msra.mxu0 0
      %3381 = vmatprep.subr.bf16.mxu0 0
      %3382 = vmatpush1.bf16.msra.mxu0 0
      %3383 = vmatprep.subr.bf16.mxu0 0
      %3384 = vmatpush1.bf16.msra.mxu0 0
      %3385 = vmatprep.subr.bf16.mxu0 0
      %3386 = vmatpush1.bf16.msra.mxu0 0
      %3387 = vmatprep.subr.bf16.mxu0 0
      %3388 = vmatpush1.bf16.msra.mxu0 0
      %3389 = vmatprep.subr.bf16.mxu0 0
      %3390 = vmatpush1.bf16.msra.mxu0 0
      %3391 = vmatprep.subr.bf16.mxu0 0
      %3392 = vmatpush1.bf16.msra.mxu0 0
      %3393 = vmatprep.subr.bf16.mxu0 0
      %3394 = vmatpush1.bf16.msra.mxu0 0
      %3395 = vmatprep.mubr.bf16.mxu0 0
      %3396 = vmatmul.mubr.bf16.gmra.mrb[0].mxu0 %v3312
      %v3397 = vpop.f32.mrb[0].mxu0
      %v3398 = vadd.f32 0.0, %v3397
      %v3399 = vpop.f32.mrb[0].mxu0
      %v3400 = vpop.f32.mrb[0].mxu0
      %v3401 = vadd.f32 0.0, %v3400
      %v3402 = vpop.f32.mrb[0].mxu0
      %3403 = vmatprep.mubr.bf16.mxu0 0
      %3404 = vmatmul.mubr.bf16.gmra.mrb[0].mxu0 %v3311
      %v3405 = vpop.f32.mrb[0].mxu0
      %v3406 = vadd.f32 0.0, %v3405
      %v3407 = vpop.f32.mrb[0].mxu0
      %v3408 = vpop.f32.mrb[0].mxu0
      %v3409 = vpop.f32.mrb[0].mxu0
      %3410 = vdwg.mxu0
      %v3411 = vadd.f32 %v3289, %v3398
      %v3412 = vadd.f32 %v3290, %v3401
      %v3413 = vadd.f32 %v3291, %v3406
      %s3414 = scalar_lea.vmem %s4, 320
      %v3415 = vld [vmem:[%s3414] sm:$0xf]
      %v3416 = vld [vmem:[%s3414 + $0x4] sm:$0xf]
      %v3417 = vld [vmem:[%s3414 + $0x8] sm:$0xf]
      %v3418 = vld [vmem:[%s3414 + $0xc] sm:$0xf]
      %v3419 = vld [vmem:[%s3414 + $0x10] sm:$0xf]
      %v3420 = vld [vmem:[%s3414 + $0x14] sm:$0xf]
      %v3421 = vld [vmem:[%s3414 + $0x18] sm:$0xf]
      %v3422 = vld [vmem:[%s3414 + $0x1c] sm:$0xf]
      %v3423 = vld [vmem:[%s3414 + $0x20] sm:$0xf]
      %v3424 = vld [vmem:[%s3414 + $0x24] sm:$0xf]
      %v3425 = vld [vmem:[%s3414 + $0x28] sm:$0xf]
      %v3426 = vld [vmem:[%s3414 + $0x2c] sm:$0xf]
      %v3427 = vld [vmem:[%s3414 + $0x30] sm:$0xf]
      %v3428 = vld [vmem:[%s3414 + $0x34] sm:$0xf]
      %v3429 = vld [vmem:[%s3414 + $0x38] sm:$0xf]
      %v3430 = vld [vmem:[%s3414 + $0x3c] sm:$0xf]
      %vm3431 = vsmask.f32 5376
      %v3432 = vrot.slane %v2834, 2
      %v3433 = vrot.slane %v2836, 3
      %v3434 = vor.u32 %v3432, %v3433
      %v3435 = vrot.slane %v2845, 2
      %v3436 = vrot.slane %v2841, 3
      %v3437 = vor.u32 %v3435, %v3436
      %v3438 = vsel %vm3431, %v3434, %v3437
      %v3457 = vunpack.c.l.b16 %v3415
      %v3458 = vunpack.c.l.b16 %v3416
      %v3459 = vunpack.c.l.b16 %v3417
      %v3460 = vunpack.c.l.b16 %v3418
      %v3461 = vunpack.c.l.b16 %v3419
      %v3462 = vunpack.c.l.b16 %v3420
      %v3463 = vunpack.c.l.b16 %v3421
      %v3464 = vunpack.c.l.b16 %v3422
      %v3465 = vunpack.c.l.b16 %v3423
      %v3466 = vunpack.c.l.b16 %v3424
      %v3467 = vunpack.c.l.b16 %v3425
      %v3468 = vunpack.c.l.b16 %v3426
      %v3469 = vunpack.c.l.b16 %v3427
      %v3470 = vunpack.c.l.b16 %v3428
      %v3471 = vunpack.c.l.b16 %v3429
      %v3472 = vunpack.c.l.b16 %v3430
      %v3473 = vpack.c.b16 %v3458, %v3457
      %v3474 = vpack.c.b16 %v3460, %v3459
      %v3475 = vpack.c.b16 %v3462, %v3461
      %v3476 = vpack.c.b16 %v3464, %v3463
      %v3477 = vpack.c.b16 %v3466, %v3465
      %v3478 = vpack.c.b16 %v3468, %v3467
      %v3479 = vpack.c.b16 %v3470, %v3469
      %v3480 = vpack.c.b16 %v3472, %v3471
      %3489 = vmatprep.subr.bf16.mxu0 0
      %3490 = vmatpush1.bf16.msra.mxu0 %v3473
      %3491 = vmatprep.subr.bf16.mxu0 0
      %3492 = vmatpush1.bf16.msra.mxu0 %v3474
      %3493 = vmatprep.subr.bf16.mxu0 0
      %3494 = vmatpush1.bf16.msra.mxu0 %v3475
      %3495 = vmatprep.subr.bf16.mxu0 0
      %3496 = vmatpush1.bf16.msra.mxu0 %v3476
      %3497 = vmatprep.subr.bf16.mxu0 0
      %3498 = vmatpush1.bf16.msra.mxu0 %v3477
      %3499 = vmatprep.subr.bf16.mxu0 0
      %3500 = vmatpush1.bf16.msra.mxu0 %v3478
      %3501 = vmatprep.subr.bf16.mxu0 0
      %3502 = vmatpush1.bf16.msra.mxu0 %v3479
      %3503 = vmatprep.subr.bf16.mxu0 0
      %3504 = vmatpush1.bf16.msra.mxu0 %v3480
      %3505 = vmatprep.subr.bf16.mxu0 0
      %3506 = vmatpush1.bf16.msra.mxu0 0
      %3507 = vmatprep.subr.bf16.mxu0 0
      %3508 = vmatpush1.bf16.msra.mxu0 0
      %3509 = vmatprep.subr.bf16.mxu0 0
      %3510 = vmatpush1.bf16.msra.mxu0 0
      %3511 = vmatprep.subr.bf16.mxu0 0
      %3512 = vmatpush1.bf16.msra.mxu0 0
      %3513 = vmatprep.subr.bf16.mxu0 0
      %3514 = vmatpush1.bf16.msra.mxu0 0
      %3515 = vmatprep.subr.bf16.mxu0 0
      %3516 = vmatpush1.bf16.msra.mxu0 0
      %3517 = vmatprep.subr.bf16.mxu0 0
      %3518 = vmatpush1.bf16.msra.mxu0 0
      %3519 = vmatprep.subr.bf16.mxu0 0
      %3520 = vmatpush1.bf16.msra.mxu0 0
      %3521 = vmatprep.mubr.bf16.mxu0 0
      %3522 = vmatmul.mubr.bf16.gmra.mrb[0].mxu0 %v3438
      %v3523 = vpop.f32.mrb[0].mxu0
      %v3524 = vadd.f32 0.0, %v3523
      %v3525 = vpop.f32.mrb[0].mxu0
      %v3526 = vpop.f32.mrb[0].mxu0
      %v3527 = vadd.f32 0.0, %v3526
      %v3528 = vpop.f32.mrb[0].mxu0
      %3529 = vmatprep.mubr.bf16.mxu0 0
      %3530 = vmatmul.mubr.bf16.gmra.mrb[0].mxu0 %v3437
      %v3531 = vpop.f32.mrb[0].mxu0
      %v3532 = vadd.f32 0.0, %v3531
      %v3533 = vpop.f32.mrb[0].mxu0
      %v3534 = vpop.f32.mrb[0].mxu0
      %v3535 = vpop.f32.mrb[0].mxu0
      %3536 = vdwg.mxu0
      %v3537 = vadd.f32 %v3411, %v3524
      %v3538 = vadd.f32 %v3412, %v3527
      %v3539 = vadd.f32 %v3413, %v3532
      %s3540 = scalar_lea.vmem %s4, 384
      %v3541 = vld [vmem:[%s3540] sm:$0xf]
      %v3542 = vld [vmem:[%s3540 + $0x4] sm:$0xf]
      %v3543 = vld [vmem:[%s3540 + $0x8] sm:$0xf]
      %v3544 = vld [vmem:[%s3540 + $0xc] sm:$0xf]
      %v3545 = vld [vmem:[%s3540 + $0x10] sm:$0xf]
      %v3546 = vld [vmem:[%s3540 + $0x14] sm:$0xf]
      %v3547 = vld [vmem:[%s3540 + $0x18] sm:$0xf]
      %v3548 = vld [vmem:[%s3540 + $0x1c] sm:$0xf]
      %v3549 = vld [vmem:[%s3540 + $0x20] sm:$0xf]
      %v3550 = vld [vmem:[%s3540 + $0x24] sm:$0xf]
      %v3551 = vld [vmem:[%s3540 + $0x28] sm:$0xf]
      %v3552 = vld [vmem:[%s3540 + $0x2c] sm:$0xf]
      %v3553 = vld [vmem:[%s3540 + $0x30] sm:$0xf]
      %v3554 = vld [vmem:[%s3540 + $0x34] sm:$0xf]
      %v3555 = vld [vmem:[%s3540 + $0x38] sm:$0xf]
      %v3556 = vld [vmem:[%s3540 + $0x3c] sm:$0xf]
      %vm3557 = vcmask 1044480
      %v3558 = vrot.slane %v2798, 3
      %v3559 = vrot.slane %v2799, 3
      %v3560 = vsel %vm3557, %v3558, %v3559
      %v3579 = vunpack.c.l.b16 %v3541
      %v3580 = vunpack.c.l.b16 %v3542
      %v3581 = vunpack.c.l.b16 %v3543
      %v3582 = vunpack.c.l.b16 %v3544
      %v3583 = vunpack.c.l.b16 %v3545
      %v3584 = vunpack.c.l.b16 %v3546
      %v3585 = vunpack.c.l.b16 %v3547
      %v3586 = vunpack.c.l.b16 %v3548
      %v3587 = vunpack.c.l.b16 %v3549
      %v3588 = vunpack.c.l.b16 %v3550
      %v3589 = vunpack.c.l.b16 %v3551
      %v3590 = vunpack.c.l.b16 %v3552
      %v3591 = vunpack.c.l.b16 %v3553
      %v3592 = vunpack.c.l.b16 %v3554
      %v3593 = vunpack.c.l.b16 %v3555
      %v3594 = vunpack.c.l.b16 %v3556
      %v3595 = vpack.c.b16 %v3580, %v3579
      %v3596 = vpack.c.b16 %v3582, %v3581
      %v3597 = vpack.c.b16 %v3584, %v3583
      %v3598 = vpack.c.b16 %v3586, %v3585
      %v3599 = vpack.c.b16 %v3588, %v3587
      %v3600 = vpack.c.b16 %v3590, %v3589
      %v3601 = vpack.c.b16 %v3592, %v3591
      %v3602 = vpack.c.b16 %v3594, %v3593
      %3611 = vmatprep.subr.bf16.mxu0 0
      %3612 = vmatpush1.bf16.msra.mxu0 %v3595
      %3613 = vmatprep.subr.bf16.mxu0 0
      %3614 = vmatpush1.bf16.msra.mxu0 %v3596
      %3615 = vmatprep.subr.bf16.mxu0 0
      %3616 = vmatpush1.bf16.msra.mxu0 %v3597
      %3617 = vmatprep.subr.bf16.mxu0 0
      %3618 = vmatpush1.bf16.msra.mxu0 %v3598
      %3619 = vmatprep.subr.bf16.mxu0 0
      %3620 = vmatpush1.bf16.msra.mxu0 %v3599
      %3621 = vmatprep.subr.bf16.mxu0 0
      %3622 = vmatpush1.bf16.msra.mxu0 %v3600
      %3623 = vmatprep.subr.bf16.mxu0 0
      %3624 = vmatpush1.bf16.msra.mxu0 %v3601
      %3625 = vmatprep.subr.bf16.mxu0 0
      %3626 = vmatpush1.bf16.msra.mxu0 %v3602
      %3627 = vmatprep.subr.bf16.mxu0 0
      %3628 = vmatpush1.bf16.msra.mxu0 0
      %3629 = vmatprep.subr.bf16.mxu0 0
      %3630 = vmatpush1.bf16.msra.mxu0 0
      %3631 = vmatprep.subr.bf16.mxu0 0
      %3632 = vmatpush1.bf16.msra.mxu0 0
      %3633 = vmatprep.subr.bf16.mxu0 0
      %3634 = vmatpush1.bf16.msra.mxu0 0
      %3635 = vmatprep.subr.bf16.mxu0 0
      %3636 = vmatpush1.bf16.msra.mxu0 0
      %3637 = vmatprep.subr.bf16.mxu0 0
      %3638 = vmatpush1.bf16.msra.mxu0 0
      %3639 = vmatprep.subr.bf16.mxu0 0
      %3640 = vmatpush1.bf16.msra.mxu0 0
      %3641 = vmatprep.subr.bf16.mxu0 0
      %3642 = vmatpush1.bf16.msra.mxu0 0
      %3643 = vmatprep.mubr.bf16.mxu0 0
      %3644 = vmatmul.mubr.bf16.gmra.mrb[0].mxu0 %v3560
      %v3645 = vpop.f32.mrb[0].mxu0
      %v3646 = vadd.f32 0.0, %v3645
      %v3647 = vpop.f32.mrb[0].mxu0
      %v3648 = vpop.f32.mrb[0].mxu0
      %v3649 = vadd.f32 0.0, %v3648
      %v3650 = vpop.f32.mrb[0].mxu0
      %3651 = vmatprep.mubr.bf16.mxu0 0
      %3652 = vmatmul.mubr.bf16.gmra.mrb[0].mxu0 %v3559
      %v3653 = vpop.f32.mrb[0].mxu0
      %v3654 = vadd.f32 0.0, %v3653
      %v3655 = vpop.f32.mrb[0].mxu0
      %v3656 = vpop.f32.mrb[0].mxu0
      %v3657 = vpop.f32.mrb[0].mxu0
      %3658 = vdwg.mxu0
      %v3659 = vadd.f32 %v3537, %v3646
      %v3660 = vadd.f32 %v3538, %v3649
      %v3661 = vadd.f32 %v3539, %v3654
      %s3662 = scalar_lea.vmem %s4, 448
      %v3663 = vld [vmem:[%s3662] sm:$0xf]
      %v3664 = vld [vmem:[%s3662 + $0x4] sm:$0xf]
      %v3665 = vld [vmem:[%s3662 + $0x8] sm:$0xf]
      %v3666 = vld [vmem:[%s3662 + $0xc] sm:$0xf]
      %v3667 = vld [vmem:[%s3662 + $0x10] sm:$0xf]
      %v3668 = vld [vmem:[%s3662 + $0x14] sm:$0xf]
      %v3669 = vld [vmem:[%s3662 + $0x18] sm:$0xf]
      %v3670 = vld [vmem:[%s3662 + $0x1c] sm:$0xf]
      %v3671 = vld [vmem:[%s3662 + $0x20] sm:$0xf]
      %v3672 = vld [vmem:[%s3662 + $0x24] sm:$0xf]
      %v3673 = vld [vmem:[%s3662 + $0x28] sm:$0xf]
      %v3674 = vld [vmem:[%s3662 + $0x2c] sm:$0xf]
      %v3675 = vld [vmem:[%s3662 + $0x30] sm:$0xf]
      %v3676 = vld [vmem:[%s3662 + $0x34] sm:$0xf]
      %v3677 = vld [vmem:[%s3662 + $0x38] sm:$0xf]
      %v3678 = vld [vmem:[%s3662 + $0x3c] sm:$0xf]
      %vm3679 = vsmask.f32 4352
      %v3680 = vrot.slane %v2834, 3
      %v3681 = vrot.slane %v2836, 4
      %v3682 = vor.u32 %v3680, %v3681
      %v3683 = vrot.slane %v2845, 3
      %v3684 = vrot.slane %v2841, 4
      %v3685 = vor.u32 %v3683, %v3684
      %v3686 = vsel %vm3679, %v3682, %v3685
      %v3705 = vunpack.c.l.b16 %v3663
      %v3706 = vunpack.c.l.b16 %v3664
      %v3707 = vunpack.c.l.b16 %v3665
      %v3708 = vunpack.c.l.b16 %v3666
      %v3709 = vunpack.c.l.b16 %v3667
      %v3710 = vunpack.c.l.b16 %v3668
      %v3711 = vunpack.c.l.b16 %v3669
      %v3712 = vunpack.c.l.b16 %v3670
      %v3713 = vunpack.c.l.b16 %v3671
      %v3714 = vunpack.c.l.b16 %v3672
      %v3715 = vunpack.c.l.b16 %v3673
      %v3716 = vunpack.c.l.b16 %v3674
      %v3717 = vunpack.c.l.b16 %v3675
      %v3718 = vunpack.c.l.b16 %v3676
      %v3719 = vunpack.c.l.b16 %v3677
      %v3720 = vunpack.c.l.b16 %v3678
      %v3721 = vpack.c.b16 %v3706, %v3705
      %v3722 = vpack.c.b16 %v3708, %v3707
      %v3723 = vpack.c.b16 %v3710, %v3709
      %v3724 = vpack.c.b16 %v3712, %v3711
      %v3725 = vpack.c.b16 %v3714, %v3713
      %v3726 = vpack.c.b16 %v3716, %v3715
      %v3727 = vpack.c.b16 %v3718, %v3717
      %v3728 = vpack.c.b16 %v3720, %v3719
      %3737 = vmatprep.subr.bf16.mxu0 0
      %3738 = vmatpush1.bf16.msra.mxu0 %v3721
      %3739 = vmatprep.subr.bf16.mxu0 0
      %3740 = vmatpush1.bf16.msra.mxu0 %v3722
      %3741 = vmatprep.subr.bf16.mxu0 0
      %3742 = vmatpush1.bf16.msra.mxu0 %v3723
      %3743 = vmatprep.subr.bf16.mxu0 0
      %3744 = vmatpush1.bf16.msra.mxu0 %v3724
      %3745 = vmatprep.subr.bf16.mxu0 0
      %3746 = vmatpush1.bf16.msra.mxu0 %v3725
      %3747 = vmatprep.subr.bf16.mxu0 0
      %3748 = vmatpush1.bf16.msra.mxu0 %v3726
      %3749 = vmatprep.subr.bf16.mxu0 0
      %3750 = vmatpush1.bf16.msra.mxu0 %v3727
      %3751 = vmatprep.subr.bf16.mxu0 0
      %3752 = vmatpush1.bf16.msra.mxu0 %v3728
      %3753 = vmatprep.subr.bf16.mxu0 0
      %3754 = vmatpush1.bf16.msra.mxu0 0
      %3755 = vmatprep.subr.bf16.mxu0 0
      %3756 = vmatpush1.bf16.msra.mxu0 0
      %3757 = vmatprep.subr.bf16.mxu0 0
      %3758 = vmatpush1.bf16.msra.mxu0 0
      %3759 = vmatprep.subr.bf16.mxu0 0
      %3760 = vmatpush1.bf16.msra.mxu0 0
      %3761 = vmatprep.subr.bf16.mxu0 0
      %3762 = vmatpush1.bf16.msra.mxu0 0
      %3763 = vmatprep.subr.bf16.mxu0 0
      %3764 = vmatpush1.bf16.msra.mxu0 0
      %3765 = vmatprep.subr.bf16.mxu0 0
      %3766 = vmatpush1.bf16.msra.mxu0 0
      %3767 = vmatprep.subr.bf16.mxu0 0
      %3768 = vmatpush1.bf16.msra.mxu0 0
      %3769 = vmatprep.mubr.bf16.mxu0 0
      %3770 = vmatmul.mubr.bf16.gmra.mrb[0].mxu0 %v3686
      %v3771 = vpop.f32.mrb[0].mxu0
      %v3772 = vadd.f32 0.0, %v3771
      %v3773 = vpop.f32.mrb[0].mxu0
      %v3774 = vpop.f32.mrb[0].mxu0
      %v3775 = vadd.f32 0.0, %v3774
      %v3776 = vpop.f32.mrb[0].mxu0
      %3777 = vmatprep.mubr.bf16.mxu0 0
      %3778 = vmatmul.mubr.bf16.gmra.mrb[0].mxu0 %v3685
      %v3779 = vpop.f32.mrb[0].mxu0
      %v3780 = vadd.f32 0.0, %v3779
      %v3781 = vpop.f32.mrb[0].mxu0
      %v3782 = vpop.f32.mrb[0].mxu0
      %v3783 = vpop.f32.mrb[0].mxu0
      %3784 = vdwg.mxu0
      %v3785 = vadd.f32 %v3659, %v3772
      %v3786 = vadd.f32 %v3660, %v3775
      %v3787 = vadd.f32 %v3661, %v3780
      %v3788 = vld [vmem:[%s6 + $0x2] sm:$0x1]
      %v3789 = vlaneseq
      %v3790 = vshrl.u32 %v3789, 7
      %v3791 = vsub.s32 0, %v3790
      %v3792 = vrot.slane %v3788, %v3791
      %v3793 = vadd.f32 %v3785, %v3792
      %v3794 = vadd.f32 %v3786, %v3792
      %v3795 = vadd.f32 %v3787, %v3792
      %v3796 = vmax.f32 %v3793, 0.0
      %v3797 = vmax.f32 %v3794, 0.0
      %v3798 = vmax.f32 %v3795, 0.0
      %v3799 = vpack.c.bf16 %v3797, %v3796
      %v3800 = vpack.c.bf16 %v3798, %v3798
      %v3801 = vld [vmem:[%s5] sm:$0xf]
      %v3802 = vld [vmem:[%s5 + $0x4] sm:$0xf]
      %v3803 = vld [vmem:[%s5 + $0x8] sm:$0xf]
      %v3804 = vld [vmem:[%s5 + $0xc] sm:$0xf]
      %v3805 = vld [vmem:[%s5 + $0x10] sm:$0xf]
      %v3806 = vld [vmem:[%s5 + $0x14] sm:$0xf]
      %v3807 = vld [vmem:[%s5 + $0x18] sm:$0xf]
      %v3808 = vld [vmem:[%s5 + $0x1c] sm:$0xf]
      %v3809 = vld [vmem:[%s5 + $0x20] sm:$0xf]
      %v3810 = vld [vmem:[%s5 + $0x24] sm:$0xf]
      %v3811 = vld [vmem:[%s5 + $0x28] sm:$0xf]
      %v3812 = vld [vmem:[%s5 + $0x2c] sm:$0xf]
      %v3813 = vld [vmem:[%s5 + $0x30] sm:$0xf]
      %v3814 = vld [vmem:[%s5 + $0x34] sm:$0xf]
      %v3815 = vld [vmem:[%s5 + $0x38] sm:$0xf]
      %v3816 = vld [vmem:[%s5 + $0x3c] sm:$0xf]
      %s3817 = scalar_lea.vmem %s5, 64
      %v3818 = vld [vmem:[%s3817] sm:$0xf]
      %v3819 = vld [vmem:[%s3817 + $0x4] sm:$0xf]
      %v3820 = vld [vmem:[%s3817 + $0x8] sm:$0xf]
      %v3821 = vld [vmem:[%s3817 + $0xc] sm:$0xf]
      %v3822 = vld [vmem:[%s3817 + $0x10] sm:$0xf]
      %v3823 = vld [vmem:[%s3817 + $0x14] sm:$0xf]
      %v3824 = vld [vmem:[%s3817 + $0x18] sm:$0xf]
      %v3825 = vld [vmem:[%s3817 + $0x1c] sm:$0xf]
      %v3826 = vld [vmem:[%s3817 + $0x20] sm:$0xf]
      %v3827 = vld [vmem:[%s3817 + $0x24] sm:$0xf]
      %v3828 = vld [vmem:[%s3817 + $0x28] sm:$0xf]
      %v3829 = vld [vmem:[%s3817 + $0x2c] sm:$0xf]
      %v3830 = vld [vmem:[%s3817 + $0x30] sm:$0xf]
      %v3831 = vld [vmem:[%s3817 + $0x34] sm:$0xf]
      %v3832 = vld [vmem:[%s3817 + $0x38] sm:$0xf]
      %v3833 = vld [vmem:[%s3817 + $0x3c] sm:$0xf]
      %v3835 = vshrl.u32 %v3799, 16
      %v3837 = vshll.u32 %v3799, 16
      %v3839 = vrot.slane %v3837, 1
      %v3840 = vor.u32 %v3835, %v3839
      %v3858 = vunpack.c.l.b16 %v3818
      %v3859 = vunpack.c.l.b16 %v3819
      %v3860 = vunpack.c.l.b16 %v3820
      %v3861 = vunpack.c.l.b16 %v3821
      %v3862 = vunpack.c.l.b16 %v3822
      %v3863 = vunpack.c.l.b16 %v3823
      %v3864 = vunpack.c.l.b16 %v3824
      %v3865 = vunpack.c.l.b16 %v3825
      %v3866 = vunpack.c.l.b16 %v3826
      %v3867 = vunpack.c.l.b16 %v3827
      %v3868 = vunpack.c.l.b16 %v3828
      %v3869 = vunpack.c.l.b16 %v3829
      %v3870 = vunpack.c.l.b16 %v3830
      %v3871 = vunpack.c.l.b16 %v3831
      %v3872 = vunpack.c.l.b16 %v3832
      %v3873 = vunpack.c.l.b16 %v3833
      %v3874 = vpack.c.b16 %v3859, %v3858
      %v3875 = vpack.c.b16 %v3861, %v3860
      %v3876 = vpack.c.b16 %v3863, %v3862
      %v3877 = vpack.c.b16 %v3865, %v3864
      %v3878 = vpack.c.b16 %v3867, %v3866
      %v3879 = vpack.c.b16 %v3869, %v3868
      %v3880 = vpack.c.b16 %v3871, %v3870
      %v3881 = vpack.c.b16 %v3873, %v3872
      %3890 = vmatprep.subr.bf16.mxu0 0
      %3891 = vmatpush1.bf16.msra.mxu0 %v3874
      %3892 = vmatprep.subr.bf16.mxu0 0
      %3893 = vmatpush1.bf16.msra.mxu0 %v3875
      %3894 = vmatprep.subr.bf16.mxu0 0
      %3895 = vmatpush1.bf16.msra.mxu0 %v3876
      %3896 = vmatprep.subr.bf16.mxu0 0
      %3897 = vmatpush1.bf16.msra.mxu0 %v3877
      %3898 = vmatprep.subr.bf16.mxu0 0
      %3899 = vmatpush1.bf16.msra.mxu0 %v3878
      %3900 = vmatprep.subr.bf16.mxu0 0
      %3901 = vmatpush1.bf16.msra.mxu0 %v3879
      %3902 = vmatprep.subr.bf16.mxu0 0
      %3903 = vmatpush1.bf16.msra.mxu0 %v3880
      %3904 = vmatprep.subr.bf16.mxu0 0
      %3905 = vmatpush1.bf16.msra.mxu0 %v3881
      %3906 = vmatprep.subr.bf16.mxu0 0
      %3907 = vmatpush1.bf16.msra.mxu0 0
      %3908 = vmatprep.subr.bf16.mxu0 0
      %3909 = vmatpush1.bf16.msra.mxu0 0
      %3910 = vmatprep.subr.bf16.mxu0 0
      %3911 = vmatpush1.bf16.msra.mxu0 0
      %3912 = vmatprep.subr.bf16.mxu0 0
      %3913 = vmatpush1.bf16.msra.mxu0 0
      %3914 = vmatprep.subr.bf16.mxu0 0
      %3915 = vmatpush1.bf16.msra.mxu0 0
      %3916 = vmatprep.subr.bf16.mxu0 0
      %3917 = vmatpush1.bf16.msra.mxu0 0
      %3918 = vmatprep.subr.bf16.mxu0 0
      %3919 = vmatpush1.bf16.msra.mxu0 0
      %3920 = vmatprep.subr.bf16.mxu0 0
      %3921 = vmatpush1.bf16.msra.mxu0 0
      %3922 = vmatprep.mubr.bf16.mxu0 0
      %3923 = vmatmul.mubr.bf16.gmra.mrb[0].mxu0 %v3840
      %v3924 = vpop.f32.mrb[0].mxu0
      %v3925 = vadd.f32 0.0, %v3924
      %v3926 = vpop.f32.mrb[0].mxu0
      %v3927 = vpop.f32.mrb[0].mxu0
      %v3928 = vadd.f32 0.0, %v3927
      %v3929 = vpop.f32.mrb[0].mxu0
      %3930 = vdwg.mxu0
      %v3947 = vunpack.c.l.b16 %v3801
      %v3948 = vunpack.c.l.b16 %v3802
      %v3949 = vunpack.c.l.b16 %v3803
      %v3950 = vunpack.c.l.b16 %v3804
      %v3951 = vunpack.c.l.b16 %v3805
      %v3952 = vunpack.c.l.b16 %v3806
      %v3953 = vunpack.c.l.b16 %v3807
      %v3954 = vunpack.c.l.b16 %v3808
      %v3955 = vunpack.c.l.b16 %v3809
      %v3956 = vunpack.c.l.b16 %v3810
      %v3957 = vunpack.c.l.b16 %v3811
      %v3958 = vunpack.c.l.b16 %v3812
      %v3959 = vunpack.c.l.b16 %v3813
      %v3960 = vunpack.c.l.b16 %v3814
      %v3961 = vunpack.c.l.b16 %v3815
      %v3962 = vunpack.c.l.b16 %v3816
      %v3963 = vpack.c.b16 %v3948, %v3947
      %v3964 = vpack.c.b16 %v3950, %v3949
      %v3965 = vpack.c.b16 %v3952, %v3951
      %v3966 = vpack.c.b16 %v3954, %v3953
      %v3967 = vpack.c.b16 %v3956, %v3955
      %v3968 = vpack.c.b16 %v3958, %v3957
      %v3969 = vpack.c.b16 %v3960, %v3959
      %v3970 = vpack.c.b16 %v3962, %v3961
      %3979 = vmatprep.subr.bf16.mxu0 0
      %3980 = vmatpush1.bf16.msra.mxu0 %v3963
      %3981 = vmatprep.subr.bf16.mxu0 0
      %3982 = vmatpush1.bf16.msra.mxu0 %v3964
      %3983 = vmatprep.subr.bf16.mxu0 0
      %3984 = vmatpush1.bf16.msra.mxu0 %v3965
      %3985 = vmatprep.subr.bf16.mxu0 0
      %3986 = vmatpush1.bf16.msra.mxu0 %v3966
      %3987 = vmatprep.subr.bf16.mxu0 0
      %3988 = vmatpush1.bf16.msra.mxu0 %v3967
      %3989 = vmatprep.subr.bf16.mxu0 0
      %3990 = vmatpush1.bf16.msra.mxu0 %v3968
      %3991 = vmatprep.subr.bf16.mxu0 0
      %3992 = vmatpush1.bf16.msra.mxu0 %v3969
      %3993 = vmatprep.subr.bf16.mxu0 0
      %3994 = vmatpush1.bf16.msra.mxu0 %v3970
      %3995 = vmatprep.subr.bf16.mxu0 0
      %3996 = vmatpush1.bf16.msra.mxu0 0
      %3997 = vmatprep.subr.bf16.mxu0 0
      %3998 = vmatpush1.bf16.msra.mxu0 0
      %3999 = vmatprep.subr.bf16.mxu0 0
      %4000 = vmatpush1.bf16.msra.mxu0 0
      %4001 = vmatprep.subr.bf16.mxu0 0
      %4002 = vmatpush1.bf16.msra.mxu0 0
      %4003 = vmatprep.subr.bf16.mxu0 0
      %4004 = vmatpush1.bf16.msra.mxu0 0
      %4005 = vmatprep.subr.bf16.mxu0 0
      %4006 = vmatpush1.bf16.msra.mxu0 0
      %4007 = vmatprep.subr.bf16.mxu0 0
      %4008 = vmatpush1.bf16.msra.mxu0 0
      %4009 = vmatprep.subr.bf16.mxu0 0
      %4010 = vmatpush1.bf16.msra.mxu0 0
      %4011 = vmatprep.mubr.bf16.mxu0 0
      %4012 = vmatmul.mubr.bf16.gmra.mrb[0].mxu0 %v3799
      %v4013 = vpop.f32.mrb[0].mxu0
      %v4014 = vadd.f32 %v3925, %v4013
      %v4015 = vpop.f32.mrb[0].mxu0
      %v4016 = vpop.f32.mrb[0].mxu0
      %v4017 = vadd.f32 %v3928, %v4016
      %v4018 = vpop.f32.mrb[0].mxu0
      %4019 = vdwg.mxu0
      %s4020 = scalar_lea.vmem %s5, 128
      %v4021 = vld [vmem:[%s4020] sm:$0xf]
      %v4022 = vld [vmem:[%s4020 + $0x4] sm:$0xf]
      %v4023 = vld [vmem:[%s4020 + $0x8] sm:$0xf]
      %v4024 = vld [vmem:[%s4020 + $0xc] sm:$0xf]
      %v4025 = vld [vmem:[%s4020 + $0x10] sm:$0xf]
      %v4026 = vld [vmem:[%s4020 + $0x14] sm:$0xf]
      %v4027 = vld [vmem:[%s4020 + $0x18] sm:$0xf]
      %v4028 = vld [vmem:[%s4020 + $0x1c] sm:$0xf]
      %v4029 = vld [vmem:[%s4020 + $0x20] sm:$0xf]
      %v4030 = vld [vmem:[%s4020 + $0x24] sm:$0xf]
      %v4031 = vld [vmem:[%s4020 + $0x28] sm:$0xf]
      %v4032 = vld [vmem:[%s4020 + $0x2c] sm:$0xf]
      %v4033 = vld [vmem:[%s4020 + $0x30] sm:$0xf]
      %v4034 = vld [vmem:[%s4020 + $0x34] sm:$0xf]
      %v4035 = vld [vmem:[%s4020 + $0x38] sm:$0xf]
      %v4036 = vld [vmem:[%s4020 + $0x3c] sm:$0xf]
      %v4039 = vrot.slane %v3799, 1
      %v4040 = vrot.slane %v3800, 1
      %v4041 = vsel %vm3061, %v4039, %v4040
      %v4059 = vunpack.c.l.b16 %v4021
      %v4060 = vunpack.c.l.b16 %v4022
      %v4061 = vunpack.c.l.b16 %v4023
      %v4062 = vunpack.c.l.b16 %v4024
      %v4063 = vunpack.c.l.b16 %v4025
      %v4064 = vunpack.c.l.b16 %v4026
      %v4065 = vunpack.c.l.b16 %v4027
      %v4066 = vunpack.c.l.b16 %v4028
      %v4067 = vunpack.c.l.b16 %v4029
      %v4068 = vunpack.c.l.b16 %v4030
      %v4069 = vunpack.c.l.b16 %v4031
      %v4070 = vunpack.c.l.b16 %v4032
      %v4071 = vunpack.c.l.b16 %v4033
      %v4072 = vunpack.c.l.b16 %v4034
      %v4073 = vunpack.c.l.b16 %v4035
      %v4074 = vunpack.c.l.b16 %v4036
      %v4075 = vpack.c.b16 %v4060, %v4059
      %v4076 = vpack.c.b16 %v4062, %v4061
      %v4077 = vpack.c.b16 %v4064, %v4063
      %v4078 = vpack.c.b16 %v4066, %v4065
      %v4079 = vpack.c.b16 %v4068, %v4067
      %v4080 = vpack.c.b16 %v4070, %v4069
      %v4081 = vpack.c.b16 %v4072, %v4071
      %v4082 = vpack.c.b16 %v4074, %v4073
      %4091 = vmatprep.subr.bf16.mxu0 0
      %4092 = vmatpush1.bf16.msra.mxu0 %v4075
      %4093 = vmatprep.subr.bf16.mxu0 0
      %4094 = vmatpush1.bf16.msra.mxu0 %v4076
      %4095 = vmatprep.subr.bf16.mxu0 0
      %4096 = vmatpush1.bf16.msra.mxu0 %v4077
      %4097 = vmatprep.subr.bf16.mxu0 0
      %4098 = vmatpush1.bf16.msra.mxu0 %v4078
      %4099 = vmatprep.subr.bf16.mxu0 0
      %4100 = vmatpush1.bf16.msra.mxu0 %v4079
      %4101 = vmatprep.subr.bf16.mxu0 0
      %4102 = vmatpush1.bf16.msra.mxu0 %v4080
      %4103 = vmatprep.subr.bf16.mxu0 0
      %4104 = vmatpush1.bf16.msra.mxu0 %v4081
      %4105 = vmatprep.subr.bf16.mxu0 0
      %4106 = vmatpush1.bf16.msra.mxu0 %v4082
      %4107 = vmatprep.subr.bf16.mxu0 0
      %4108 = vmatpush1.bf16.msra.mxu0 0
      %4109 = vmatprep.subr.bf16.mxu0 0
      %4110 = vmatpush1.bf16.msra.mxu0 0
      %4111 = vmatprep.subr.bf16.mxu0 0
      %4112 = vmatpush1.bf16.msra.mxu0 0
      %4113 = vmatprep.subr.bf16.mxu0 0
      %4114 = vmatpush1.bf16.msra.mxu0 0
      %4115 = vmatprep.subr.bf16.mxu0 0
      %4116 = vmatpush1.bf16.msra.mxu0 0
      %4117 = vmatprep.subr.bf16.mxu0 0
      %4118 = vmatpush1.bf16.msra.mxu0 0
      %4119 = vmatprep.subr.bf16.mxu0 0
      %4120 = vmatpush1.bf16.msra.mxu0 0
      %4121 = vmatprep.subr.bf16.mxu0 0
      %4122 = vmatpush1.bf16.msra.mxu0 0
      %4123 = vmatprep.mubr.bf16.mxu0 0
      %4124 = vmatmul.mubr.bf16.gmra.mrb[0].mxu0 %v4041
      %v4125 = vpop.f32.mrb[0].mxu0
      %v4126 = vadd.f32 0.0, %v4125
      %v4127 = vpop.f32.mrb[0].mxu0
      %v4128 = vpop.f32.mrb[0].mxu0
      %v4129 = vadd.f32 0.0, %v4128
      %v4130 = vpop.f32.mrb[0].mxu0
      %4131 = vdwg.mxu0
      %v4132 = vadd.f32 %v4014, %v4126
      %v4133 = vadd.f32 %v4017, %v4129
      %s4134 = scalar_lea.vmem %s5, 192
      %v4135 = vld [vmem:[%s4134] sm:$0xf]
      %v4136 = vld [vmem:[%s4134 + $0x4] sm:$0xf]
      %v4137 = vld [vmem:[%s4134 + $0x8] sm:$0xf]
      %v4138 = vld [vmem:[%s4134 + $0xc] sm:$0xf]
      %v4139 = vld [vmem:[%s4134 + $0x10] sm:$0xf]
      %v4140 = vld [vmem:[%s4134 + $0x14] sm:$0xf]
      %v4141 = vld [vmem:[%s4134 + $0x18] sm:$0xf]
      %v4142 = vld [vmem:[%s4134 + $0x1c] sm:$0xf]
      %v4143 = vld [vmem:[%s4134 + $0x20] sm:$0xf]
      %v4144 = vld [vmem:[%s4134 + $0x24] sm:$0xf]
      %v4145 = vld [vmem:[%s4134 + $0x28] sm:$0xf]
      %v4146 = vld [vmem:[%s4134 + $0x2c] sm:$0xf]
      %v4147 = vld [vmem:[%s4134 + $0x30] sm:$0xf]
      %v4148 = vld [vmem:[%s4134 + $0x34] sm:$0xf]
      %v4149 = vld [vmem:[%s4134 + $0x38] sm:$0xf]
      %v4150 = vld [vmem:[%s4134 + $0x3c] sm:$0xf]
      %v4151 = vrot.slane %v3835, 1
      %v4152 = vrot.slane %v3837, 2
      %v4153 = vor.u32 %v4151, %v4152
      %v4155 = vshrl.u32 %v3800, 16
      %v4157 = vrot.slane %v4155, 1
      %v4158 = vshll.u32 %v3800, 16
      %v4160 = vrot.slane %v4158, 2
      %v4161 = vor.u32 %v4157, %v4160
      %v4162 = vsel %vm3183, %v4153, %v4161
      %v4180 = vunpack.c.l.b16 %v4135
      %v4181 = vunpack.c.l.b16 %v4136
      %v4182 = vunpack.c.l.b16 %v4137
      %v4183 = vunpack.c.l.b16 %v4138
      %v4184 = vunpack.c.l.b16 %v4139
      %v4185 = vunpack.c.l.b16 %v4140
      %v4186 = vunpack.c.l.b16 %v4141
      %v4187 = vunpack.c.l.b16 %v4142
      %v4188 = vunpack.c.l.b16 %v4143
      %v4189 = vunpack.c.l.b16 %v4144
      %v4190 = vunpack.c.l.b16 %v4145
      %v4191 = vunpack.c.l.b16 %v4146
      %v4192 = vunpack.c.l.b16 %v4147
      %v4193 = vunpack.c.l.b16 %v4148
      %v4194 = vunpack.c.l.b16 %v4149
      %v4195 = vunpack.c.l.b16 %v4150
      %v4196 = vpack.c.b16 %v4181, %v4180
      %v4197 = vpack.c.b16 %v4183, %v4182
      %v4198 = vpack.c.b16 %v4185, %v4184
      %v4199 = vpack.c.b16 %v4187, %v4186
      %v4200 = vpack.c.b16 %v4189, %v4188
      %v4201 = vpack.c.b16 %v4191, %v4190
      %v4202 = vpack.c.b16 %v4193, %v4192
      %v4203 = vpack.c.b16 %v4195, %v4194
      %4212 = vmatprep.subr.bf16.mxu0 0
      %4213 = vmatpush1.bf16.msra.mxu0 %v4196
      %4214 = vmatprep.subr.bf16.mxu0 0
      %4215 = vmatpush1.bf16.msra.mxu0 %v4197
      %4216 = vmatprep.subr.bf16.mxu0 0
      %4217 = vmatpush1.bf16.msra.mxu0 %v4198
      %4218 = vmatprep.subr.bf16.mxu0 0
      %4219 = vmatpush1.bf16.msra.mxu0 %v4199
      %4220 = vmatprep.subr.bf16.mxu0 0
      %4221 = vmatpush1.bf16.msra.mxu0 %v4200
      %4222 = vmatprep.subr.bf16.mxu0 0
      %4223 = vmatpush1.bf16.msra.mxu0 %v4201
      %4224 = vmatprep.subr.bf16.mxu0 0
      %4225 = vmatpush1.bf16.msra.mxu0 %v4202
      %4226 = vmatprep.subr.bf16.mxu0 0
      %4227 = vmatpush1.bf16.msra.mxu0 %v4203
      %4228 = vmatprep.subr.bf16.mxu0 0
      %4229 = vmatpush1.bf16.msra.mxu0 0
      %4230 = vmatprep.subr.bf16.mxu0 0
      %4231 = vmatpush1.bf16.msra.mxu0 0
      %4232 = vmatprep.subr.bf16.mxu0 0
      %4233 = vmatpush1.bf16.msra.mxu0 0
      %4234 = vmatprep.subr.bf16.mxu0 0
      %4235 = vmatpush1.bf16.msra.mxu0 0
      %4236 = vmatprep.subr.bf16.mxu0 0
      %4237 = vmatpush1.bf16.msra.mxu0 0
      %4238 = vmatprep.subr.bf16.mxu0 0
      %4239 = vmatpush1.bf16.msra.mxu0 0
      %4240 = vmatprep.subr.bf16.mxu0 0
      %4241 = vmatpush1.bf16.msra.mxu0 0
      %4242 = vmatprep.subr.bf16.mxu0 0
      %4243 = vmatpush1.bf16.msra.mxu0 0
      %4244 = vmatprep.mubr.bf16.mxu0 0
      %4245 = vmatmul.mubr.bf16.gmra.mrb[0].mxu0 %v4162
      %v4246 = vpop.f32.mrb[0].mxu0
      %v4247 = vadd.f32 0.0, %v4246
      %v4248 = vpop.f32.mrb[0].mxu0
      %v4249 = vpop.f32.mrb[0].mxu0
      %v4250 = vadd.f32 0.0, %v4249
      %v4251 = vpop.f32.mrb[0].mxu0
      %4252 = vdwg.mxu0
      %v4253 = vadd.f32 %v4132, %v4247
      %v4254 = vadd.f32 %v4133, %v4250
      %s4255 = scalar_lea.vmem %s5, 256
      %v4256 = vld [vmem:[%s4255] sm:$0xf]
      %v4257 = vld [vmem:[%s4255 + $0x4] sm:$0xf]
      %v4258 = vld [vmem:[%s4255 + $0x8] sm:$0xf]
      %v4259 = vld [vmem:[%s4255 + $0xc] sm:$0xf]
      %v4260 = vld [vmem:[%s4255 + $0x10] sm:$0xf]
      %v4261 = vld [vmem:[%s4255 + $0x14] sm:$0xf]
      %v4262 = vld [vmem:[%s4255 + $0x18] sm:$0xf]
      %v4263 = vld [vmem:[%s4255 + $0x1c] sm:$0xf]
      %v4264 = vld [vmem:[%s4255 + $0x20] sm:$0xf]
      %v4265 = vld [vmem:[%s4255 + $0x24] sm:$0xf]
      %v4266 = vld [vmem:[%s4255 + $0x28] sm:$0xf]
      %v4267 = vld [vmem:[%s4255 + $0x2c] sm:$0xf]
      %v4268 = vld [vmem:[%s4255 + $0x30] sm:$0xf]
      %v4269 = vld [vmem:[%s4255 + $0x34] sm:$0xf]
      %v4270 = vld [vmem:[%s4255 + $0x38] sm:$0xf]
      %v4271 = vld [vmem:[%s4255 + $0x3c] sm:$0xf]
      %v4272 = vrot.slane %v3799, 2
      %v4273 = vrot.slane %v3800, 2
      %v4274 = vsel %vm3309, %v4272, %v4273
      %v4292 = vunpack.c.l.b16 %v4256
      %v4293 = vunpack.c.l.b16 %v4257
      %v4294 = vunpack.c.l.b16 %v4258
      %v4295 = vunpack.c.l.b16 %v4259
      %v4296 = vunpack.c.l.b16 %v4260
      %v4297 = vunpack.c.l.b16 %v4261
      %v4298 = vunpack.c.l.b16 %v4262
      %v4299 = vunpack.c.l.b16 %v4263
      %v4300 = vunpack.c.l.b16 %v4264
      %v4301 = vunpack.c.l.b16 %v4265
      %v4302 = vunpack.c.l.b16 %v4266
      %v4303 = vunpack.c.l.b16 %v4267
      %v4304 = vunpack.c.l.b16 %v4268
      %v4305 = vunpack.c.l.b16 %v4269
      %v4306 = vunpack.c.l.b16 %v4270
      %v4307 = vunpack.c.l.b16 %v4271
      %v4308 = vpack.c.b16 %v4293, %v4292
      %v4309 = vpack.c.b16 %v4295, %v4294
      %v4310 = vpack.c.b16 %v4297, %v4296
      %v4311 = vpack.c.b16 %v4299, %v4298
      %v4312 = vpack.c.b16 %v4301, %v4300
      %v4313 = vpack.c.b16 %v4303, %v4302
      %v4314 = vpack.c.b16 %v4305, %v4304
      %v4315 = vpack.c.b16 %v4307, %v4306
      %4324 = vmatprep.subr.bf16.mxu0 0
      %4325 = vmatpush1.bf16.msra.mxu0 %v4308
      %4326 = vmatprep.subr.bf16.mxu0 0
      %4327 = vmatpush1.bf16.msra.mxu0 %v4309
      %4328 = vmatprep.subr.bf16.mxu0 0
      %4329 = vmatpush1.bf16.msra.mxu0 %v4310
      %4330 = vmatprep.subr.bf16.mxu0 0
      %4331 = vmatpush1.bf16.msra.mxu0 %v4311
      %4332 = vmatprep.subr.bf16.mxu0 0
      %4333 = vmatpush1.bf16.msra.mxu0 %v4312
      %4334 = vmatprep.subr.bf16.mxu0 0
      %4335 = vmatpush1.bf16.msra.mxu0 %v4313
      %4336 = vmatprep.subr.bf16.mxu0 0
      %4337 = vmatpush1.bf16.msra.mxu0 %v4314
      %4338 = vmatprep.subr.bf16.mxu0 0
      %4339 = vmatpush1.bf16.msra.mxu0 %v4315
      %4340 = vmatprep.subr.bf16.mxu0 0
      %4341 = vmatpush1.bf16.msra.mxu0 0
      %4342 = vmatprep.subr.bf16.mxu0 0
      %4343 = vmatpush1.bf16.msra.mxu0 0
      %4344 = vmatprep.subr.bf16.mxu0 0
      %4345 = vmatpush1.bf16.msra.mxu0 0
      %4346 = vmatprep.subr.bf16.mxu0 0
      %4347 = vmatpush1.bf16.msra.mxu0 0
      %4348 = vmatprep.subr.bf16.mxu0 0
      %4349 = vmatpush1.bf16.msra.mxu0 0
      %4350 = vmatprep.subr.bf16.mxu0 0
      %4351 = vmatpush1.bf16.msra.mxu0 0
      %4352 = vmatprep.subr.bf16.mxu0 0
      %4353 = vmatpush1.bf16.msra.mxu0 0
      %4354 = vmatprep.subr.bf16.mxu0 0
      %4355 = vmatpush1.bf16.msra.mxu0 0
      %4356 = vmatprep.mubr.bf16.mxu0 0
      %4357 = vmatmul.mubr.bf16.gmra.mrb[0].mxu0 %v4274
      %v4358 = vpop.f32.mrb[0].mxu0
      %v4359 = vadd.f32 0.0, %v4358
      %v4360 = vpop.f32.mrb[0].mxu0
      %v4361 = vpop.f32.mrb[0].mxu0
      %v4362 = vadd.f32 0.0, %v4361
      %v4363 = vpop.f32.mrb[0].mxu0
      %4364 = vdwg.mxu0
      %v4365 = vadd.f32 %v4253, %v4359
      %v4366 = vadd.f32 %v4254, %v4362
      %s4367 = scalar_lea.vmem %s5, 320
      %v4368 = vld [vmem:[%s4367] sm:$0xf]
      %v4369 = vld [vmem:[%s4367 + $0x4] sm:$0xf]
      %v4370 = vld [vmem:[%s4367 + $0x8] sm:$0xf]
      %v4371 = vld [vmem:[%s4367 + $0xc] sm:$0xf]
      %v4372 = vld [vmem:[%s4367 + $0x10] sm:$0xf]
      %v4373 = vld [vmem:[%s4367 + $0x14] sm:$0xf]
      %v4374 = vld [vmem:[%s4367 + $0x18] sm:$0xf]
      %v4375 = vld [vmem:[%s4367 + $0x1c] sm:$0xf]
      %v4376 = vld [vmem:[%s4367 + $0x20] sm:$0xf]
      %v4377 = vld [vmem:[%s4367 + $0x24] sm:$0xf]
      %v4378 = vld [vmem:[%s4367 + $0x28] sm:$0xf]
      %v4379 = vld [vmem:[%s4367 + $0x2c] sm:$0xf]
      %v4380 = vld [vmem:[%s4367 + $0x30] sm:$0xf]
      %v4381 = vld [vmem:[%s4367 + $0x34] sm:$0xf]
      %v4382 = vld [vmem:[%s4367 + $0x38] sm:$0xf]
      %v4383 = vld [vmem:[%s4367 + $0x3c] sm:$0xf]
      %v4384 = vrot.slane %v3835, 2
      %v4385 = vrot.slane %v3837, 3
      %v4386 = vor.u32 %v4384, %v4385
      %v4387 = vrot.slane %v4155, 2
      %v4388 = vrot.slane %v4158, 3
      %v4389 = vor.u32 %v4387, %v4388
      %v4390 = vsel %vm3431, %v4386, %v4389
      %v4408 = vunpack.c.l.b16 %v4368
      %v4409 = vunpack.c.l.b16 %v4369
      %v4410 = vunpack.c.l.b16 %v4370
      %v4411 = vunpack.c.l.b16 %v4371
      %v4412 = vunpack.c.l.b16 %v4372
      %v4413 = vunpack.c.l.b16 %v4373
      %v4414 = vunpack.c.l.b16 %v4374
      %v4415 = vunpack.c.l.b16 %v4375
      %v4416 = vunpack.c.l.b16 %v4376
      %v4417 = vunpack.c.l.b16 %v4377
      %v4418 = vunpack.c.l.b16 %v4378
      %v4419 = vunpack.c.l.b16 %v4379
      %v4420 = vunpack.c.l.b16 %v4380
      %v4421 = vunpack.c.l.b16 %v4381
      %v4422 = vunpack.c.l.b16 %v4382
      %v4423 = vunpack.c.l.b16 %v4383
      %v4424 = vpack.c.b16 %v4409, %v4408
      %v4425 = vpack.c.b16 %v4411, %v4410
      %v4426 = vpack.c.b16 %v4413, %v4412
      %v4427 = vpack.c.b16 %v4415, %v4414
      %v4428 = vpack.c.b16 %v4417, %v4416
      %v4429 = vpack.c.b16 %v4419, %v4418
      %v4430 = vpack.c.b16 %v4421, %v4420
      %v4431 = vpack.c.b16 %v4423, %v4422
      %4440 = vmatprep.subr.bf16.mxu0 0
      %4441 = vmatpush1.bf16.msra.mxu0 %v4424
      %4442 = vmatprep.subr.bf16.mxu0 0
      %4443 = vmatpush1.bf16.msra.mxu0 %v4425
      %4444 = vmatprep.subr.bf16.mxu0 0
      %4445 = vmatpush1.bf16.msra.mxu0 %v4426
      %4446 = vmatprep.subr.bf16.mxu0 0
      %4447 = vmatpush1.bf16.msra.mxu0 %v4427
      %4448 = vmatprep.subr.bf16.mxu0 0
      %4449 = vmatpush1.bf16.msra.mxu0 %v4428
      %4450 = vmatprep.subr.bf16.mxu0 0
      %4451 = vmatpush1.bf16.msra.mxu0 %v4429
      %4452 = vmatprep.subr.bf16.mxu0 0
      %4453 = vmatpush1.bf16.msra.mxu0 %v4430
      %4454 = vmatprep.subr.bf16.mxu0 0
      %4455 = vmatpush1.bf16.msra.mxu0 %v4431
      %4456 = vmatprep.subr.bf16.mxu0 0
      %4457 = vmatpush1.bf16.msra.mxu0 0
      %4458 = vmatprep.subr.bf16.mxu0 0
      %4459 = vmatpush1.bf16.msra.mxu0 0
      %4460 = vmatprep.subr.bf16.mxu0 0
      %4461 = vmatpush1.bf16.msra.mxu0 0
      %4462 = vmatprep.subr.bf16.mxu0 0
      %4463 = vmatpush1.bf16.msra.mxu0 0
      %4464 = vmatprep.subr.bf16.mxu0 0
      %4465 = vmatpush1.bf16.msra.mxu0 0
      %4466 = vmatprep.subr.bf16.mxu0 0
      %4467 = vmatpush1.bf16.msra.mxu0 0
      %4468 = vmatprep.subr.bf16.mxu0 0
      %4469 = vmatpush1.bf16.msra.mxu0 0
      %4470 = vmatprep.subr.bf16.mxu0 0
      %4471 = vmatpush1.bf16.msra.mxu0 0
      %4472 = vmatprep.mubr.bf16.mxu0 0
      %4473 = vmatmul.mubr.bf16.gmra.mrb[0].mxu0 %v4390
      %v4474 = vpop.f32.mrb[0].mxu0
      %v4475 = vadd.f32 0.0, %v4474
      %v4476 = vpop.f32.mrb[0].mxu0
      %v4477 = vpop.f32.mrb[0].mxu0
      %v4478 = vadd.f32 0.0, %v4477
      %v4479 = vpop.f32.mrb[0].mxu0
      %4480 = vdwg.mxu0
      %v4481 = vadd.f32 %v4365, %v4475
      %v4482 = vadd.f32 %v4366, %v4478
      %s4483 = scalar_lea.vmem %s5, 384
      %v4484 = vld [vmem:[%s4483] sm:$0xf]
      %v4485 = vld [vmem:[%s4483 + $0x4] sm:$0xf]
      %v4486 = vld [vmem:[%s4483 + $0x8] sm:$0xf]
      %v4487 = vld [vmem:[%s4483 + $0xc] sm:$0xf]
      %v4488 = vld [vmem:[%s4483 + $0x10] sm:$0xf]
      %v4489 = vld [vmem:[%s4483 + $0x14] sm:$0xf]
      %v4490 = vld [vmem:[%s4483 + $0x18] sm:$0xf]
      %v4491 = vld [vmem:[%s4483 + $0x1c] sm:$0xf]
      %v4492 = vld [vmem:[%s4483 + $0x20] sm:$0xf]
      %v4493 = vld [vmem:[%s4483 + $0x24] sm:$0xf]
      %v4494 = vld [vmem:[%s4483 + $0x28] sm:$0xf]
      %v4495 = vld [vmem:[%s4483 + $0x2c] sm:$0xf]
      %v4496 = vld [vmem:[%s4483 + $0x30] sm:$0xf]
      %v4497 = vld [vmem:[%s4483 + $0x34] sm:$0xf]
      %v4498 = vld [vmem:[%s4483 + $0x38] sm:$0xf]
      %v4499 = vld [vmem:[%s4483 + $0x3c] sm:$0xf]
      %v4500 = vrot.slane %v3799, 3
      %v4501 = vrot.slane %v3800, 3
      %v4502 = vsel %vm3557, %v4500, %v4501
      %v4520 = vunpack.c.l.b16 %v4484
      %v4521 = vunpack.c.l.b16 %v4485
      %v4522 = vunpack.c.l.b16 %v4486
      %v4523 = vunpack.c.l.b16 %v4487
      %v4524 = vunpack.c.l.b16 %v4488
      %v4525 = vunpack.c.l.b16 %v4489
      %v4526 = vunpack.c.l.b16 %v4490
      %v4527 = vunpack.c.l.b16 %v4491
      %v4528 = vunpack.c.l.b16 %v4492
      %v4529 = vunpack.c.l.b16 %v4493
      %v4530 = vunpack.c.l.b16 %v4494
      %v4531 = vunpack.c.l.b16 %v4495
      %v4532 = vunpack.c.l.b16 %v4496
      %v4533 = vunpack.c.l.b16 %v4497
      %v4534 = vunpack.c.l.b16 %v4498
      %v4535 = vunpack.c.l.b16 %v4499
      %v4536 = vpack.c.b16 %v4521, %v4520
      %v4537 = vpack.c.b16 %v4523, %v4522
      %v4538 = vpack.c.b16 %v4525, %v4524
      %v4539 = vpack.c.b16 %v4527, %v4526
      %v4540 = vpack.c.b16 %v4529, %v4528
      %v4541 = vpack.c.b16 %v4531, %v4530
      %v4542 = vpack.c.b16 %v4533, %v4532
      %v4543 = vpack.c.b16 %v4535, %v4534
      %4552 = vmatprep.subr.bf16.mxu0 0
      %4553 = vmatpush1.bf16.msra.mxu0 %v4536
      %4554 = vmatprep.subr.bf16.mxu0 0
      %4555 = vmatpush1.bf16.msra.mxu0 %v4537
      %4556 = vmatprep.subr.bf16.mxu0 0
      %4557 = vmatpush1.bf16.msra.mxu0 %v4538
      %4558 = vmatprep.subr.bf16.mxu0 0
      %4559 = vmatpush1.bf16.msra.mxu0 %v4539
      %4560 = vmatprep.subr.bf16.mxu0 0
      %4561 = vmatpush1.bf16.msra.mxu0 %v4540
      %4562 = vmatprep.subr.bf16.mxu0 0
      %4563 = vmatpush1.bf16.msra.mxu0 %v4541
      %4564 = vmatprep.subr.bf16.mxu0 0
      %4565 = vmatpush1.bf16.msra.mxu0 %v4542
      %4566 = vmatprep.subr.bf16.mxu0 0
      %4567 = vmatpush1.bf16.msra.mxu0 %v4543
      %4568 = vmatprep.subr.bf16.mxu0 0
      %4569 = vmatpush1.bf16.msra.mxu0 0
      %4570 = vmatprep.subr.bf16.mxu0 0
      %4571 = vmatpush1.bf16.msra.mxu0 0
      %4572 = vmatprep.subr.bf16.mxu0 0
      %4573 = vmatpush1.bf16.msra.mxu0 0
      %4574 = vmatprep.subr.bf16.mxu0 0
      %4575 = vmatpush1.bf16.msra.mxu0 0
      %4576 = vmatprep.subr.bf16.mxu0 0
      %4577 = vmatpush1.bf16.msra.mxu0 0
      %4578 = vmatprep.subr.bf16.mxu0 0
      %4579 = vmatpush1.bf16.msra.mxu0 0
      %4580 = vmatprep.subr.bf16.mxu0 0
      %4581 = vmatpush1.bf16.msra.mxu0 0
      %4582 = vmatprep.subr.bf16.mxu0 0
      %4583 = vmatpush1.bf16.msra.mxu0 0
      %4584 = vmatprep.mubr.bf16.mxu0 0
      %4585 = vmatmul.mubr.bf16.gmra.mrb[0].mxu0 %v4502
      %v4586 = vpop.f32.mrb[0].mxu0
      %v4587 = vadd.f32 0.0, %v4586
      %v4588 = vpop.f32.mrb[0].mxu0
      %v4589 = vpop.f32.mrb[0].mxu0
      %v4590 = vadd.f32 0.0, %v4589
      %v4591 = vpop.f32.mrb[0].mxu0
      %4592 = vdwg.mxu0
      %v4593 = vadd.f32 %v4481, %v4587
      %v4594 = vadd.f32 %v4482, %v4590
      %s4595 = scalar_lea.vmem %s5, 448
      %v4596 = vld [vmem:[%s4595] sm:$0xf]
      %v4597 = vld [vmem:[%s4595 + $0x4] sm:$0xf]
      %v4598 = vld [vmem:[%s4595 + $0x8] sm:$0xf]
      %v4599 = vld [vmem:[%s4595 + $0xc] sm:$0xf]
      %v4600 = vld [vmem:[%s4595 + $0x10] sm:$0xf]
      %v4601 = vld [vmem:[%s4595 + $0x14] sm:$0xf]
      %v4602 = vld [vmem:[%s4595 + $0x18] sm:$0xf]
      %v4603 = vld [vmem:[%s4595 + $0x1c] sm:$0xf]
      %v4604 = vld [vmem:[%s4595 + $0x20] sm:$0xf]
      %v4605 = vld [vmem:[%s4595 + $0x24] sm:$0xf]
      %v4606 = vld [vmem:[%s4595 + $0x28] sm:$0xf]
      %v4607 = vld [vmem:[%s4595 + $0x2c] sm:$0xf]
      %v4608 = vld [vmem:[%s4595 + $0x30] sm:$0xf]
      %v4609 = vld [vmem:[%s4595 + $0x34] sm:$0xf]
      %v4610 = vld [vmem:[%s4595 + $0x38] sm:$0xf]
      %v4611 = vld [vmem:[%s4595 + $0x3c] sm:$0xf]
      %v4612 = vrot.slane %v3835, 3
      %v4613 = vrot.slane %v3837, 4
      %v4614 = vor.u32 %v4612, %v4613
      %v4615 = vrot.slane %v4155, 3
      %v4616 = vrot.slane %v4158, 4
      %v4617 = vor.u32 %v4615, %v4616
      %v4618 = vsel %vm3679, %v4614, %v4617
      %v4636 = vunpack.c.l.b16 %v4596
      %v4637 = vunpack.c.l.b16 %v4597
      %v4638 = vunpack.c.l.b16 %v4598
      %v4639 = vunpack.c.l.b16 %v4599
      %v4640 = vunpack.c.l.b16 %v4600
      %v4641 = vunpack.c.l.b16 %v4601
      %v4642 = vunpack.c.l.b16 %v4602
      %v4643 = vunpack.c.l.b16 %v4603
      %v4644 = vunpack.c.l.b16 %v4604
      %v4645 = vunpack.c.l.b16 %v4605
      %v4646 = vunpack.c.l.b16 %v4606
      %v4647 = vunpack.c.l.b16 %v4607
      %v4648 = vunpack.c.l.b16 %v4608
      %v4649 = vunpack.c.l.b16 %v4609
      %v4650 = vunpack.c.l.b16 %v4610
      %v4651 = vunpack.c.l.b16 %v4611
      %v4652 = vpack.c.b16 %v4637, %v4636
      %v4653 = vpack.c.b16 %v4639, %v4638
      %v4654 = vpack.c.b16 %v4641, %v4640
      %v4655 = vpack.c.b16 %v4643, %v4642
      %v4656 = vpack.c.b16 %v4645, %v4644
      %v4657 = vpack.c.b16 %v4647, %v4646
      %v4658 = vpack.c.b16 %v4649, %v4648
      %v4659 = vpack.c.b16 %v4651, %v4650
      %4668 = vmatprep.subr.bf16.mxu0 0
      %4669 = vmatpush1.bf16.msra.mxu0 %v4652
      %4670 = vmatprep.subr.bf16.mxu0 0
      %4671 = vmatpush1.bf16.msra.mxu0 %v4653
      %4672 = vmatprep.subr.bf16.mxu0 0
      %4673 = vmatpush1.bf16.msra.mxu0 %v4654
      %4674 = vmatprep.subr.bf16.mxu0 0
      %4675 = vmatpush1.bf16.msra.mxu0 %v4655
      %4676 = vmatprep.subr.bf16.mxu0 0
      %4677 = vmatpush1.bf16.msra.mxu0 %v4656
      %4678 = vmatprep.subr.bf16.mxu0 0
      %4679 = vmatpush1.bf16.msra.mxu0 %v4657
      %4680 = vmatprep.subr.bf16.mxu0 0
      %4681 = vmatpush1.bf16.msra.mxu0 %v4658
      %4682 = vmatprep.subr.bf16.mxu0 0
      %4683 = vmatpush1.bf16.msra.mxu0 %v4659
      %4684 = vmatprep.subr.bf16.mxu0 0
      %4685 = vmatpush1.bf16.msra.mxu0 0
      %4686 = vmatprep.subr.bf16.mxu0 0
      %4687 = vmatpush1.bf16.msra.mxu0 0
      %4688 = vmatprep.subr.bf16.mxu0 0
      %4689 = vmatpush1.bf16.msra.mxu0 0
      %4690 = vmatprep.subr.bf16.mxu0 0
      %4691 = vmatpush1.bf16.msra.mxu0 0
      %4692 = vmatprep.subr.bf16.mxu0 0
      %4693 = vmatpush1.bf16.msra.mxu0 0
      %4694 = vmatprep.subr.bf16.mxu0 0
      %4695 = vmatpush1.bf16.msra.mxu0 0
      %4696 = vmatprep.subr.bf16.mxu0 0
      %4697 = vmatpush1.bf16.msra.mxu0 0
      %4698 = vmatprep.subr.bf16.mxu0 0
      %4699 = vmatpush1.bf16.msra.mxu0 0
      %4700 = vmatprep.mubr.bf16.mxu0 0
      %4701 = vmatmul.mubr.bf16.gmra.mrb[0].mxu0 %v4618
      %v4702 = vpop.f32.mrb[0].mxu0
      %v4703 = vadd.f32 0.0, %v4702
      %v4704 = vpop.f32.mrb[0].mxu0
      %v4705 = vpop.f32.mrb[0].mxu0
      %v4706 = vadd.f32 0.0, %v4705
      %v4707 = vpop.f32.mrb[0].mxu0
      %4708 = vdwg.mxu0
      %v4709 = vadd.f32 %v4593, %v4703
      %v4710 = vadd.f32 %v4594, %v4706
      %v4711 = vld [vmem:[%s6 + $0x3] sm:$0x1]
      %v4712 = vlaneseq
      %v4713 = vshrl.u32 %v4712, 7
      %v4714 = vsub.s32 0, %v4713
      %v4715 = vrot.slane %v4711, %v4714
      %v4716 = vadd.f32 %v4709, %v4715
      %v4717 = vadd.f32 %v4710, %v4715
      %v4718 = vmax.f32 %v4716, 0.0
      %v4719 = vmax.f32 %v4717, 0.0
      %vm4720 = vcmask 1043456
      %v4721 = vsel %vm4720, %v4718, -inf
      %v4722 = vrot.slane %v4721, 4
      %v4723 = vmax.f32 %v4721, %v4722
      %v4724 = vrot.slane %v4723, 2
      %v4725 = vmax.f32 %v4723, %v4724
      %v4726 = vrot.slane %v4725, 1
      %v4727 = vmax.f32 %v4725, %v4726
      %vm4728 = vcmask 1047556
      %v4729 = vsel %vm4728, %v4718, -inf
      %v4730 = vrot.slane %v4729, 4
      %v4731 = vmax.f32 %v4729, %v4730
      %v4732 = vrot.slane %v4731, 2
      %v4733 = vmax.f32 %v4731, %v4732
      %v4734 = vrot.slane %v4733, 1
      %v4735 = vmax.f32 %v4733, %v4734
      %v4736 = vsel %vm4720, %v4719, -inf
      %v4737 = vrot.slane %v4736, 4
      %v4738 = vmax.f32 %v4736, %v4737
      %v4739 = vrot.slane %v4738, 2
      %v4740 = vmax.f32 %v4738, %v4739
      %v4741 = vrot.slane %v4740, 1
      %v4742 = vmax.f32 %v4740, %v4741
      %vm4743 = vcmask 1040384
      %v4744 = vsel %vm4743, %v4727, %v4735
      %vm4745 = vcmask 1041408
      %v4746 = vsel %vm4745, %v4744, %v4742
      %v4747 = vpack.c.bf16 %v4746, %v4746
      %v4748 = vld [vmem:[%s7] sm:$0xff]
      %v4749 = vld [vmem:[%s7 + $0x8] sm:$0xff]
      %v4750 = vld [vmem:[%s7 + $0x10] sm:$0xff]
      %v4751 = vld [vmem:[%s7 + $0x18] sm:$0xff]
      %v4752 = vld [vmem:[%s7 + $0x20] sm:$0xff]
      %v4753 = vld [vmem:[%s7 + $0x28] sm:$0xff]
      %v4754 = vld [vmem:[%s7 + $0x30] sm:$0xff]
      %v4755 = vld [vmem:[%s7 + $0x38] sm:$0xff]
      %v4756 = vld [vmem:[%s7 + $0x40] sm:$0xff]
      %v4757 = vld [vmem:[%s7 + $0x48] sm:$0xff]
      %v4758 = vld [vmem:[%s7 + $0x50] sm:$0xff]
      %v4759 = vld [vmem:[%s7 + $0x58] sm:$0xff]
      %v4760 = vld [vmem:[%s7 + $0x60] sm:$0xff]
      %v4761 = vld [vmem:[%s7 + $0x68] sm:$0xff]
      %v4762 = vld [vmem:[%s7 + $0x70] sm:$0xff]
      %v4763 = vld [vmem:[%s7 + $0x78] sm:$0xff]
      %v4764 = vld [vmem:[%s7 + $0x80] sm:$0xff]
      %v4765 = vld [vmem:[%s7 + $0x88] sm:$0xff]
      %v4766 = vld [vmem:[%s7 + $0x90] sm:$0xff]
      %v4767 = vld [vmem:[%s7 + $0x98] sm:$0xff]
      %v4768 = vld [vmem:[%s7 + $0xa0] sm:$0xff]
      %v4769 = vld [vmem:[%s7 + $0xa8] sm:$0xff]
      %v4770 = vld [vmem:[%s7 + $0xb0] sm:$0xff]
      %v4771 = vld [vmem:[%s7 + $0xb8] sm:$0xff]
      %v4772 = vld [vmem:[%s7 + $0xc0] sm:$0xff]
      %v4773 = vld [vmem:[%s7 + $0xc8] sm:$0xff]
      %v4774 = vld [vmem:[%s7 + $0xd0] sm:$0xff]
      %v4775 = vld [vmem:[%s7 + $0xd8] sm:$0xff]
      %v4776 = vld [vmem:[%s7 + $0xe0] sm:$0xff]
      %v4777 = vld [vmem:[%s7 + $0xe8] sm:$0xff]
      %v4778 = vld [vmem:[%s7 + $0xf0] sm:$0xff]
      %v4779 = vld [vmem:[%s7 + $0xf8] sm:$0xff]
      %v4780 = vld [vmem:[%s9] sm:$0xf]
      %v4782 = vlaneseq
      %v4783 = vshrl.u32 %v4782, 7
      %v4784 = vsub.s32 0, %v4783
      %v4785 = vrot.slane %v4780, %v4784
      %v4786 = vlaneseq
      %v4787 = vshrl.u32 %v4786, 7
      %v4788 = vsub.s32 1, %v4787
      %v4789 = vrot.slane %v4780, %v4788
      %v4790 = vlaneseq
      %v4791 = vshrl.u32 %v4790, 7
      %v4792 = vsub.s32 2, %v4791
      %v4793 = vrot.slane %v4780, %v4792
      %v4794 = vlaneseq
      %v4795 = vshrl.u32 %v4794, 7
      %v4796 = vsub.s32 3, %v4795
      %v4797 = vrot.slane %v4780, %v4796
      %v4834 = vunpack.c.l.b16 %v4748
      %v4835 = vunpack.c.h.b16 %v4748
      %v4836 = vunpack.c.l.b16 %v4749
      %v4837 = vunpack.c.h.b16 %v4749
      %v4838 = vunpack.c.l.b16 %v4750
      %v4839 = vunpack.c.h.b16 %v4750
      %v4840 = vunpack.c.l.b16 %v4751
      %v4841 = vunpack.c.h.b16 %v4751
      %v4842 = vunpack.c.l.b16 %v4752
      %v4843 = vunpack.c.h.b16 %v4752
      %v4844 = vunpack.c.l.b16 %v4753
      %v4845 = vunpack.c.h.b16 %v4753
      %v4846 = vunpack.c.l.b16 %v4754
      %v4847 = vunpack.c.h.b16 %v4754
      %v4848 = vunpack.c.l.b16 %v4755
      %v4849 = vunpack.c.h.b16 %v4755
      %v4850 = vunpack.c.l.b16 %v4756
      %v4851 = vunpack.c.h.b16 %v4756
      %v4852 = vunpack.c.l.b16 %v4757
      %v4853 = vunpack.c.h.b16 %v4757
      %v4854 = vunpack.c.l.b16 %v4758
      %v4855 = vunpack.c.h.b16 %v4758
      %v4856 = vunpack.c.l.b16 %v4759
      %v4857 = vunpack.c.h.b16 %v4759
      %v4858 = vunpack.c.l.b16 %v4760
      %v4859 = vunpack.c.h.b16 %v4760
      %v4860 = vunpack.c.l.b16 %v4761
      %v4861 = vunpack.c.h.b16 %v4761
      %v4862 = vunpack.c.l.b16 %v4762
      %v4863 = vunpack.c.h.b16 %v4762
      %v4864 = vunpack.c.l.b16 %v4763
      %v4865 = vunpack.c.h.b16 %v4763
      %v4866 = vunpack.c.l.b16 %v4764
      %v4867 = vunpack.c.h.b16 %v4764
      %v4868 = vunpack.c.l.b16 %v4765
      %v4869 = vunpack.c.h.b16 %v4765
      %v4870 = vunpack.c.l.b16 %v4766
      %v4871 = vunpack.c.h.b16 %v4766
      %v4872 = vunpack.c.l.b16 %v4767
      %v4873 = vunpack.c.h.b16 %v4767
      %v4874 = vunpack.c.l.b16 %v4768
      %v4875 = vunpack.c.h.b16 %v4768
      %v4876 = vunpack.c.l.b16 %v4769
      %v4877 = vunpack.c.h.b16 %v4769
      %v4878 = vunpack.c.l.b16 %v4770
      %v4879 = vunpack.c.h.b16 %v4770
      %v4880 = vunpack.c.l.b16 %v4771
      %v4881 = vunpack.c.h.b16 %v4771
      %v4882 = vunpack.c.l.b16 %v4772
      %v4883 = vunpack.c.h.b16 %v4772
      %v4884 = vunpack.c.l.b16 %v4773
      %v4885 = vunpack.c.h.b16 %v4773
      %v4886 = vunpack.c.l.b16 %v4774
      %v4887 = vunpack.c.h.b16 %v4774
      %v4888 = vunpack.c.l.b16 %v4775
      %v4889 = vunpack.c.h.b16 %v4775
      %v4890 = vunpack.c.l.b16 %v4776
      %v4891 = vunpack.c.h.b16 %v4776
      %v4892 = vunpack.c.l.b16 %v4777
      %v4893 = vunpack.c.h.b16 %v4777
      %v4894 = vunpack.c.l.b16 %v4778
      %v4895 = vunpack.c.h.b16 %v4778
      %v4896 = vunpack.c.l.b16 %v4779
      %v4897 = vunpack.c.h.b16 %v4779
      %v4898 = vpack.c.b16 %v4838, %v4834
      %v4899 = vpack.c.b16 %v4839, %v4835
      %v4900 = vpack.c.b16 %v4840, %v4836
      %v4901 = vpack.c.b16 %v4841, %v4837
      %v4902 = vpack.c.b16 %v4846, %v4842
      %v4903 = vpack.c.b16 %v4847, %v4843
      %v4904 = vpack.c.b16 %v4848, %v4844
      %v4905 = vpack.c.b16 %v4849, %v4845
      %v4906 = vpack.c.b16 %v4854, %v4850
      %v4907 = vpack.c.b16 %v4855, %v4851
      %v4908 = vpack.c.b16 %v4856, %v4852
      %v4909 = vpack.c.b16 %v4857, %v4853
      %v4910 = vpack.c.b16 %v4862, %v4858
      %v4911 = vpack.c.b16 %v4863, %v4859
      %v4912 = vpack.c.b16 %v4864, %v4860
      %v4913 = vpack.c.b16 %v4865, %v4861
      %v4914 = vpack.c.b16 %v4870, %v4866
      %v4915 = vpack.c.b16 %v4871, %v4867
      %v4916 = vpack.c.b16 %v4872, %v4868
      %v4917 = vpack.c.b16 %v4873, %v4869
      %v4918 = vpack.c.b16 %v4878, %v4874
      %v4919 = vpack.c.b16 %v4879, %v4875
      %v4920 = vpack.c.b16 %v4880, %v4876
      %v4921 = vpack.c.b16 %v4881, %v4877
      %v4922 = vpack.c.b16 %v4886, %v4882
      %v4923 = vpack.c.b16 %v4887, %v4883
      %v4924 = vpack.c.b16 %v4888, %v4884
      %v4925 = vpack.c.b16 %v4889, %v4885
      %v4926 = vpack.c.b16 %v4894, %v4890
      %v4927 = vpack.c.b16 %v4895, %v4891
      %v4928 = vpack.c.b16 %v4896, %v4892
      %v4929 = vpack.c.b16 %v4897, %v4893
      %4962 = vmatprep.subr.bf16.mxu0 %v4899
      %4963 = vmatpush1.bf16.msra.mxu0 %v4898
      %4964 = vmatprep.subr.bf16.mxu0 %v4903
      %4965 = vmatpush1.bf16.msra.mxu0 %v4902
      %4966 = vmatprep.subr.bf16.mxu0 %v4907
      %4967 = vmatpush1.bf16.msra.mxu0 %v4906
      %4968 = vmatprep.subr.bf16.mxu0 %v4911
      %4969 = vmatpush1.bf16.msra.mxu0 %v4910
      %4970 = vmatprep.subr.bf16.mxu0 %v4915
      %4971 = vmatpush1.bf16.msra.mxu0 %v4914
      %4972 = vmatprep.subr.bf16.mxu0 %v4919
      %4973 = vmatpush1.bf16.msra.mxu0 %v4918
      %4974 = vmatprep.subr.bf16.mxu0 %v4923
      %4975 = vmatpush1.bf16.msra.mxu0 %v4922
      %4976 = vmatprep.subr.bf16.mxu0 %v4927
      %4977 = vmatpush1.bf16.msra.mxu0 %v4926
      %4978 = vmatprep.subr.bf16.mxu0 0
      %4979 = vmatpush1.bf16.msra.mxu0 0
      %4980 = vmatprep.subr.bf16.mxu0 0
      %4981 = vmatpush1.bf16.msra.mxu0 0
      %4982 = vmatprep.subr.bf16.mxu0 0
      %4983 = vmatpush1.bf16.msra.mxu0 0
      %4984 = vmatprep.subr.bf16.mxu0 0
      %4985 = vmatpush1.bf16.msra.mxu0 0
      %4986 = vmatprep.subr.bf16.mxu0 0
      %4987 = vmatpush1.bf16.msra.mxu0 0
      %4988 = vmatprep.subr.bf16.mxu0 0
      %4989 = vmatpush1.bf16.msra.mxu0 0
      %4990 = vmatprep.subr.bf16.mxu0 0
      %4991 = vmatpush1.bf16.msra.mxu0 0
      %4992 = vmatprep.subr.bf16.mxu0 0
      %4993 = vmatpush1.bf16.msra.mxu0 0
      %4994 = vmatprep.mubr.bf16.mxu0 0
      %4995 = vmatmul.mubr.bf16.gmra.mrb[0].mxu0 %v4747
      %v4996 = vpop.f32.mrb[0].mxu0
      %v4997 = vadd.f32 %v4785, %v4996
      %v4998 = vpop.f32.mrb[0].mxu0
      %v4999 = vadd.f32 %v4789, %v4998
      %v5000 = vpop.f32.mrb[0].mxu0
      %v5001 = vpop.f32.mrb[0].mxu0
      %5002 = vdwg.mxu0
      %5003 = vmatprep.subr.bf16.mxu0 %v4901
      %5004 = vmatpush1.bf16.msra.mxu0 %v4900
      %5005 = vmatprep.subr.bf16.mxu0 %v4905
      %5006 = vmatpush1.bf16.msra.mxu0 %v4904
      %5007 = vmatprep.subr.bf16.mxu0 %v4909
      %5008 = vmatpush1.bf16.msra.mxu0 %v4908
      %5009 = vmatprep.subr.bf16.mxu0 %v4913
      %5010 = vmatpush1.bf16.msra.mxu0 %v4912
      %5011 = vmatprep.subr.bf16.mxu0 %v4917
      %5012 = vmatpush1.bf16.msra.mxu0 %v4916
      %5013 = vmatprep.subr.bf16.mxu0 %v4921
      %5014 = vmatpush1.bf16.msra.mxu0 %v4920
      %5015 = vmatprep.subr.bf16.mxu0 %v4925
      %5016 = vmatpush1.bf16.msra.mxu0 %v4924
      %5017 = vmatprep.subr.bf16.mxu0 %v4929
      %5018 = vmatpush1.bf16.msra.mxu0 %v4928
      %5019 = vmatprep.subr.bf16.mxu0 0
      %5020 = vmatpush1.bf16.msra.mxu0 0
      %5021 = vmatprep.subr.bf16.mxu0 0
      %5022 = vmatpush1.bf16.msra.mxu0 0
      %5023 = vmatprep.subr.bf16.mxu0 0
      %5024 = vmatpush1.bf16.msra.mxu0 0
      %5025 = vmatprep.subr.bf16.mxu0 0
      %5026 = vmatpush1.bf16.msra.mxu0 0
      %5027 = vmatprep.subr.bf16.mxu0 0
      %5028 = vmatpush1.bf16.msra.mxu0 0
      %5029 = vmatprep.subr.bf16.mxu0 0
      %5030 = vmatpush1.bf16.msra.mxu0 0
      %5031 = vmatprep.subr.bf16.mxu0 0
      %5032 = vmatpush1.bf16.msra.mxu0 0
      %5033 = vmatprep.subr.bf16.mxu0 0
      %5034 = vmatpush1.bf16.msra.mxu0 0
      %5035 = vmatprep.mubr.bf16.mxu0 0
      %5036 = vmatmul.mubr.bf16.gmra.mrb[0].mxu0 %v4747
      %v5037 = vpop.f32.mrb[0].mxu0
      %v5038 = vadd.f32 %v4793, %v5037
      %v5039 = vpop.f32.mrb[0].mxu0
      %v5040 = vadd.f32 %v4797, %v5039
      %v5041 = vpop.f32.mrb[0].mxu0
      %v5042 = vpop.f32.mrb[0].mxu0
      %5043 = vdwg.mxu0
      %v5044 = vld [vmem:[%s8] sm:$0xff]
      %v5045 = vld [vmem:[%s8 + $0x8] sm:$0xff]
      %v5046 = vld [vmem:[%s8 + $0x10] sm:$0xff]
      %v5047 = vld [vmem:[%s8 + $0x18] sm:$0xff]
      %v5048 = vld [vmem:[%s8 + $0x20] sm:$0xff]
      %v5049 = vld [vmem:[%s8 + $0x28] sm:$0xff]
      %v5050 = vld [vmem:[%s8 + $0x30] sm:$0xff]
      %v5051 = vld [vmem:[%s8 + $0x38] sm:$0xff]
      %v5052 = vld [vmem:[%s8 + $0x40] sm:$0xff]
      %v5053 = vld [vmem:[%s8 + $0x48] sm:$0xff]
      %v5054 = vld [vmem:[%s8 + $0x50] sm:$0xff]
      %v5055 = vld [vmem:[%s8 + $0x58] sm:$0xff]
      %v5056 = vld [vmem:[%s8 + $0x60] sm:$0xff]
      %v5057 = vld [vmem:[%s8 + $0x68] sm:$0xff]
      %v5058 = vld [vmem:[%s8 + $0x70] sm:$0xff]
      %v5059 = vld [vmem:[%s8 + $0x78] sm:$0xff]
      %v5060 = vld [vmem:[%s8 + $0x80] sm:$0xff]
      %v5061 = vld [vmem:[%s8 + $0x88] sm:$0xff]
      %v5062 = vld [vmem:[%s8 + $0x90] sm:$0xff]
      %v5063 = vld [vmem:[%s8 + $0x98] sm:$0xff]
      %v5064 = vld [vmem:[%s8 + $0xa0] sm:$0xff]
      %v5065 = vld [vmem:[%s8 + $0xa8] sm:$0xff]
      %v5066 = vld [vmem:[%s8 + $0xb0] sm:$0xff]
      %v5067 = vld [vmem:[%s8 + $0xb8] sm:$0xff]
      %v5068 = vld [vmem:[%s8 + $0xc0] sm:$0xff]
      %v5069 = vld [vmem:[%s8 + $0xc8] sm:$0xff]
      %v5070 = vld [vmem:[%s8 + $0xd0] sm:$0xff]
      %v5071 = vld [vmem:[%s8 + $0xd8] sm:$0xff]
      %v5072 = vld [vmem:[%s8 + $0xe0] sm:$0xff]
      %v5073 = vld [vmem:[%s8 + $0xe8] sm:$0xff]
      %v5074 = vld [vmem:[%s8 + $0xf0] sm:$0xff]
      %v5075 = vld [vmem:[%s8 + $0xf8] sm:$0xff]
      %v5108 = vunpack.c.l.b16 %v5044
      %v5109 = vunpack.c.h.b16 %v5044
      %v5110 = vunpack.c.l.b16 %v5045
      %v5111 = vunpack.c.h.b16 %v5045
      %v5112 = vunpack.c.l.b16 %v5046
      %v5113 = vunpack.c.h.b16 %v5046
      %v5114 = vunpack.c.l.b16 %v5047
      %v5115 = vunpack.c.h.b16 %v5047
      %v5116 = vunpack.c.l.b16 %v5048
      %v5117 = vunpack.c.h.b16 %v5048
      %v5118 = vunpack.c.l.b16 %v5049
      %v5119 = vunpack.c.h.b16 %v5049
      %v5120 = vunpack.c.l.b16 %v5050
      %v5121 = vunpack.c.h.b16 %v5050
      %v5122 = vunpack.c.l.b16 %v5051
      %v5123 = vunpack.c.h.b16 %v5051
      %v5124 = vunpack.c.l.b16 %v5052
      %v5125 = vunpack.c.h.b16 %v5052
      %v5126 = vunpack.c.l.b16 %v5053
      %v5127 = vunpack.c.h.b16 %v5053
      %v5128 = vunpack.c.l.b16 %v5054
      %v5129 = vunpack.c.h.b16 %v5054
      %v5130 = vunpack.c.l.b16 %v5055
      %v5131 = vunpack.c.h.b16 %v5055
      %v5132 = vunpack.c.l.b16 %v5056
      %v5133 = vunpack.c.h.b16 %v5056
      %v5134 = vunpack.c.l.b16 %v5057
      %v5135 = vunpack.c.h.b16 %v5057
      %v5136 = vunpack.c.l.b16 %v5058
      %v5137 = vunpack.c.h.b16 %v5058
      %v5138 = vunpack.c.l.b16 %v5059
      %v5139 = vunpack.c.h.b16 %v5059
      %v5140 = vunpack.c.l.b16 %v5060
      %v5141 = vunpack.c.h.b16 %v5060
      %v5142 = vunpack.c.l.b16 %v5061
      %v5143 = vunpack.c.h.b16 %v5061
      %v5144 = vunpack.c.l.b16 %v5062
      %v5145 = vunpack.c.h.b16 %v5062
      %v5146 = vunpack.c.l.b16 %v5063
      %v5147 = vunpack.c.h.b16 %v5063
      %v5148 = vunpack.c.l.b16 %v5064
      %v5149 = vunpack.c.h.b16 %v5064
      %v5150 = vunpack.c.l.b16 %v5065
      %v5151 = vunpack.c.h.b16 %v5065
      %v5152 = vunpack.c.l.b16 %v5066
      %v5153 = vunpack.c.h.b16 %v5066
      %v5154 = vunpack.c.l.b16 %v5067
      %v5155 = vunpack.c.h.b16 %v5067
      %v5156 = vunpack.c.l.b16 %v5068
      %v5157 = vunpack.c.h.b16 %v5068
      %v5158 = vunpack.c.l.b16 %v5069
      %v5159 = vunpack.c.h.b16 %v5069
      %v5160 = vunpack.c.l.b16 %v5070
      %v5161 = vunpack.c.h.b16 %v5070
      %v5162 = vunpack.c.l.b16 %v5071
      %v5163 = vunpack.c.h.b16 %v5071
      %v5164 = vunpack.c.l.b16 %v5072
      %v5165 = vunpack.c.h.b16 %v5072
      %v5166 = vunpack.c.l.b16 %v5073
      %v5167 = vunpack.c.h.b16 %v5073
      %v5168 = vunpack.c.l.b16 %v5074
      %v5169 = vunpack.c.h.b16 %v5074
      %v5170 = vunpack.c.l.b16 %v5075
      %v5171 = vunpack.c.h.b16 %v5075
      %v5172 = vpack.c.b16 %v5112, %v5108
      %v5173 = vpack.c.b16 %v5113, %v5109
      %v5174 = vpack.c.b16 %v5114, %v5110
      %v5175 = vpack.c.b16 %v5115, %v5111
      %v5176 = vpack.c.b16 %v5120, %v5116
      %v5177 = vpack.c.b16 %v5121, %v5117
      %v5178 = vpack.c.b16 %v5122, %v5118
      %v5179 = vpack.c.b16 %v5123, %v5119
      %v5180 = vpack.c.b16 %v5128, %v5124
      %v5181 = vpack.c.b16 %v5129, %v5125
      %v5182 = vpack.c.b16 %v5130, %v5126
      %v5183 = vpack.c.b16 %v5131, %v5127
      %v5184 = vpack.c.b16 %v5136, %v5132
      %v5185 = vpack.c.b16 %v5137, %v5133
      %v5186 = vpack.c.b16 %v5138, %v5134
      %v5187 = vpack.c.b16 %v5139, %v5135
      %v5188 = vpack.c.b16 %v5144, %v5140
      %v5189 = vpack.c.b16 %v5145, %v5141
      %v5190 = vpack.c.b16 %v5146, %v5142
      %v5191 = vpack.c.b16 %v5147, %v5143
      %v5192 = vpack.c.b16 %v5152, %v5148
      %v5193 = vpack.c.b16 %v5153, %v5149
      %v5194 = vpack.c.b16 %v5154, %v5150
      %v5195 = vpack.c.b16 %v5155, %v5151
      %v5196 = vpack.c.b16 %v5160, %v5156
      %v5197 = vpack.c.b16 %v5161, %v5157
      %v5198 = vpack.c.b16 %v5162, %v5158
      %v5199 = vpack.c.b16 %v5163, %v5159
      %v5200 = vpack.c.b16 %v5168, %v5164
      %v5201 = vpack.c.b16 %v5169, %v5165
      %v5202 = vpack.c.b16 %v5170, %v5166
      %v5203 = vpack.c.b16 %v5171, %v5167
      %5236 = vmatprep.subr.bf16.mxu0 %v5173
      %5237 = vmatpush1.bf16.msra.mxu0 %v5172
      %5238 = vmatprep.subr.bf16.mxu0 %v5177
      %5239 = vmatpush1.bf16.msra.mxu0 %v5176
      %5240 = vmatprep.subr.bf16.mxu0 %v5181
      %5241 = vmatpush1.bf16.msra.mxu0 %v5180
      %5242 = vmatprep.subr.bf16.mxu0 %v5185
      %5243 = vmatpush1.bf16.msra.mxu0 %v5184
      %5244 = vmatprep.subr.bf16.mxu0 %v5189
      %5245 = vmatpush1.bf16.msra.mxu0 %v5188
      %5246 = vmatprep.subr.bf16.mxu0 %v5193
      %5247 = vmatpush1.bf16.msra.mxu0 %v5192
      %5248 = vmatprep.subr.bf16.mxu0 %v5197
      %5249 = vmatpush1.bf16.msra.mxu0 %v5196
      %5250 = vmatprep.subr.bf16.mxu0 %v5201
      %5251 = vmatpush1.bf16.msra.mxu0 %v5200
      %5252 = vmatprep.subr.bf16.mxu0 0
      %5253 = vmatpush1.bf16.msra.mxu0 0
      %5254 = vmatprep.subr.bf16.mxu0 0
      %5255 = vmatpush1.bf16.msra.mxu0 0
      %5256 = vmatprep.subr.bf16.mxu0 0
      %5257 = vmatpush1.bf16.msra.mxu0 0
      %5258 = vmatprep.subr.bf16.mxu0 0
      %5259 = vmatpush1.bf16.msra.mxu0 0
      %5260 = vmatprep.subr.bf16.mxu0 0
      %5261 = vmatpush1.bf16.msra.mxu0 0
      %5262 = vmatprep.subr.bf16.mxu0 0
      %5263 = vmatpush1.bf16.msra.mxu0 0
      %5264 = vmatprep.subr.bf16.mxu0 0
      %5265 = vmatpush1.bf16.msra.mxu0 0
      %5266 = vmatprep.subr.bf16.mxu0 0
      %5267 = vmatpush1.bf16.msra.mxu0 0
      %5268 = vmatprep.mubr.bf16.mxu0 0
      %5269 = vmatmul.mubr.bf16.gmra.mrb[0].mxu0 0
      %v5270 = vpop.f32.mrb[0].mxu0
      %v5271 = vadd.f32 0.0, %v5270
      %v5272 = vpop.f32.mrb[0].mxu0
      %v5273 = vadd.f32 0.0, %v5272
      %v5274 = vpop.f32.mrb[0].mxu0
      %v5275 = vpop.f32.mrb[0].mxu0
      %5276 = vdwg.mxu0
      %5277 = vmatprep.subr.bf16.mxu0 %v5175
      %5278 = vmatpush1.bf16.msra.mxu0 %v5174
      %5279 = vmatprep.subr.bf16.mxu0 %v5179
      %5280 = vmatpush1.bf16.msra.mxu0 %v5178
      %5281 = vmatprep.subr.bf16.mxu0 %v5183
      %5282 = vmatpush1.bf16.msra.mxu0 %v5182
      %5283 = vmatprep.subr.bf16.mxu0 %v5187
      %5284 = vmatpush1.bf16.msra.mxu0 %v5186
      %5285 = vmatprep.subr.bf16.mxu0 %v5191
      %5286 = vmatpush1.bf16.msra.mxu0 %v5190
      %5287 = vmatprep.subr.bf16.mxu0 %v5195
      %5288 = vmatpush1.bf16.msra.mxu0 %v5194
      %5289 = vmatprep.subr.bf16.mxu0 %v5199
      %5290 = vmatpush1.bf16.msra.mxu0 %v5198
      %5291 = vmatprep.subr.bf16.mxu0 %v5203
      %5292 = vmatpush1.bf16.msra.mxu0 %v5202
      %5293 = vmatprep.subr.bf16.mxu0 0
      %5294 = vmatpush1.bf16.msra.mxu0 0
      %5295 = vmatprep.subr.bf16.mxu0 0
      %5296 = vmatpush1.bf16.msra.mxu0 0
      %5297 = vmatprep.subr.bf16.mxu0 0
      %5298 = vmatpush1.bf16.msra.mxu0 0
      %5299 = vmatprep.subr.bf16.mxu0 0
      %5300 = vmatpush1.bf16.msra.mxu0 0
      %5301 = vmatprep.subr.bf16.mxu0 0
      %5302 = vmatpush1.bf16.msra.mxu0 0
      %5303 = vmatprep.subr.bf16.mxu0 0
      %5304 = vmatpush1.bf16.msra.mxu0 0
      %5305 = vmatprep.subr.bf16.mxu0 0
      %5306 = vmatpush1.bf16.msra.mxu0 0
      %5307 = vmatprep.subr.bf16.mxu0 0
      %5308 = vmatpush1.bf16.msra.mxu0 0
      %5309 = vmatprep.mubr.bf16.mxu0 0
      %5310 = vmatmul.mubr.bf16.gmra.mrb[0].mxu0 0
      %v5311 = vpop.f32.mrb[0].mxu0
      %v5312 = vadd.f32 0.0, %v5311
      %v5313 = vpop.f32.mrb[0].mxu0
      %v5314 = vadd.f32 0.0, %v5313
      %v5315 = vpop.f32.mrb[0].mxu0
      %v5316 = vpop.f32.mrb[0].mxu0
      %5317 = vdwg.mxu0
      %v5318 = vadd.f32 %v4997, %v5271
      %v5319 = vadd.f32 %v4999, %v5273
      %v5320 = vadd.f32 %v5038, %v5312
      %v5321 = vadd.f32 %v5040, %v5314
      %v5322 = vxor.u32 %v5318, 2147483648
      %v5323 = vmul.f32 %v5322, 1.442695
      %v5324 = vpow.pop %v5323
      %v5325 = vadd.f32 %v5324, 1.0
      %v5326 = vrcp.pop %v5325
      %v5327 = vmul.f32 1.0, %v5326
      %v5328 = vxor.u32 %v5319, 2147483648
      %v5329 = vmul.f32 %v5328, 1.442695
      %v5330 = vpow.pop %v5329
      %v5331 = vadd.f32 %v5330, 1.0
      %v5332 = vrcp.pop %v5331
      %v5333 = vmul.f32 1.0, %v5332
      %v5334 = vtanh.pop %v5320
      %v5335 = vxor.u32 %v5321, 2147483648
      %v5336 = vmul.f32 %v5335, 1.442695
      %v5337 = vpow.pop %v5336
      %v5338 = vadd.f32 %v5337, 1.0
      %v5339 = vrcp.pop %v5338
      %v5340 = vmul.f32 1.0, %v5339
      %v5341 = vmul.f32 %v5333, 0.0
      %v5342 = vmul.f32 %v5327, %v5334
      %v5343 = vadd.f32 %v5341, %v5342
      %v5344 = vtanh.pop %v5343
      %v5345 = vmul.f32 %v5340, %v5344
      %v5346 = vadd.f32 %v5345, 0.0
      %v5347 = vpack.c.bf16 %v5345, %v5345
      %5348 = vmatprep.subr.bf16.mxu0 %v5173
      %5349 = vmatpush1.bf16.msra.mxu0 %v5172
      %5350 = vmatprep.subr.bf16.mxu0 %v5177
      %5351 = vmatpush1.bf16.msra.mxu0 %v5176
      %5352 = vmatprep.subr.bf16.mxu0 %v5181
      %5353 = vmatpush1.bf16.msra.mxu0 %v5180
      %5354 = vmatprep.subr.bf16.mxu0 %v5185
      %5355 = vmatpush1.bf16.msra.mxu0 %v5184
      %5356 = vmatprep.subr.bf16.mxu0 %v5189
      %5357 = vmatpush1.bf16.msra.mxu0 %v5188
      %5358 = vmatprep.subr.bf16.mxu0 %v5193
      %5359 = vmatpush1.bf16.msra.mxu0 %v5192
      %5360 = vmatprep.subr.bf16.mxu0 %v5197
      %5361 = vmatpush1.bf16.msra.mxu0 %v5196
      %5362 = vmatprep.subr.bf16.mxu0 %v5201
      %5363 = vmatpush1.bf16.msra.mxu0 %v5200
      %5364 = vmatprep.subr.bf16.mxu0 0
      %5365 = vmatpush1.bf16.msra.mxu0 0
      %5366 = vmatprep.subr.bf16.mxu0 0
      %5367 = vmatpush1.bf16.msra.mxu0 0
      %5368 = vmatprep.subr.bf16.mxu0 0
      %5369 = vmatpush1.bf16.msra.mxu0 0
      %5370 = vmatprep.subr.bf16.mxu0 0
      %5371 = vmatpush1.bf16.msra.mxu0 0
      %5372 = vmatprep.subr.bf16.mxu0 0
      %5373 = vmatpush1.bf16.msra.mxu0 0
      %5374 = vmatprep.subr.bf16.mxu0 0
      %5375 = vmatpush1.bf16.msra.mxu0 0
      %5376 = vmatprep.subr.bf16.mxu0 0
      %5377 = vmatpush1.bf16.msra.mxu0 0
      %5378 = vmatprep.subr.bf16.mxu0 0
      %5379 = vmatpush1.bf16.msra.mxu0 0
      %5380 = vmatprep.mubr.bf16.mxu0 0
      %5381 = vmatmul.mubr.bf16.gmra.mrb[0].mxu0 %v5347
      %v5382 = vpop.f32.mrb[0].mxu0
      %v5383 = vadd.f32 0.0, %v5382
      %v5384 = vpop.f32.mrb[0].mxu0
      %v5385 = vadd.f32 0.0, %v5384
      %v5386 = vpop.f32.mrb[0].mxu0
      %v5387 = vpop.f32.mrb[0].mxu0
      %5388 = vdwg.mxu0
      %5389 = vmatprep.subr.bf16.mxu0 %v5175
      %5390 = vmatpush1.bf16.msra.mxu0 %v5174
      %5391 = vmatprep.subr.bf16.mxu0 %v5179
      %5392 = vmatpush1.bf16.msra.mxu0 %v5178
      %5393 = vmatprep.subr.bf16.mxu0 %v5183
      %5394 = vmatpush1.bf16.msra.mxu0 %v5182
      %5395 = vmatprep.subr.bf16.mxu0 %v5187
      %5396 = vmatpush1.bf16.msra.mxu0 %v5186
      %5397 = vmatprep.subr.bf16.mxu0 %v5191
      %5398 = vmatpush1.bf16.msra.mxu0 %v5190
      %5399 = vmatprep.subr.bf16.mxu0 %v5195
      %5400 = vmatpush1.bf16.msra.mxu0 %v5194
      %5401 = vmatprep.subr.bf16.mxu0 %v5199
      %5402 = vmatpush1.bf16.msra.mxu0 %v5198
      %5403 = vmatprep.subr.bf16.mxu0 %v5203
      %5404 = vmatpush1.bf16.msra.mxu0 %v5202
      %5405 = vmatprep.subr.bf16.mxu0 0
      %5406 = vmatpush1.bf16.msra.mxu0 0
      %5407 = vmatprep.subr.bf16.mxu0 0
      %5408 = vmatpush1.bf16.msra.mxu0 0
      %5409 = vmatprep.subr.bf16.mxu0 0
      %5410 = vmatpush1.bf16.msra.mxu0 0
      %5411 = vmatprep.subr.bf16.mxu0 0
      %5412 = vmatpush1.bf16.msra.mxu0 0
      %5413 = vmatprep.subr.bf16.mxu0 0
      %5414 = vmatpush1.bf16.msra.mxu0 0
      %5415 = vmatprep.subr.bf16.mxu0 0
      %5416 = vmatpush1.bf16.msra.mxu0 0
      %5417 = vmatprep.subr.bf16.mxu0 0
      %5418 = vmatpush1.bf16.msra.mxu0 0
      %5419 = vmatprep.subr.bf16.mxu0 0
      %5420 = vmatpush1.bf16.msra.mxu0 0
      %5421 = vmatprep.mubr.bf16.mxu0 0
      %5422 = vmatmul.mubr.bf16.gmra.mrb[0].mxu0 %v5347
      %v5423 = vpop.f32.mrb[0].mxu0
      %v5424 = vadd.f32 0.0, %v5423
      %v5425 = vpop.f32.mrb[0].mxu0
      %v5426 = vadd.f32 0.0, %v5425
      %v5427 = vpop.f32.mrb[0].mxu0
      %v5428 = vpop.f32.mrb[0].mxu0
      %5429 = vdwg.mxu0
      %v5434 = vrot.slane %v5383, 7
      %v5435 = vrot.slane %v5385, 7
      %v5436 = vrot.slane %v5424, 7
      %v5437 = vrot.slane %v5426, 7
      %v5442 = vadd.f32 %v4997, %v5434
      %v5443 = vadd.f32 %v4999, %v5435
      %v5444 = vadd.f32 %v5038, %v5436
      %v5445 = vadd.f32 %v5040, %v5437
      %v5446 = vxor.u32 %v5442, 2147483648
      %v5447 = vmul.f32 %v5446, 1.442695
      %v5448 = vpow.pop %v5447
      %v5449 = vadd.f32 %v5448, 1.0
      %v5450 = vrcp.pop %v5449
      %v5451 = vmul.f32 1.0, %v5450
      %v5452 = vxor.u32 %v5443, 2147483648
      %v5453 = vmul.f32 %v5452, 1.442695
      %v5454 = vpow.pop %v5453
      %v5455 = vadd.f32 %v5454, 1.0
      %v5456 = vrcp.pop %v5455
      %v5457 = vmul.f32 1.0, %v5456
      %v5458 = vtanh.pop %v5444
      %v5459 = vxor.u32 %v5445, 2147483648
      %v5460 = vmul.f32 %v5459, 1.442695
      %v5461 = vpow.pop %v5460
      %v5462 = vadd.f32 %v5461, 1.0
      %v5463 = vrcp.pop %v5462
      %v5464 = vmul.f32 1.0, %v5463
      %v5466 = vrot.slane %v5343, 7
      %v5468 = vmul.f32 %v5457, %v5466
      %v5469 = vmul.f32 %v5451, %v5458
      %v5470 = vadd.f32 %v5468, %v5469
      %v5471 = vtanh.pop %v5470
      %v5472 = vmul.f32 %v5464, %v5471
      %v5474 = vrot.slane %v5472, 1
      %v5476 = vadd.f32 %v5346, %v5474
      %v5477 = vpack.c.bf16 %v5472, %v5472
      %v5479 = vshrl.u32 %v5477, 16
      %5482 = vmatprep.subr.bf16.mxu0 %v5173
      %5483 = vmatpush1.bf16.msra.mxu0 %v5172
      %5484 = vmatprep.subr.bf16.mxu0 %v5177
      %5485 = vmatpush1.bf16.msra.mxu0 %v5176
      %5486 = vmatprep.subr.bf16.mxu0 %v5181
      %5487 = vmatpush1.bf16.msra.mxu0 %v5180
      %5488 = vmatprep.subr.bf16.mxu0 %v5185
      %5489 = vmatpush1.bf16.msra.mxu0 %v5184
      %5490 = vmatprep.subr.bf16.mxu0 %v5189
      %5491 = vmatpush1.bf16.msra.mxu0 %v5188
      %5492 = vmatprep.subr.bf16.mxu0 %v5193
      %5493 = vmatpush1.bf16.msra.mxu0 %v5192
      %5494 = vmatprep.subr.bf16.mxu0 %v5197
      %5495 = vmatpush1.bf16.msra.mxu0 %v5196
      %5496 = vmatprep.subr.bf16.mxu0 %v5201
      %5497 = vmatpush1.bf16.msra.mxu0 %v5200
      %5498 = vmatprep.subr.bf16.mxu0 0
      %5499 = vmatpush1.bf16.msra.mxu0 0
      %5500 = vmatprep.subr.bf16.mxu0 0
      %5501 = vmatpush1.bf16.msra.mxu0 0
      %5502 = vmatprep.subr.bf16.mxu0 0
      %5503 = vmatpush1.bf16.msra.mxu0 0
      %5504 = vmatprep.subr.bf16.mxu0 0
      %5505 = vmatpush1.bf16.msra.mxu0 0
      %5506 = vmatprep.subr.bf16.mxu0 0
      %5507 = vmatpush1.bf16.msra.mxu0 0
      %5508 = vmatprep.subr.bf16.mxu0 0
      %5509 = vmatpush1.bf16.msra.mxu0 0
      %5510 = vmatprep.subr.bf16.mxu0 0
      %5511 = vmatpush1.bf16.msra.mxu0 0
      %5512 = vmatprep.subr.bf16.mxu0 0
      %5513 = vmatpush1.bf16.msra.mxu0 0
      %5514 = vmatprep.mubr.bf16.mxu0 0
      %5515 = vmatmul.mubr.bf16.gmra.mrb[0].mxu0 %v5479
      %v5516 = vpop.f32.mrb[0].mxu0
      %v5517 = vadd.f32 0.0, %v5516
      %v5518 = vpop.f32.mrb[0].mxu0
      %v5519 = vadd.f32 0.0, %v5518
      %v5520 = vpop.f32.mrb[0].mxu0
      %v5521 = vpop.f32.mrb[0].mxu0
      %5522 = vdwg.mxu0
      %5523 = vmatprep.subr.bf16.mxu0 %v5175
      %5524 = vmatpush1.bf16.msra.mxu0 %v5174
      %5525 = vmatprep.subr.bf16.mxu0 %v5179
      %5526 = vmatpush1.bf16.msra.mxu0 %v5178
      %5527 = vmatprep.subr.bf16.mxu0 %v5183
      %5528 = vmatpush1.bf16.msra.mxu0 %v5182
      %5529 = vmatprep.subr.bf16.mxu0 %v5187
      %5530 = vmatpush1.bf16.msra.mxu0 %v5186
      %5531 = vmatprep.subr.bf16.mxu0 %v5191
      %5532 = vmatpush1.bf16.msra.mxu0 %v5190
      %5533 = vmatprep.subr.bf16.mxu0 %v5195
      %5534 = vmatpush1.bf16.msra.mxu0 %v5194
      %5535 = vmatprep.subr.bf16.mxu0 %v5199
      %5536 = vmatpush1.bf16.msra.mxu0 %v5198
      %5537 = vmatprep.subr.bf16.mxu0 %v5203
      %5538 = vmatpush1.bf16.msra.mxu0 %v5202
      %5539 = vmatprep.subr.bf16.mxu0 0
      %5540 = vmatpush1.bf16.msra.mxu0 0
      %5541 = vmatprep.subr.bf16.mxu0 0
      %5542 = vmatpush1.bf16.msra.mxu0 0
      %5543 = vmatprep.subr.bf16.mxu0 0
      %5544 = vmatpush1.bf16.msra.mxu0 0
      %5545 = vmatprep.subr.bf16.mxu0 0
      %5546 = vmatpush1.bf16.msra.mxu0 0
      %5547 = vmatprep.subr.bf16.mxu0 0
      %5548 = vmatpush1.bf16.msra.mxu0 0
      %5549 = vmatprep.subr.bf16.mxu0 0
      %5550 = vmatpush1.bf16.msra.mxu0 0
      %5551 = vmatprep.subr.bf16.mxu0 0
      %5552 = vmatpush1.bf16.msra.mxu0 0
      %5553 = vmatprep.subr.bf16.mxu0 0
      %5554 = vmatpush1.bf16.msra.mxu0 0
      %5555 = vmatprep.mubr.bf16.mxu0 0
      %5556 = vmatmul.mubr.bf16.gmra.mrb[0].mxu0 %v5479
      %v5557 = vpop.f32.mrb[0].mxu0
      %v5558 = vadd.f32 0.0, %v5557
      %v5559 = vpop.f32.mrb[0].mxu0
      %v5560 = vadd.f32 0.0, %v5559
      %v5561 = vpop.f32.mrb[0].mxu0
      %v5562 = vpop.f32.mrb[0].mxu0
      %5563 = vdwg.mxu0
      %v5568 = vrot.slane %v5517, 6
      %v5569 = vrot.slane %v5519, 6
      %v5570 = vrot.slane %v5558, 6
      %v5571 = vrot.slane %v5560, 6
      %v5576 = vadd.f32 %v4997, %v5568
      %v5577 = vadd.f32 %v4999, %v5569
      %v5578 = vadd.f32 %v5038, %v5570
      %v5579 = vadd.f32 %v5040, %v5571
      %v5580 = vxor.u32 %v5576, 2147483648
      %v5581 = vmul.f32 %v5580, 1.442695
      %v5582 = vpow.pop %v5581
      %v5583 = vadd.f32 %v5582, 1.0
      %v5584 = vrcp.pop %v5583
      %v5585 = vmul.f32 1.0, %v5584
      %v5586 = vxor.u32 %v5577, 2147483648
      %v5587 = vmul.f32 %v5586, 1.442695
      %v5588 = vpow.pop %v5587
      %v5589 = vadd.f32 %v5588, 1.0
      %v5590 = vrcp.pop %v5589
      %v5591 = vmul.f32 1.0, %v5590
      %v5592 = vtanh.pop %v5578
      %v5593 = vxor.u32 %v5579, 2147483648
      %v5594 = vmul.f32 %v5593, 1.442695
      %v5595 = vpow.pop %v5594
      %v5596 = vadd.f32 %v5595, 1.0
      %v5597 = vrcp.pop %v5596
      %v5598 = vmul.f32 1.0, %v5597
      %v5600 = vrot.slane %v5470, 7
      %v5602 = vmul.f32 %v5591, %v5600
      %v5603 = vmul.f32 %v5585, %v5592
      %v5604 = vadd.f32 %v5602, %v5603
      %v5605 = vtanh.pop %v5604
      %v5606 = vmul.f32 %v5598, %v5605
      %v5608 = vrot.slane %v5606, 2
      %v5610 = vadd.f32 %v5476, %v5608
      %v5611 = vmul.f32 %v5610, 0.33333334
      %v5612 = vld [vmem:[%s10] sm:$0x1]
      %v5613 = vmul.f32 %v5611, %v5612
      %v5614 = vsel %vm4743, %v5613, 0.0
      %5615 = vadd.xlane.f32.xlu0 %v5614
      %v5616 = vpop.xlane.xlu0 %5615
      %v5617 = vld [vmem:[#allocation2] sm:$0x1]
      %v5618 = vadd.f32 %v5616, %v5617
      %vm5619 = vcmask 0
      %5620 = vst.msk [vmem:[%s411] sm:$0x1] %vm5619, %v5618
      %p5621 = scmp.lt.s32.totalorder %s25, 1
      %s5622 = scalar_select %p5621, %s25, 1
      %s5623 = scalar_lea.vmem %s12, %s5622
      // Predicated region
      $region69: #{tinysleepnet_forward.1} parent=67 // pred_check
        %p5624 = pneg %p300
      $region70: #{tinysleepnet_forward.1} parent=67 // pred_check_branch
        %5626 = sbr.rel (%p5624) target = $region72
      $region71: #{tinysleepnet_forward.1} parent=67 // pred_region
        _
      $region72: #{tinysleepnet_forward.1} parent=67 // pred_fallthru
        _
    $region68: #{tinysleepnet_forward.1} parent=5 // pred_fallthru
      _
    %p5627 = scmp.le.s32.totalorder 2, %s20
    // Predicated region
    $region73: #{tinysleepnet_forward.1} parent=5 // pred_check
      %p5628 = pneg %p5627
    $region74: #{tinysleepnet_forward.1} parent=5 // pred_check_branch
      %5630 = sbr.rel (%p5628) target = $region76
    $region75: #{tinysleepnet_forward.1} parent=5 // pred_region
      %s5631 = ssub.s32 %s20, 2
      // Predicated region
      $region77: #{tinysleepnet_forward.1} parent=75 // pred_check
        %p5632 = pneg %p306
      $region78: #{tinysleepnet_forward.1} parent=75 // pred_check_branch
        %5634 = sbr.rel (%p5632) target = $region80
      $region79: #{tinysleepnet_forward.1} parent=75 // pred_region
        %p5635 = scmp.lt.s32.totalorder %s26, 1
        %s5636 = scalar_select %p5635, %s26, 1
        %s5637 = scalar_lea.vmem %s12, %s5636
      $region80: #{tinysleepnet_forward.1} parent=75 // pred_fallthru
        _
    $region76: #{tinysleepnet_forward.1} parent=5 // pred_fallthru
      _
  $region6: #{tinysleepnet_forward.1} parent=0 // loop_footer
    %s24 = sadd.s32 1, %s20
  $region7: #{tinysleepnet_forward.1} parent=0 // loop_footer_branch
    %19 = sbr.rel target = $region3
  $region8: #{tinysleepnet_forward.1} parent=0 // loop_exit
    _

</llo_original>
